<compile_context>
chip_gen: v6e
topology: v6e:2x2x1
jax: 0.10.0
libtpu: 0.0.40
codegen_flags: <defaults>
</compile_context>

<pallas_src>
import functools
import math

import jax
import jax.numpy as jnp
from jax import lax
from jax.experimental import pallas as pl
from jax.experimental.pallas import tpu as pltpu

EMBED_DIM = 32
NUM_HEADS = 4
HIDDEN_DIM = 64
LN_EPS = 1e-5          # nn.LayerNorm default
SLAB_W = 128           # lane-dense parameter slab width


# ---------------------------------------------------------------------------
# In-kernel math helpers (traced inside the Pallas kernel body)
# ---------------------------------------------------------------------------
def _erf_f32(x):
    # f32 rational approximation of erf (same family as the XLA/Eigen lowering)
    # so nn.GELU() (exact-erf GELU) semantics are kept to f32 precision.
    x = jnp.clip(x, -4.0, 4.0)
    x2 = x * x
    a = jnp.float32(-2.72614225801306e-10)
    a = a * x2 + jnp.float32(2.77068142495902e-08)
    a = a * x2 + jnp.float32(-2.10102402082508e-06)
    a = a * x2 + jnp.float32(-5.69250639462346e-05)
    a = a * x2 + jnp.float32(-7.34990630326855e-04)
    a = a * x2 + jnp.float32(-2.95459980854025e-03)
    a = a * x2 + jnp.float32(-1.60960333262415e-02)
    p = x * a
    b = jnp.float32(-1.45660718464996e-05)
    b = b * x2 + jnp.float32(-2.13374055278905e-04)
    b = b * x2 + jnp.float32(-1.68282697438203e-03)
    b = b * x2 + jnp.float32(-7.37332916720468e-03)
    b = b * x2 + jnp.float32(-1.42647390514189e-02)
    return p / b


def _gelu_exact(x):
    # gelu(0) == 0 exactly, so zero-padded lanes stay zero.
    return 0.5 * x * (1.0 + _erf_f32(x * jnp.float32(1.0 / math.sqrt(2.0))))


def _layer_norm(x, gamma, beta):
    mu = jnp.mean(x, axis=-1, keepdims=True)
    var = jnp.mean(jnp.square(x - mu), axis=-1, keepdims=True)
    return (x - mu) * jax.lax.rsqrt(var + LN_EPS) * gamma + beta


def _block_diag_mask(bt, lq, lk):
    """Boolean (bt*lq, bt*lk) mask, True on the block diagonal.

    Built with iota + static comparisons (no vector integer division)."""
    rows, cols = bt * lq, bt * lk
    r_idx = lax.broadcasted_iota(jnp.int32, (rows, cols), 0)
    c_idx = lax.broadcasted_iota(jnp.int32, (rows, cols), 1)
    row_blk = jnp.zeros((rows, cols), jnp.int32)
    col_blk = jnp.zeros((rows, cols), jnp.int32)
    for b in range(1, bt):  # bt <= 4 -> at most 3 compares each
        row_blk = row_blk + (r_idx >= b * lq).astype(jnp.int32)
        col_blk = col_blk + (c_idx >= b * lk).astype(jnp.int32)
    return row_blk == col_blk


def _attention(q_all, kv_all, k_off, v_off, out_wT, out_b, attn_ref,
               *, mask, heads, dh):
    """Multi-head attention over packed rows.

    q_all : (R, >=heads*dh)  Q for head h at lanes [h*dh,(h+1)*dh)
    kv_all: (Rk, C)          K at lanes [k_off+h*dh,...), V at [v_off+h*dh,...)
    mask  : block-diagonal bool mask (or None when a single batch element is
            packed per grid step) -- hoisted out of the head loop.
    attn_ref: (R, heads*dh) VMEM scratch; per-head outputs are written at lane
            offset h*dh so the out-projection is a single (R,E)@(E,E) matmul.
    """
    scale = jnp.float32(1.0 / math.sqrt(dh))
    for h in range(heads):  # static unroll over heads only
        qh = q_all[:, h * dh:(h + 1) * dh]
        kh = kv_all[:, k_off + h * dh:k_off + (h + 1) * dh]
        vh = kv_all[:, v_off + h * dh:v_off + (h + 1) * dh]
        # q @ k^T over ALL packed rows at once (no per-batch-element loop).
        s = lax.dot_general(qh, kh, (((1,), (1,)), ((), ())),
                            preferred_element_type=jnp.float32) * scale
        if mask is not None:
            s = jnp.where(mask, s, -jnp.inf)        # cross-batch -> exp() == 0
        m = jnp.max(s, axis=-1, keepdims=True)
        p = jnp.exp(s - m)
        num = jnp.dot(p, vh, preferred_element_type=jnp.float32)   # (R, dh)
        # Deferred softmax normalization: divide the (R,dh) output, not the
        # (R,Lk) scores.  Exact f32 divide kept for 1e-4 parity.
        inv = 1.0 / jnp.sum(p, axis=-1, keepdims=True)
        attn_ref[:, h * dh:(h + 1) * dh] = num * inv
    a = attn_ref[...]                                               # (R, E)
    return jnp.dot(a, out_wT, preferred_element_type=jnp.float32) + out_b


# ---------------------------------------------------------------------------
# Pallas kernel: one AttentionLayer forward for a block of batch elements
# ---------------------------------------------------------------------------
def attention_layer_kernel(q_ref, a_ref, w_ref, v_ref, out_ref, attn_ref,
                           *, bt, lq, lk, e, heads, hid):
    dh = e // heads
    W = w_ref.shape[1]    # lane-dense slab width (128)
    x = q_ref[...]        # (bt*lq, e)
    audio = a_ref[...]    # (bt*lk, e)

    # ---- weight slab (pre-transposed, zero-padded to 128 lanes) -------------
    # rows [0,e)        sa_in_w.T   cols 0:3e  (Q|K|V)
    # rows [e,2e)       ca_in Q.T   cols 0:e
    # rows [2e,3e)      ca_in KV.T  cols 0:2e  (K|V)
    # rows [3e,4e)      sa_out_w.T  cols 0:e
    # rows [4e,5e)      ca_out_w.T  cols 0:e
    # rows [5e,6e)      w1.T        cols 0:hid
    # rows [6e,6e+W)    w2.T        cols 0:e   (rows hid:W are zero)
    w_sa_in = w_ref[0:e, :]
    w_ca_q = w_ref[e:2 * e, :]
    w_ca_kv = w_ref[2 * e:3 * e, :]
    w_sa_out = w_ref[3 * e:4 * e, 0:e]
    w_ca_out = w_ref[4 * e:5 * e, 0:e]
    w_ff1 = w_ref[5 * e:6 * e, :]
    w_ff2 = w_ref[6 * e:6 * e + W, 0:e]

    # ---- vector slab (biases + LayerNorm params), one 128-lane row each -----
    b_sa_in = v_ref[0:1, :]
    b_ca_q = v_ref[1:2, :]
    b_ca_kv = v_ref[2:3, :]
    b_sa_out = v_ref[3:4, 0:e]
    b_ca_out = v_ref[4:5, 0:e]
    b_ff1 = v_ref[5:6, :]
    b_ff2 = v_ref[6:7, 0:e]
    g1, be1 = v_ref[7:8, 0:e], v_ref[8:9, 0:e]
    g2, be2 = v_ref[9:10, 0:e], v_ref[10:11, 0:e]
    g3, be3 = v_ref[11:12, 0:e], v_ref[12:13, 0:e]

    # Block-diagonal masks, hoisted out of the head loops (skipped when bt==1).
    if bt > 1:
        mask_self = _block_diag_mask(bt, lq, lq)
        mask_cross = _block_diag_mask(bt, lq, lk)
    else:
        mask_self = mask_cross = None

    # Hoisted: cross-attn KV projection of audio (no dependence on x) -- gives
    # the scheduler an independent MXU op to overlap with the self-attn softmax.
    kv_c = jnp.dot(audio, w_ca_kv,
                   preferred_element_type=jnp.float32) + b_ca_kv   # K 0:e, V e:2e

    # out1 = self_attn(query, query, query); query = norm1(query + out1)
    qkv = jnp.dot(x, w_sa_in,
                  preferred_element_type=jnp.float32) + b_sa_in    # Q 0:e, K e:2e, V 2e:3e
    out1 = _attention(qkv, qkv, e, 2 * e, w_sa_out, b_sa_out, attn_ref,
                      mask=mask_self, heads=heads, dh=dh)
    x = _layer_norm(x + out1, g1, be1)

    # out2 = cross_attn(query, audio, audio); query = norm2(query + out2)
    q_c = jnp.dot(x, w_ca_q, preferred_element_type=jnp.float32) + b_ca_q
    out2 = _attention(q_c, kv_c, 0, e, w_ca_out, b_ca_out, attn_ref,
                      mask=mask_cross, heads=heads, dh=dh)
    x = _layer_norm(x + out2, g2, be2)

    # out3 = ffn(query) = Linear -> GELU(exact) -> Linear; query = norm3(query + out3)
    # Padding is exact: w1/b1 pad lanes are 0 -> hmid pad lanes are 0; gelu(0)=0;
    # w2 pad rows are 0 -> the 128-deep contraction equals the 64-deep one.
    hmid = jnp.dot(x, w_ff1, preferred_element_type=jnp.float32) + b_ff1
    hmid = _gelu_exact(hmid)
    out3 = jnp.dot(hmid, w_ff2, preferred_element_type=jnp.float32) + b_ff2
    x = _layer_norm(x + out3, g3, be3)

    out_ref[...] = x.astype(out_ref.dtype)


# ---------------------------------------------------------------------------
# Host-side parameter packing (lane-dense 128-wide slabs, row-block layout)
# ---------------------------------------------------------------------------
def _pack_params(p, e, hid):
    W = SLAB_W
    assert 3 * e <= W and hid <= W

    def block(mat, rows):
        m = jnp.asarray(mat, jnp.float32)
        out = jnp.zeros((rows, W), jnp.float32)
        return out.at[:m.shape[0], :m.shape[1]].set(m)

    sa_in_wT = jnp.asarray(p["sa_in_w"], jnp.float32).T     # (e, 3e)
    ca_in_wT = jnp.asarray(p["ca_in_w"], jnp.float32).T     # (e, 3e)
    w_slab = jnp.concatenate([
        block(sa_in_wT, e),                  # QKV fused
        block(ca_in_wT[:, 0:e], e),          # cross-attn Q rows
        block(ca_in_wT[:, e:3 * e], e),      # cross-attn KV rows
        block(jnp.asarray(p["sa_out_w"], jnp.float32).T, e),
        block(jnp.asarray(p["ca_out_w"], jnp.float32).T, e),
        block(jnp.asarray(p["w1"], jnp.float32).T, e),
        block(jnp.asarray(p["w2"], jnp.float32).T, W),       # rows hid:W zero
    ], axis=0)                                                # (6e + W, W)

    def vrow(v):
        v = jnp.asarray(v, jnp.float32).reshape(-1)
        return jnp.zeros((1, W), jnp.float32).at[0, :v.shape[0]].set(v)

    vec_slab = jnp.concatenate([
        vrow(p["sa_in_b"]),
        vrow(jnp.asarray(p["ca_in_b"])[..., 0:e]),
        vrow(jnp.asarray(p["ca_in_b"])[..., e:3 * e]),
        vrow(p["sa_out_b"]),
        vrow(p["ca_out_b"]),
        vrow(p["b1"]), vrow(p["b2"]),
        vrow(p["g1"]), vrow(p["be1"]),
        vrow(p["g2"]), vrow(p["be2"]),
        vrow(p["g3"]), vrow(p["be3"]),
    ], axis=0)                                                # (13, W)
    pad_rows = (-vec_slab.shape[0]) % 8
    vec_slab = jnp.pad(vec_slab, ((0, pad_rows), (0, 0)))
    return w_slab, vec_slab


def _pick_batch_block(B, Lq, Lk, max_block=4):
    # Cap packed batch elements at 4 (block-diagonal mask waste grows ~bt^2)
    # and prefer >= 2 grid steps so v7x's two TensorCores both get work.
    # (For very large B on v5e/v6e the right lever is bigger row blocks via a
    #  small fori_loop over sub-groups, not a bigger block-diag mask.)
    candidates = [c for c in range(1, min(B, max_block) + 1)
                  if B % c == 0 and (c * Lq) % 8 == 0 and (c * Lk) % 8 == 0]
    if not candidates:
        return B  # full-array block (always a legal block shape)
    pref = [c for c in candidates if B // c >= 2]
    return max(pref) if pref else max(candidates)


def attention_layer_forward(query, audio_feat, params, *, batch_block=None):
    B, Lq, E = query.shape
    _, Lk, _ = audio_feat.shape
    heads, hid = NUM_HEADS, HIDDEN_DIM
    assert E % heads == 0

    if batch_block is None:
        batch_block = _pick_batch_block(B, Lq, Lk)
    assert B % batch_block == 0
    grid = (B // batch_block,)
    Rq, Rk = batch_block * Lq, batch_block * Lk

    # Row-flattened 2-D views (free wrapper plumbing).
    q2d = query.reshape(B * Lq, E).astype(jnp.float32)
    a2d = audio_feat.reshape(B * Lk, E).astype(jnp.float32)
    w_slab, vec_slab = _pack_params(params, E, hid)

    kernel = functools.partial(attention_layer_kernel,
                               bt=batch_block, lq=Lq, lk=Lk, e=E,
                               heads=heads, hid=hid)

    out2d = pl.pallas_call(
        kernel,
        out_shape=jax.ShapeDtypeStruct((B * Lq, E), jnp.float32),
        grid=grid,
        in_specs=[
            pl.BlockSpec((Rq, E), lambda i: (i, 0)),
            pl.BlockSpec((Rk, E), lambda i: (i, 0)),
            # Constant block index across the grid -> fetched once, not refilled.
            pl.BlockSpec(w_slab.shape, lambda i: (0, 0)),
            pl.BlockSpec(vec_slab.shape, lambda i: (0, 0)),
        ],
        out_specs=pl.BlockSpec((Rq, E), lambda i: (i, 0)),
        scratch_shapes=[pltpu.VMEM((Rq, E), jnp.float32)],   # per-head attn concat
        compiler_params=pltpu.CompilerParams(
            dimension_semantics=("parallel",)),               # shard blocks on v7x
    )(q2d, a2d, w_slab, vec_slab)
    return out2d.reshape(B, Lq, E)


# ---------------------------------------------------------------------------
# Pure-JAX reference (ground-truth PyTorch semantics) for verification
# ---------------------------------------------------------------------------
def reference_forward(query, audio_feat, p):
    def mha(q_in, kv_in, in_w, in_b, out_w, out_b):
        B, Lq, E = q_in.shape
        Lk = kv_in.shape[1]
        H, Dh = NUM_HEADS, E // NUM_HEADS
        q = q_in @ in_w[:E].T + in_b[0, :E]
        k = kv_in @ in_w[E:2 * E].T + in_b[0, E:2 * E]
        v = kv_in @ in_w[2 * E:].T + in_b[0, 2 * E:]
        q = q.reshape(B, Lq, H, Dh).transpose(0, 2, 1, 3)
        k = k.reshape(B, Lk, H, Dh).transpose(0, 2, 1, 3)
        v = v.reshape(B, Lk, H, Dh).transpose(0, 2, 1, 3)
        s = jnp.einsum("bhqd,bhkd->bhqk", q, k) / math.sqrt(Dh)
        attn = jax.nn.softmax(s, axis=-1)
        o = jnp.einsum("bhqk,bhkd->bhqd", attn, v)
        o = o.transpose(0, 2, 1, 3).reshape(B, Lq, E)
        return o @ out_w.T + out_b[0]

    def ln(x, g, b):
        mu = x.mean(-1, keepdims=True)
        var = ((x - mu) ** 2).mean(-1, keepdims=True)
        return (x - mu) / jnp.sqrt(var + LN_EPS) * g + b

    x = query
    x = ln(x + mha(x, x, p["sa_in_w"], p["sa_in_b"], p["sa_out_w"], p["sa_out_b"]),
           p["g1"], p["be1"])
    x = ln(x + mha(x, audio_feat, p["ca_in_w"], p["ca_in_b"], p["ca_out_w"], p["ca_out_b"]),
           p["g2"], p["be2"])
    h = jax.nn.gelu(x @ p["w1"].T + p["b1"], approximate=False)
    x = ln(x + (h @ p["w2"].T + p["b2"]), p["g3"], p["be3"])
    return x


def init_params(key, embed_dim, num_heads, hidden_dim):
    del num_heads
    ks = jax.random.split(key, 16)
    s = 0.05
    f32 = jnp.float32
    return {
        # self-attention
        "sa_in_w": s * jax.random.normal(ks[0], (3 * embed_dim, embed_dim), f32),
        "sa_in_b": s * jax.random.normal(ks[1], (1, 3 * embed_dim), f32),
        "sa_out_w": s * jax.random.normal(ks[2], (embed_dim, embed_dim), f32),
        "sa_out_b": s * jax.random.normal(ks[3], (1, embed_dim), f32),
        # cross-attention
        "ca_in_w": s * jax.random.normal(ks[4], (3 * embed_dim, embed_dim), f32),
        "ca_in_b": s * jax.random.normal(ks[5], (1, 3 * embed_dim), f32),
        "ca_out_w": s * jax.random.normal(ks[6], (embed_dim, embed_dim), f32),
        "ca_out_b": s * jax.random.normal(ks[7], (1, embed_dim), f32),
        # FFN
        "w1": s * jax.random.normal(ks[8], (hidden_dim, embed_dim), f32),
        "b1": s * jax.random.normal(ks[9], (1, hidden_dim), f32),
        "w2": s * jax.random.normal(ks[10], (embed_dim, hidden_dim), f32),
        "b2": s * jax.random.normal(ks[11], (1, embed_dim), f32),
        # LayerNorms
        "g1": 1.0 + s * jax.random.normal(ks[12], (1, embed_dim), f32),
        "be1": s * jax.random.normal(ks[13], (1, embed_dim), f32),
        "g2": 1.0 + s * jax.random.normal(ks[14], (1, embed_dim), f32),
        "be2": s * jax.random.normal(ks[15], (1, embed_dim), f32),
        "g3": jnp.ones((1, embed_dim), f32),
        "be3": jnp.zeros((1, embed_dim), f32),
    }


if __name__ == "__main__":
    B, Lq, Lk = 2, 8, 16
    key = jax.random.PRNGKey(0)
    kq, ka, kp = jax.random.split(key, 3)

    query = jax.random.normal(kq, (B, Lq, EMBED_DIM), jnp.float32)
    audio_feat = jax.random.normal(ka, (B, Lk, EMBED_DIM), jnp.float32)
    params = init_params(kp, EMBED_DIM, NUM_HEADS, HIDDEN_DIM)

    ref = jax.block_until_ready(reference_forward(query, audio_feat, params))

    # Default path: batch_block=1 -> grid=(2,), sharded across TCs on v7x.
    out = jax.block_until_ready(attention_layer_forward(query, audio_feat, params))
    assert out.shape == (B, Lq, EMBED_DIM)
    assert jnp.allclose(out, ref, atol=1e-4, rtol=1e-4), (
        f"max abs diff {float(jnp.max(jnp.abs(out - ref)))}")

    # Packed path: batch_block=2 exercises the block-diagonal masked attention.
    out_packed = jax.block_until_ready(
        attention_layer_forward(query, audio_feat, params, batch_block=2))
    assert jnp.allclose(out_packed, ref, atol=1e-4, rtol=1e-4), (
        f"max abs diff {float(jnp.max(jnp.abs(out_packed - ref)))}")

    print("KERNEL_OK")
</pallas_src>

<mosaic_0001>
module attributes {stable_mosaic.version = 11 : i64} {
  func.func @attention_layer_kernel(%arg0: i32, %arg1: memref<8x32xf32, #tpu.memory_space<vmem>>, %arg2: memref<16x32xf32, #tpu.memory_space<vmem>>, %arg3: memref<320x128xf32, #tpu.memory_space<vmem>>, %arg4: memref<16x128xf32, #tpu.memory_space<vmem>>, %arg5: memref<8x32xf32, #tpu.memory_space<vmem>>, %arg6: memref<8x32xf32, #tpu.memory_space<vmem>>) attributes {dimension_semantics = [#tpu.dimension_semantics<parallel>], iteration_bounds = array<i64: 2>, scalar_prefetch = 0 : i64, scratch_operands = 1 : i64, tpu.core_type = #tpu.core_type<tc>, window_params = [{transform_indices = @transform_0, window_bounds = array<i64: 8, 32>}, {transform_indices = @transform_1, window_bounds = array<i64: 16, 32>}, {pipeline_mode = #tpu.pipeline_mode<synchronous>, transform_indices = @transform_2, window_bounds = array<i64: 320, 128>}, {pipeline_mode = #tpu.pipeline_mode<synchronous>, transform_indices = @transform_3, window_bounds = array<i64: 16, 128>}, {transform_indices = @transform_4, window_bounds = array<i64: 8, 32>}]} {
    %c0 = arith.constant 0 : index
    %c0_0 = arith.constant 0 : index
    %0 = vector.load %arg1[%c0, %c0_0] : memref<8x32xf32, #tpu.memory_space<vmem>>, vector<8x32xf32>
    %c0_1 = arith.constant 0 : index
    %c0_2 = arith.constant 0 : index
    %1 = vector.load %arg2[%c0_1, %c0_2] : memref<16x32xf32, #tpu.memory_space<vmem>>, vector<16x32xf32>
    %c0_3 = arith.constant 0 : index
    %c0_4 = arith.constant 0 : index
    %2 = vector.load %arg3[%c0_3, %c0_4] : memref<320x128xf32, #tpu.memory_space<vmem>>, vector<32x128xf32>
    %c32 = arith.constant 32 : index
    %c0_5 = arith.constant 0 : index
    %3 = vector.load %arg3[%c32, %c0_5] : memref<320x128xf32, #tpu.memory_space<vmem>>, vector<32x128xf32>
    %c64 = arith.constant 64 : index
    %c0_6 = arith.constant 0 : index
    %4 = vector.load %arg3[%c64, %c0_6] : memref<320x128xf32, #tpu.memory_space<vmem>>, vector<32x128xf32>
    %c96 = arith.constant 96 : index
    %c0_7 = arith.constant 0 : index
    %5 = vector.load %arg3[%c96, %c0_7] : memref<320x128xf32, #tpu.memory_space<vmem>>, vector<32x32xf32>
    %c128 = arith.constant 128 : index
    %c0_8 = arith.constant 0 : index
    %6 = vector.load %arg3[%c128, %c0_8] : memref<320x128xf32, #tpu.memory_space<vmem>>, vector<32x32xf32>
    %c160 = arith.constant 160 : index
    %c0_9 = arith.constant 0 : index
    %7 = vector.load %arg3[%c160, %c0_9] : memref<320x128xf32, #tpu.memory_space<vmem>>, vector<32x128xf32>
    %c192 = arith.constant 192 : index
    %c0_10 = arith.constant 0 : index
    %8 = vector.load %arg3[%c192, %c0_10] : memref<320x128xf32, #tpu.memory_space<vmem>>, vector<128x32xf32>
    %c0_11 = arith.constant 0 : index
    %c0_12 = arith.constant 0 : index
    %9 = vector.load %arg4[%c0_11, %c0_12] : memref<16x128xf32, #tpu.memory_space<vmem>>, vector<1x128xf32>
    %c1 = arith.constant 1 : index
    %c0_13 = arith.constant 0 : index
    %10 = vector.load %arg4[%c1, %c0_13] : memref<16x128xf32, #tpu.memory_space<vmem>>, vector<1x128xf32>
    %c2 = arith.constant 2 : index
    %c0_14 = arith.constant 0 : index
    %11 = vector.load %arg4[%c2, %c0_14] : memref<16x128xf32, #tpu.memory_space<vmem>>, vector<1x128xf32>
    %c3 = arith.constant 3 : index
    %c0_15 = arith.constant 0 : index
    %12 = vector.load %arg4[%c3, %c0_15] : memref<16x128xf32, #tpu.memory_space<vmem>>, vector<1x32xf32>
    %c4 = arith.constant 4 : index
    %c0_16 = arith.constant 0 : index
    %13 = vector.load %arg4[%c4, %c0_16] : memref<16x128xf32, #tpu.memory_space<vmem>>, vector<1x32xf32>
    %c5 = arith.constant 5 : index
    %c0_17 = arith.constant 0 : index
    %14 = vector.load %arg4[%c5, %c0_17] : memref<16x128xf32, #tpu.memory_space<vmem>>, vector<1x128xf32>
    %c6 = arith.constant 6 : index
    %c0_18 = arith.constant 0 : index
    %15 = vector.load %arg4[%c6, %c0_18] : memref<16x128xf32, #tpu.memory_space<vmem>>, vector<1x32xf32>
    %c7 = arith.constant 7 : index
    %c0_19 = arith.constant 0 : index
    %16 = vector.load %arg4[%c7, %c0_19] : memref<16x128xf32, #tpu.memory_space<vmem>>, vector<1x32xf32>
    %c8 = arith.constant 8 : index
    %c0_20 = arith.constant 0 : index
    %17 = vector.load %arg4[%c8, %c0_20] : memref<16x128xf32, #tpu.memory_space<vmem>>, vector<1x32xf32>
    %c9 = arith.constant 9 : index
    %c0_21 = arith.constant 0 : index
    %18 = vector.load %arg4[%c9, %c0_21] : memref<16x128xf32, #tpu.memory_space<vmem>>, vector<1x32xf32>
    %c10 = arith.constant 10 : index
    %c0_22 = arith.constant 0 : index
    %19 = vector.load %arg4[%c10, %c0_22] : memref<16x128xf32, #tpu.memory_space<vmem>>, vector<1x32xf32>
    %c11 = arith.constant 11 : index
    %c0_23 = arith.constant 0 : index
    %20 = vector.load %arg4[%c11, %c0_23] : memref<16x128xf32, #tpu.memory_space<vmem>>, vector<1x32xf32>
    %c12 = arith.constant 12 : index
    %c0_24 = arith.constant 0 : index
    %21 = vector.load %arg4[%c12, %c0_24] : memref<16x128xf32, #tpu.memory_space<vmem>>, vector<1x32xf32>
    %cst = arith.constant dense<0.000000e+00> : vector<16x128xf32>
    %22 = tpu.matmul %1, %4, %cst {dimension_numbers = #tpu.dot_dimension_numbers<[1], [0], [0], [1], [0, 0, 1, 1], [], []>} : vector<16x32xf32>, vector<32x128xf32>, vector<16x128xf32> -> vector<16x128xf32>
    %23 = vector.broadcast %11 : vector<1x128xf32> to vector<16x128xf32>
    %24 = arith.addf %22, %23 : vector<16x128xf32>
    %cst_25 = arith.constant dense<0.000000e+00> : vector<8x128xf32>
    %25 = tpu.matmul %0, %2, %cst_25 {dimension_numbers = #tpu.dot_dimension_numbers<[1], [0], [0], [1], [0, 0, 1, 1], [], []>} : vector<8x32xf32>, vector<32x128xf32>, vector<8x128xf32> -> vector<8x128xf32>
    %26 = vector.broadcast %9 : vector<1x128xf32> to vector<8x128xf32>
    %27 = arith.addf %25, %26 : vector<8x128xf32>
    %28 = vector.extract_strided_slice %27 {offsets = [0, 0], sizes = [8, 8], strides = [1, 1]} : vector<8x128xf32> to vector<8x8xf32>
    %29 = vector.extract_strided_slice %27 {offsets = [0, 32], sizes = [8, 8], strides = [1, 1]} : vector<8x128xf32> to vector<8x8xf32>
    %30 = vector.extract_strided_slice %27 {offsets = [0, 64], sizes = [8, 8], strides = [1, 1]} : vector<8x128xf32> to vector<8x8xf32>
    %cst_26 = arith.constant dense<0.000000e+00> : vector<8x8xf32>
    %31 = tpu.matmul %28, %29, %cst_26 {dimension_numbers = #tpu.dot_dimension_numbers<[1], [1], [0], [0], [0, 0, 1, 0], [], []>} : vector<8x8xf32>, vector<8x8xf32>, vector<8x8xf32> -> vector<8x8xf32>
    %cst_27 = arith.constant 0.353553385 : f32
    %32 = vector.broadcast %cst_27 : f32 to vector<8x8xf32>
    %33 = arith.mulf %31, %32 : vector<8x8xf32>
    %cst_28 = arith.constant dense<0xFF800000> : vector<8xf32>
    %34 = vector.multi_reduction <maximumf>, %33, %cst_28 [1] : vector<8x8xf32> to vector<8xf32>
    %35 = vector.shape_cast %34 : vector<8xf32> to vector<8x1xf32>
    %36 = vector.broadcast %35 : vector<8x1xf32> to vector<8x8xf32>
    %37 = arith.subf %33, %36 : vector<8x8xf32>
    %38 = math.exp %37 : vector<8x8xf32>
    %cst_29 = arith.constant dense<0.000000e+00> : vector<8x8xf32>
    %39 = tpu.matmul %38, %30, %cst_29 {dimension_numbers = #tpu.dot_dimension_numbers<[1], [0], [0], [1], [0, 0, 1, 1], [], []>} : vector<8x8xf32>, vector<8x8xf32>, vector<8x8xf32> -> vector<8x8xf32>
    %cst_30 = arith.constant dense<0.000000e+00> : vector<8xf32>
    %40 = vector.multi_reduction <add>, %38, %cst_30 [1] : vector<8x8xf32> to vector<8xf32>
    %41 = vector.shape_cast %40 : vector<8xf32> to vector<8x1xf32>
    %cst_31 = arith.constant 1.000000e+00 : f32
    %42 = vector.broadcast %cst_31 : f32 to vector<8x1xf32>
    %43 = arith.divf %42, %41 : vector<8x1xf32>
    %44 = vector.broadcast %43 : vector<8x1xf32> to vector<8x8xf32>
    %45 = arith.mulf %39, %44 : vector<8x8xf32>
    %c0_32 = arith.constant 0 : index
    %c0_33 = arith.constant 0 : index
    %46 = vector.load %arg6[%c0_32, %c0_33] : memref<8x32xf32, #tpu.memory_space<vmem>>, vector<8x8xf32>
    tpu.vector_store %arg6[%c0_32, %c0_33], %45 {strides = array<i32>} : memref<8x32xf32, #tpu.memory_space<vmem>>, vector<8x8xf32>,
    %47 = vector.extract_strided_slice %27 {offsets = [0, 8], sizes = [8, 8], strides = [1, 1]} : vector<8x128xf32> to vector<8x8xf32>
    %48 = vector.extract_strided_slice %27 {offsets = [0, 40], sizes = [8, 8], strides = [1, 1]} : vector<8x128xf32> to vector<8x8xf32>
    %49 = vector.extract_strided_slice %27 {offsets = [0, 72], sizes = [8, 8], strides = [1, 1]} : vector<8x128xf32> to vector<8x8xf32>
    %cst_34 = arith.constant dense<0.000000e+00> : vector<8x8xf32>
    %50 = tpu.matmul %47, %48, %cst_34 {dimension_numbers = #tpu.dot_dimension_numbers<[1], [1], [0], [0], [0, 0, 1, 0], [], []>} : vector<8x8xf32>, vector<8x8xf32>, vector<8x8xf32> -> vector<8x8xf32>
    %cst_35 = arith.constant 0.353553385 : f32
    %51 = vector.broadcast %cst_35 : f32 to vector<8x8xf32>
    %52 = arith.mulf %50, %51 : vector<8x8xf32>
    %cst_36 = arith.constant dense<0xFF800000> : vector<8xf32>
    %53 = vector.multi_reduction <maximumf>, %52, %cst_36 [1] : vector<8x8xf32> to vector<8xf32>
    %54 = vector.shape_cast %53 : vector<8xf32> to vector<8x1xf32>
    %55 = vector.broadcast %54 : vector<8x1xf32> to vector<8x8xf32>
    %56 = arith.subf %52, %55 : vector<8x8xf32>
    %57 = math.exp %56 : vector<8x8xf32>
    %cst_37 = arith.constant dense<0.000000e+00> : vector<8x8xf32>
    %58 = tpu.matmul %57, %49, %cst_37 {dimension_numbers = #tpu.dot_dimension_numbers<[1], [0], [0], [1], [0, 0, 1, 1], [], []>} : vector<8x8xf32>, vector<8x8xf32>, vector<8x8xf32> -> vector<8x8xf32>
    %cst_38 = arith.constant dense<0.000000e+00> : vector<8xf32>
    %59 = vector.multi_reduction <add>, %57, %cst_38 [1] : vector<8x8xf32> to vector<8xf32>
    %60 = vector.shape_cast %59 : vector<8xf32> to vector<8x1xf32>
    %cst_39 = arith.constant 1.000000e+00 : f32
    %61 = vector.broadcast %cst_39 : f32 to vector<8x1xf32>
    %62 = arith.divf %61, %60 : vector<8x1xf32>
    %63 = vector.broadcast %62 : vector<8x1xf32> to vector<8x8xf32>
    %64 = arith.mulf %58, %63 : vector<8x8xf32>
    %c0_40 = arith.constant 0 : index
    %c8_41 = arith.constant 8 : index
    %65 = vector.load %arg6[%c0_40, %c8_41] : memref<8x32xf32, #tpu.memory_space<vmem>>, vector<8x8xf32>
    tpu.vector_store %arg6[%c0_40, %c8_41], %64 {strides = array<i32>} : memref<8x32xf32, #tpu.memory_space<vmem>>, vector<8x8xf32>,
    %66 = vector.extract_strided_slice %27 {offsets = [0, 16], sizes = [8, 8], strides = [1, 1]} : vector<8x128xf32> to vector<8x8xf32>
    %67 = vector.extract_strided_slice %27 {offsets = [0, 48], sizes = [8, 8], strides = [1, 1]} : vector<8x128xf32> to vector<8x8xf32>
    %68 = vector.extract_strided_slice %27 {offsets = [0, 80], sizes = [8, 8], strides = [1, 1]} : vector<8x128xf32> to vector<8x8xf32>
    %cst_42 = arith.constant dense<0.000000e+00> : vector<8x8xf32>
    %69 = tpu.matmul %66, %67, %cst_42 {dimension_numbers = #tpu.dot_dimension_numbers<[1], [1], [0], [0], [0, 0, 1, 0], [], []>} : vector<8x8xf32>, vector<8x8xf32>, vector<8x8xf32> -> vector<8x8xf32>
    %cst_43 = arith.constant 0.353553385 : f32
    %70 = vector.broadcast %cst_43 : f32 to vector<8x8xf32>
    %71 = arith.mulf %69, %70 : vector<8x8xf32>
    %cst_44 = arith.constant dense<0xFF800000> : vector<8xf32>
    %72 = vector.multi_reduction <maximumf>, %71, %cst_44 [1] : vector<8x8xf32> to vector<8xf32>
    %73 = vector.shape_cast %72 : vector<8xf32> to vector<8x1xf32>
    %74 = vector.broadcast %73 : vector<8x1xf32> to vector<8x8xf32>
    %75 = arith.subf %71, %74 : vector<8x8xf32>
    %76 = math.exp %75 : vector<8x8xf32>
    %cst_45 = arith.constant dense<0.000000e+00> : vector<8x8xf32>
    %77 = tpu.matmul %76, %68, %cst_45 {dimension_numbers = #tpu.dot_dimension_numbers<[1], [0], [0], [1], [0, 0, 1, 1], [], []>} : vector<8x8xf32>, vector<8x8xf32>, vector<8x8xf32> -> vector<8x8xf32>
    %cst_46 = arith.constant dense<0.000000e+00> : vector<8xf32>
    %78 = vector.multi_reduction <add>, %76, %cst_46 [1] : vector<8x8xf32> to vector<8xf32>
    %79 = vector.shape_cast %78 : vector<8xf32> to vector<8x1xf32>
    %cst_47 = arith.constant 1.000000e+00 : f32
    %80 = vector.broadcast %cst_47 : f32 to vector<8x1xf32>
    %81 = arith.divf %80, %79 : vector<8x1xf32>
    %82 = vector.broadcast %81 : vector<8x1xf32> to vector<8x8xf32>
    %83 = arith.mulf %77, %82 : vector<8x8xf32>
    %c0_48 = arith.constant 0 : index
    %c16 = arith.constant 16 : index
    %84 = vector.load %arg6[%c0_48, %c16] : memref<8x32xf32, #tpu.memory_space<vmem>>, vector<8x8xf32>
    tpu.vector_store %arg6[%c0_48, %c16], %83 {strides = array<i32>} : memref<8x32xf32, #tpu.memory_space<vmem>>, vector<8x8xf32>,
    %85 = vector.extract_strided_slice %27 {offsets = [0, 24], sizes = [8, 8], strides = [1, 1]} : vector<8x128xf32> to vector<8x8xf32>
    %86 = vector.extract_strided_slice %27 {offsets = [0, 56], sizes = [8, 8], strides = [1, 1]} : vector<8x128xf32> to vector<8x8xf32>
    %87 = vector.extract_strided_slice %27 {offsets = [0, 88], sizes = [8, 8], strides = [1, 1]} : vector<8x128xf32> to vector<8x8xf32>
    %cst_49 = arith.constant dense<0.000000e+00> : vector<8x8xf32>
    %88 = tpu.matmul %85, %86, %cst_49 {dimension_numbers = #tpu.dot_dimension_numbers<[1], [1], [0], [0], [0, 0, 1, 0], [], []>} : vector<8x8xf32>, vector<8x8xf32>, vector<8x8xf32> -> vector<8x8xf32>
    %cst_50 = arith.constant 0.353553385 : f32
    %89 = vector.broadcast %cst_50 : f32 to vector<8x8xf32>
    %90 = arith.mulf %88, %89 : vector<8x8xf32>
    %cst_51 = arith.constant dense<0xFF800000> : vector<8xf32>
    %91 = vector.multi_reduction <maximumf>, %90, %cst_51 [1] : vector<8x8xf32> to vector<8xf32>
    %92 = vector.shape_cast %91 : vector<8xf32> to vector<8x1xf32>
    %93 = vector.broadcast %92 : vector<8x1xf32> to vector<8x8xf32>
    %94 = arith.subf %90, %93 : vector<8x8xf32>
    %95 = math.exp %94 : vector<8x8xf32>
    %cst_52 = arith.constant dense<0.000000e+00> : vector<8x8xf32>
    %96 = tpu.matmul %95, %87, %cst_52 {dimension_numbers = #tpu.dot_dimension_numbers<[1], [0], [0], [1], [0, 0, 1, 1], [], []>} : vector<8x8xf32>, vector<8x8xf32>, vector<8x8xf32> -> vector<8x8xf32>
    %cst_53 = arith.constant dense<0.000000e+00> : vector<8xf32>
    %97 = vector.multi_reduction <add>, %95, %cst_53 [1] : vector<8x8xf32> to vector<8xf32>
    %98 = vector.shape_cast %97 : vector<8xf32> to vector<8x1xf32>
    %cst_54 = arith.constant 1.000000e+00 : f32
    %99 = vector.broadcast %cst_54 : f32 to vector<8x1xf32>
    %100 = arith.divf %99, %98 : vector<8x1xf32>
    %101 = vector.broadcast %100 : vector<8x1xf32> to vector<8x8xf32>
    %102 = arith.mulf %96, %101 : vector<8x8xf32>
    %c0_55 = arith.constant 0 : index
    %c24 = arith.constant 24 : index
    %103 = vector.load %arg6[%c0_55, %c24] : memref<8x32xf32, #tpu.memory_space<vmem>>, vector<8x8xf32>
    tpu.vector_store %arg6[%c0_55, %c24], %102 {strides = array<i32>} : memref<8x32xf32, #tpu.memory_space<vmem>>, vector<8x8xf32>,
    %c0_56 = arith.constant 0 : index
    %c0_57 = arith.constant 0 : index
    %104 = vector.load %arg6[%c0_56, %c0_57] : memref<8x32xf32, #tpu.memory_space<vmem>>, vector<8x32xf32>
    %cst_58 = arith.constant dense<0.000000e+00> : vector<8x32xf32>
    %105 = tpu.matmul %104, %5, %cst_58 {dimension_numbers = #tpu.dot_dimension_numbers<[1], [0], [0], [1], [0, 0, 1, 1], [], []>} : vector<8x32xf32>, vector<32x32xf32>, vector<8x32xf32> -> vector<8x32xf32>
    %106 = vector.broadcast %12 : vector<1x32xf32> to vector<8x32xf32>
    %107 = arith.addf %105, %106 : vector<8x32xf32>
    %108 = arith.addf %0, %107 : vector<8x32xf32>
    %cst_59 = arith.constant dense<0.000000e+00> : vector<8xf32>
    %109 = vector.multi_reduction <add>, %108, %cst_59 [1] : vector<8x32xf32> to vector<8xf32>
    %110 = vector.shape_cast %109 : vector<8xf32> to vector<8x1xf32>
    %cst_60 = arith.constant 3.200000e+01 : f32
    %111 = vector.broadcast %cst_60 : f32 to vector<8x1xf32>
    %112 = arith.divf %110, %111 : vector<8x1xf32>
    %113 = vector.broadcast %112 : vector<8x1xf32> to vector<8x32xf32>
    %114 = arith.subf %108, %113 : vector<8x32xf32>
    %115 = arith.mulf %114, %114 : vector<8x32xf32>
    %cst_61 = arith.constant dense<0.000000e+00> : vector<8xf32>
    %116 = vector.multi_reduction <add>, %115, %cst_61 [1] : vector<8x32xf32> to vector<8xf32>
    %117 = vector.shape_cast %116 : vector<8xf32> to vector<8x1xf32>
    %cst_62 = arith.constant 3.200000e+01 : f32
    %118 = vector.broadcast %cst_62 : f32 to vector<8x1xf32>
    %119 = arith.divf %117, %118 : vector<8x1xf32>
    %120 = vector.broadcast %112 : vector<8x1xf32> to vector<8x32xf32>
    %121 = arith.subf %108, %120 : vector<8x32xf32>
    %cst_63 = arith.constant 9.99999974E-6 : f32
    %122 = vector.broadcast %cst_63 : f32 to vector<8x1xf32>
    %123 = arith.addf %119, %122 : vector<8x1xf32>
    %124 = math.rsqrt %123 : vector<8x1xf32>
    %125 = vector.broadcast %124 : vector<8x1xf32> to vector<8x32xf32>
    %126 = arith.mulf %121, %125 : vector<8x32xf32>
    %127 = vector.broadcast %16 : vector<1x32xf32> to vector<8x32xf32>
    %128 = arith.mulf %126, %127 : vector<8x32xf32>
    %129 = vector.broadcast %17 : vector<1x32xf32> to vector<8x32xf32>
    %130 = arith.addf %128, %129 : vector<8x32xf32>
    %cst_64 = arith.constant dense<0.000000e+00> : vector<8x128xf32>
    %131 = tpu.matmul %130, %3, %cst_64 {dimension_numbers = #tpu.dot_dimension_numbers<[1], [0], [0], [1], [0, 0, 1, 1], [], []>} : vector<8x32xf32>, vector<32x128xf32>, vector<8x128xf32> -> vector<8x128xf32>
    %132 = vector.broadcast %10 : vector<1x128xf32> to vector<8x128xf32>
    %133 = arith.addf %131, %132 : vector<8x128xf32>
    %134 = vector.extract_strided_slice %133 {offsets = [0, 0], sizes = [8, 8], strides = [1, 1]} : vector<8x128xf32> to vector<8x8xf32>
    %135 = vector.extract_strided_slice %24 {offsets = [0, 0], sizes = [16, 8], strides = [1, 1]} : vector<16x128xf32> to vector<16x8xf32>
    %136 = vector.extract_strided_slice %24 {offsets = [0, 32], sizes = [16, 8], strides = [1, 1]} : vector<16x128xf32> to vector<16x8xf32>
    %cst_65 = arith.constant dense<0.000000e+00> : vector<8x16xf32>
    %137 = tpu.matmul %134, %135, %cst_65 {dimension_numbers = #tpu.dot_dimension_numbers<[1], [1], [0], [0], [0, 0, 1, 0], [], []>} : vector<8x8xf32>, vector<16x8xf32>, vector<8x16xf32> -> vector<8x16xf32>
    %cst_66 = arith.constant 0.353553385 : f32
    %138 = vector.broadcast %cst_66 : f32 to vector<8x16xf32>
    %139 = arith.mulf %137, %138 : vector<8x16xf32>
    %cst_67 = arith.constant dense<0xFF800000> : vector<8xf32>
    %140 = vector.multi_reduction <maximumf>, %139, %cst_67 [1] : vector<8x16xf32> to vector<8xf32>
    %141 = vector.shape_cast %140 : vector<8xf32> to vector<8x1xf32>
    %142 = vector.broadcast %141 : vector<8x1xf32> to vector<8x16xf32>
    %143 = arith.subf %139, %142 : vector<8x16xf32>
    %144 = math.exp %143 : vector<8x16xf32>
    %cst_68 = arith.constant dense<0.000000e+00> : vector<8x8xf32>
    %145 = tpu.matmul %144, %136, %cst_68 {dimension_numbers = #tpu.dot_dimension_numbers<[1], [0], [0], [1], [0, 0, 1, 1], [], []>} : vector<8x16xf32>, vector<16x8xf32>, vector<8x8xf32> -> vector<8x8xf32>
    %cst_69 = arith.constant dense<0.000000e+00> : vector<8xf32>
    %146 = vector.multi_reduction <add>, %144, %cst_69 [1] : vector<8x16xf32> to vector<8xf32>
    %147 = vector.shape_cast %146 : vector<8xf32> to vector<8x1xf32>
    %cst_70 = arith.constant 1.000000e+00 : f32
    %148 = vector.broadcast %cst_70 : f32 to vector<8x1xf32>
    %149 = arith.divf %148, %147 : vector<8x1xf32>
    %150 = vector.broadcast %149 : vector<8x1xf32> to vector<8x8xf32>
    %151 = arith.mulf %145, %150 : vector<8x8xf32>
    %c0_71 = arith.constant 0 : index
    %c0_72 = arith.constant 0 : index
    %152 = vector.load %arg6[%c0_71, %c0_72] : memref<8x32xf32, #tpu.memory_space<vmem>>, vector<8x8xf32>
    tpu.vector_store %arg6[%c0_71, %c0_72], %151 {strides = array<i32>} : memref<8x32xf32, #tpu.memory_space<vmem>>, vector<8x8xf32>,
    %153 = vector.extract_strided_slice %133 {offsets = [0, 8], sizes = [8, 8], strides = [1, 1]} : vector<8x128xf32> to vector<8x8xf32>
    %154 = vector.extract_strided_slice %24 {offsets = [0, 8], sizes = [16, 8], strides = [1, 1]} : vector<16x128xf32> to vector<16x8xf32>
    %155 = vector.extract_strided_slice %24 {offsets = [0, 40], sizes = [16, 8], strides = [1, 1]} : vector<16x128xf32> to vector<16x8xf32>
    %cst_73 = arith.constant dense<0.000000e+00> : vector<8x16xf32>
    %156 = tpu.matmul %153, %154, %cst_73 {dimension_numbers = #tpu.dot_dimension_numbers<[1], [1], [0], [0], [0, 0, 1, 0], [], []>} : vector<8x8xf32>, vector<16x8xf32>, vector<8x16xf32> -> vector<8x16xf32>
    %cst_74 = arith.constant 0.353553385 : f32
    %157 = vector.broadcast %cst_74 : f32 to vector<8x16xf32>
    %158 = arith.mulf %156, %157 : vector<8x16xf32>
    %cst_75 = arith.constant dense<0xFF800000> : vector<8xf32>
    %159 = vector.multi_reduction <maximumf>, %158, %cst_75 [1] : vector<8x16xf32> to vector<8xf32>
    %160 = vector.shape_cast %159 : vector<8xf32> to vector<8x1xf32>
    %161 = vector.broadcast %160 : vector<8x1xf32> to vector<8x16xf32>
    %162 = arith.subf %158, %161 : vector<8x16xf32>
    %163 = math.exp %162 : vector<8x16xf32>
    %cst_76 = arith.constant dense<0.000000e+00> : vector<8x8xf32>
    %164 = tpu.matmul %163, %155, %cst_76 {dimension_numbers = #tpu.dot_dimension_numbers<[1], [0], [0], [1], [0, 0, 1, 1], [], []>} : vector<8x16xf32>, vector<16x8xf32>, vector<8x8xf32> -> vector<8x8xf32>
    %cst_77 = arith.constant dense<0.000000e+00> : vector<8xf32>
    %165 = vector.multi_reduction <add>, %163, %cst_77 [1] : vector<8x16xf32> to vector<8xf32>
    %166 = vector.shape_cast %165 : vector<8xf32> to vector<8x1xf32>
    %cst_78 = arith.constant 1.000000e+00 : f32
    %167 = vector.broadcast %cst_78 : f32 to vector<8x1xf32>
    %168 = arith.divf %167, %166 : vector<8x1xf32>
    %169 = vector.broadcast %168 : vector<8x1xf32> to vector<8x8xf32>
    %170 = arith.mulf %164, %169 : vector<8x8xf32>
    %c0_79 = arith.constant 0 : index
    %c8_80 = arith.constant 8 : index
    %171 = vector.load %arg6[%c0_79, %c8_80] : memref<8x32xf32, #tpu.memory_space<vmem>>, vector<8x8xf32>
    tpu.vector_store %arg6[%c0_79, %c8_80], %170 {strides = array<i32>} : memref<8x32xf32, #tpu.memory_space<vmem>>, vector<8x8xf32>,
    %172 = vector.extract_strided_slice %133 {offsets = [0, 16], sizes = [8, 8], strides = [1, 1]} : vector<8x128xf32> to vector<8x8xf32>
    %173 = vector.extract_strided_slice %24 {offsets = [0, 16], sizes = [16, 8], strides = [1, 1]} : vector<16x128xf32> to vector<16x8xf32>
    %174 = vector.extract_strided_slice %24 {offsets = [0, 48], sizes = [16, 8], strides = [1, 1]} : vector<16x128xf32> to vector<16x8xf32>
    %cst_81 = arith.constant dense<0.000000e+00> : vector<8x16xf32>
    %175 = tpu.matmul %172, %173, %cst_81 {dimension_numbers = #tpu.dot_dimension_numbers<[1], [1], [0], [0], [0, 0, 1, 0], [], []>} : vector<8x8xf32>, vector<16x8xf32>, vector<8x16xf32> -> vector<8x16xf32>
    %cst_82 = arith.constant 0.353553385 : f32
    %176 = vector.broadcast %cst_82 : f32 to vector<8x16xf32>
    %177 = arith.mulf %175, %176 : vector<8x16xf32>
    %cst_83 = arith.constant dense<0xFF800000> : vector<8xf32>
    %178 = vector.multi_reduction <maximumf>, %177, %cst_83 [1] : vector<8x16xf32> to vector<8xf32>
    %179 = vector.shape_cast %178 : vector<8xf32> to vector<8x1xf32>
    %180 = vector.broadcast %179 : vector<8x1xf32> to vector<8x16xf32>
    %181 = arith.subf %177, %180 : vector<8x16xf32>
    %182 = math.exp %181 : vector<8x16xf32>
    %cst_84 = arith.constant dense<0.000000e+00> : vector<8x8xf32>
    %183 = tpu.matmul %182, %174, %cst_84 {dimension_numbers = #tpu.dot_dimension_numbers<[1], [0], [0], [1], [0, 0, 1, 1], [], []>} : vector<8x16xf32>, vector<16x8xf32>, vector<8x8xf32> -> vector<8x8xf32>
    %cst_85 = arith.constant dense<0.000000e+00> : vector<8xf32>
    %184 = vector.multi_reduction <add>, %182, %cst_85 [1] : vector<8x16xf32> to vector<8xf32>
    %185 = vector.shape_cast %184 : vector<8xf32> to vector<8x1xf32>
    %cst_86 = arith.constant 1.000000e+00 : f32
    %186 = vector.broadcast %cst_86 : f32 to vector<8x1xf32>
    %187 = arith.divf %186, %185 : vector<8x1xf32>
    %188 = vector.broadcast %187 : vector<8x1xf32> to vector<8x8xf32>
    %189 = arith.mulf %183, %188 : vector<8x8xf32>
    %c0_87 = arith.constant 0 : index
    %c16_88 = arith.constant 16 : index
    %190 = vector.load %arg6[%c0_87, %c16_88] : memref<8x32xf32, #tpu.memory_space<vmem>>, vector<8x8xf32>
    tpu.vector_store %arg6[%c0_87, %c16_88], %189 {strides = array<i32>} : memref<8x32xf32, #tpu.memory_space<vmem>>, vector<8x8xf32>,
    %191 = vector.extract_strided_slice %133 {offsets = [0, 24], sizes = [8, 8], strides = [1, 1]} : vector<8x128xf32> to vector<8x8xf32>
    %192 = vector.extract_strided_slice %24 {offsets = [0, 24], sizes = [16, 8], strides = [1, 1]} : vector<16x128xf32> to vector<16x8xf32>
    %193 = vector.extract_strided_slice %24 {offsets = [0, 56], sizes = [16, 8], strides = [1, 1]} : vector<16x128xf32> to vector<16x8xf32>
    %cst_89 = arith.constant dense<0.000000e+00> : vector<8x16xf32>
    %194 = tpu.matmul %191, %192, %cst_89 {dimension_numbers = #tpu.dot_dimension_numbers<[1], [1], [0], [0], [0, 0, 1, 0], [], []>} : vector<8x8xf32>, vector<16x8xf32>, vector<8x16xf32> -> vector<8x16xf32>
    %cst_90 = arith.constant 0.353553385 : f32
    %195 = vector.broadcast %cst_90 : f32 to vector<8x16xf32>
    %196 = arith.mulf %194, %195 : vector<8x16xf32>
    %cst_91 = arith.constant dense<0xFF800000> : vector<8xf32>
    %197 = vector.multi_reduction <maximumf>, %196, %cst_91 [1] : vector<8x16xf32> to vector<8xf32>
    %198 = vector.shape_cast %197 : vector<8xf32> to vector<8x1xf32>
    %199 = vector.broadcast %198 : vector<8x1xf32> to vector<8x16xf32>
    %200 = arith.subf %196, %199 : vector<8x16xf32>
    %201 = math.exp %200 : vector<8x16xf32>
    %cst_92 = arith.constant dense<0.000000e+00> : vector<8x8xf32>
    %202 = tpu.matmul %201, %193, %cst_92 {dimension_numbers = #tpu.dot_dimension_numbers<[1], [0], [0], [1], [0, 0, 1, 1], [], []>} : vector<8x16xf32>, vector<16x8xf32>, vector<8x8xf32> -> vector<8x8xf32>
    %cst_93 = arith.constant dense<0.000000e+00> : vector<8xf32>
    %203 = vector.multi_reduction <add>, %201, %cst_93 [1] : vector<8x16xf32> to vector<8xf32>
    %204 = vector.shape_cast %203 : vector<8xf32> to vector<8x1xf32>
    %cst_94 = arith.constant 1.000000e+00 : f32
    %205 = vector.broadcast %cst_94 : f32 to vector<8x1xf32>
    %206 = arith.divf %205, %204 : vector<8x1xf32>
    %207 = vector.broadcast %206 : vector<8x1xf32> to vector<8x8xf32>
    %208 = arith.mulf %202, %207 : vector<8x8xf32>
    %c0_95 = arith.constant 0 : index
    %c24_96 = arith.constant 24 : index
    %209 = vector.load %arg6[%c0_95, %c24_96] : memref<8x32xf32, #tpu.memory_space<vmem>>, vector<8x8xf32>
    tpu.vector_store %arg6[%c0_95, %c24_96], %208 {strides = array<i32>} : memref<8x32xf32, #tpu.memory_space<vmem>>, vector<8x8xf32>,
    %c0_97 = arith.constant 0 : index
    %c0_98 = arith.constant 0 : index
    %210 = vector.load %arg6[%c0_97, %c0_98] : memref<8x32xf32, #tpu.memory_space<vmem>>, vector<8x32xf32>
    %cst_99 = arith.constant dense<0.000000e+00> : vector<8x32xf32>
    %211 = tpu.matmul %210, %6, %cst_99 {dimension_numbers = #tpu.dot_dimension_numbers<[1], [0], [0], [1], [0, 0, 1, 1], [], []>} : vector<8x32xf32>, vector<32x32xf32>, vector<8x32xf32> -> vector<8x32xf32>
    %212 = vector.broadcast %13 : vector<1x32xf32> to vector<8x32xf32>
    %213 = arith.addf %211, %212 : vector<8x32xf32>
    %214 = arith.addf %130, %213 : vector<8x32xf32>
    %cst_100 = arith.constant dense<0.000000e+00> : vector<8xf32>
    %215 = vector.multi_reduction <add>, %214, %cst_100 [1] : vector<8x32xf32> to vector<8xf32>
    %216 = vector.shape_cast %215 : vector<8xf32> to vector<8x1xf32>
    %cst_101 = arith.constant 3.200000e+01 : f32
    %217 = vector.broadcast %cst_101 : f32 to vector<8x1xf32>
    %218 = arith.divf %216, %217 : vector<8x1xf32>
    %219 = vector.broadcast %218 : vector<8x1xf32> to vector<8x32xf32>
    %220 = arith.subf %214, %219 : vector<8x32xf32>
    %221 = arith.mulf %220, %220 : vector<8x32xf32>
    %cst_102 = arith.constant dense<0.000000e+00> : vector<8xf32>
    %222 = vector.multi_reduction <add>, %221, %cst_102 [1] : vector<8x32xf32> to vector<8xf32>
    %223 = vector.shape_cast %222 : vector<8xf32> to vector<8x1xf32>
    %cst_103 = arith.constant 3.200000e+01 : f32
    %224 = vector.broadcast %cst_103 : f32 to vector<8x1xf32>
    %225 = arith.divf %223, %224 : vector<8x1xf32>
    %226 = vector.broadcast %218 : vector<8x1xf32> to vector<8x32xf32>
    %227 = arith.subf %214, %226 : vector<8x32xf32>
    %cst_104 = arith.constant 9.99999974E-6 : f32
    %228 = vector.broadcast %cst_104 : f32 to vector<8x1xf32>
    %229 = arith.addf %225, %228 : vector<8x1xf32>
    %230 = math.rsqrt %229 : vector<8x1xf32>
    %231 = vector.broadcast %230 : vector<8x1xf32> to vector<8x32xf32>
    %232 = arith.mulf %227, %231 : vector<8x32xf32>
    %233 = vector.broadcast %18 : vector<1x32xf32> to vector<8x32xf32>
    %234 = arith.mulf %232, %233 : vector<8x32xf32>
    %235 = vector.broadcast %19 : vector<1x32xf32> to vector<8x32xf32>
    %236 = arith.addf %234, %235 : vector<8x32xf32>
    %cst_105 = arith.constant dense<0.000000e+00> : vector<8x128xf32>
    %237 = tpu.matmul %236, %7, %cst_105 {dimension_numbers = #tpu.dot_dimension_numbers<[1], [0], [0], [1], [0, 0, 1, 1], [], []>} : vector<8x32xf32>, vector<32x128xf32>, vector<8x128xf32> -> vector<8x128xf32>
    %238 = vector.broadcast %14 : vector<1x128xf32> to vector<8x128xf32>
    %239 = arith.addf %237, %238 : vector<8x128xf32>
    %cst_106 = arith.constant 5.000000e-01 : f32
    %240 = vector.broadcast %cst_106 : f32 to vector<8x128xf32>
    %241 = arith.mulf %240, %239 : vector<8x128xf32>
    %cst_107 = arith.constant 0.707106769 : f32
    %242 = vector.broadcast %cst_107 : f32 to vector<8x128xf32>
    %243 = arith.mulf %239, %242 : vector<8x128xf32>
    %cst_108 = arith.constant -4.000000e+00 : f32
    %cst_109 = arith.constant 4.000000e+00 : f32
    %244 = vector.broadcast %cst_108 : f32 to vector<8x128xf32>
    %245 = arith.maximumf %244, %243 : vector<8x128xf32>
    %246 = vector.broadcast %cst_109 : f32 to vector<8x128xf32>
    %247 = arith.minimumf %246, %245 : vector<8x128xf32>
    %248 = arith.mulf %247, %247 : vector<8x128xf32>
    %cst_110 = arith.constant -2.72614237E-10 : f32
    %249 = vector.broadcast %cst_110 : f32 to vector<8x128xf32>
    %250 = arith.mulf %249, %248 : vector<8x128xf32>
    %cst_111 = arith.constant 2.77068146E-8 : f32
    %251 = vector.broadcast %cst_111 : f32 to vector<8x128xf32>
    %252 = arith.addf %250, %251 : vector<8x128xf32>
    %253 = arith.mulf %252, %248 : vector<8x128xf32>
    %cst_112 = arith.constant -2.10102394E-6 : f32
    %254 = vector.broadcast %cst_112 : f32 to vector<8x128xf32>
    %255 = arith.addf %253, %254 : vector<8x128xf32>
    %256 = arith.mulf %255, %248 : vector<8x128xf32>
    %cst_113 = arith.constant -5.69250624E-5 : f32
    %257 = vector.broadcast %cst_113 : f32 to vector<8x128xf32>
    %258 = arith.addf %256, %257 : vector<8x128xf32>
    %259 = arith.mulf %258, %248 : vector<8x128xf32>
    %cst_114 = arith.constant -7.34990637E-4 : f32
    %260 = vector.broadcast %cst_114 : f32 to vector<8x128xf32>
    %261 = arith.addf %259, %260 : vector<8x128xf32>
    %262 = arith.mulf %261, %248 : vector<8x128xf32>
    %cst_115 = arith.constant -2.954600e-03 : f32
    %263 = vector.broadcast %cst_115 : f32 to vector<8x128xf32>
    %264 = arith.addf %262, %263 : vector<8x128xf32>
    %265 = arith.mulf %264, %248 : vector<8x128xf32>
    %cst_116 = arith.constant -0.0160960332 : f32
    %266 = vector.broadcast %cst_116 : f32 to vector<8x128xf32>
    %267 = arith.addf %265, %266 : vector<8x128xf32>
    %268 = arith.mulf %247, %267 : vector<8x128xf32>
    %cst_117 = arith.constant -1.45660715E-5 : f32
    %269 = vector.broadcast %cst_117 : f32 to vector<8x128xf32>
    %270 = arith.mulf %269, %248 : vector<8x128xf32>
    %cst_118 = arith.constant -2.13374049E-4 : f32
    %271 = vector.broadcast %cst_118 : f32 to vector<8x128xf32>
    %272 = arith.addf %270, %271 : vector<8x128xf32>
    %273 = arith.mulf %272, %248 : vector<8x128xf32>
    %cst_119 = arith.constant -0.00168282702 : f32
    %274 = vector.broadcast %cst_119 : f32 to vector<8x128xf32>
    %275 = arith.addf %273, %274 : vector<8x128xf32>
    %276 = arith.mulf %275, %248 : vector<8x128xf32>
    %cst_120 = arith.constant -0.00737332925 : f32
    %277 = vector.broadcast %cst_120 : f32 to vector<8x128xf32>
    %278 = arith.addf %276, %277 : vector<8x128xf32>
    %279 = arith.mulf %278, %248 : vector<8x128xf32>
    %cst_121 = arith.constant -0.0142647391 : f32
    %280 = vector.broadcast %cst_121 : f32 to vector<8x128xf32>
    %281 = arith.addf %279, %280 : vector<8x128xf32>
    %282 = arith.divf %268, %281 : vector<8x128xf32>
    %cst_122 = arith.constant 1.000000e+00 : f32
    %283 = vector.broadcast %cst_122 : f32 to vector<8x128xf32>
    %284 = arith.addf %283, %282 : vector<8x128xf32>
    %285 = arith.mulf %241, %284 : vector<8x128xf32>
    %cst_123 = arith.constant dense<0.000000e+00> : vector<8x32xf32>
    %286 = tpu.matmul %285, %8, %cst_123 {dimension_numbers = #tpu.dot_dimension_numbers<[1], [0], [0], [1], [0, 0, 1, 1], [], []>} : vector<8x128xf32>, vector<128x32xf32>, vector<8x32xf32> -> vector<8x32xf32>
    %287 = vector.broadcast %15 : vector<1x32xf32> to vector<8x32xf32>
    %288 = arith.addf %286, %287 : vector<8x32xf32>
    %289 = arith.addf %236, %288 : vector<8x32xf32>
    %cst_124 = arith.constant dense<0.000000e+00> : vector<8xf32>
    %290 = vector.multi_reduction <add>, %289, %cst_124 [1] : vector<8x32xf32> to vector<8xf32>
    %291 = vector.shape_cast %290 : vector<8xf32> to vector<8x1xf32>
    %cst_125 = arith.constant 3.200000e+01 : f32
    %292 = vector.broadcast %cst_125 : f32 to vector<8x1xf32>
    %293 = arith.divf %291, %292 : vector<8x1xf32>
    %294 = vector.broadcast %293 : vector<8x1xf32> to vector<8x32xf32>
    %295 = arith.subf %289, %294 : vector<8x32xf32>
    %296 = arith.mulf %295, %295 : vector<8x32xf32>
    %cst_126 = arith.constant dense<0.000000e+00> : vector<8xf32>
    %297 = vector.multi_reduction <add>, %296, %cst_126 [1] : vector<8x32xf32> to vector<8xf32>
    %298 = vector.shape_cast %297 : vector<8xf32> to vector<8x1xf32>
    %cst_127 = arith.constant 3.200000e+01 : f32
    %299 = vector.broadcast %cst_127 : f32 to vector<8x1xf32>
    %300 = arith.divf %298, %299 : vector<8x1xf32>
    %301 = vector.broadcast %293 : vector<8x1xf32> to vector<8x32xf32>
    %302 = arith.subf %289, %301 : vector<8x32xf32>
    %cst_128 = arith.constant 9.99999974E-6 : f32
    %303 = vector.broadcast %cst_128 : f32 to vector<8x1xf32>
    %304 = arith.addf %300, %303 : vector<8x1xf32>
    %305 = math.rsqrt %304 : vector<8x1xf32>
    %306 = vector.broadcast %305 : vector<8x1xf32> to vector<8x32xf32>
    %307 = arith.mulf %302, %306 : vector<8x32xf32>
    %308 = vector.broadcast %20 : vector<1x32xf32> to vector<8x32xf32>
    %309 = arith.mulf %307, %308 : vector<8x32xf32>
    %310 = vector.broadcast %21 : vector<1x32xf32> to vector<8x32xf32>
    %311 = arith.addf %309, %310 : vector<8x32xf32>
    %c0_129 = arith.constant 0 : index
    %c0_130 = arith.constant 0 : index
    %312 = vector.load %arg5[%c0_129, %c0_130] : memref<8x32xf32, #tpu.memory_space<vmem>>, vector<8x32xf32>
    tpu.vector_store %arg5[%c0_129, %c0_130], %311 {strides = array<i32>} : memref<8x32xf32, #tpu.memory_space<vmem>>, vector<8x32xf32>,
    return
  }
  func.func @transform_0(%arg0: i32) -> (i32, i32) {
    %c0_i32 = arith.constant 0 : i32
    %c0_i32_0 = arith.constant 0 : i32
    return %arg0, %c0_i32 : i32, i32
  }
  func.func @transform_1(%arg0: i32) -> (i32, i32) {
    %c0_i32 = arith.constant 0 : i32
    %c0_i32_0 = arith.constant 0 : i32
    return %arg0, %c0_i32 : i32, i32
  }
  func.func @transform_2(%arg0: i32) -> (i32, i32) {
    %c0_i32 = arith.constant 0 : i32
    %c0_i32_0 = arith.constant 0 : i32
    %c0_i32_1 = arith.constant 0 : i32
    return %c0_i32, %c0_i32_0 : i32, i32
  }
  func.func @transform_3(%arg0: i32) -> (i32, i32) {
    %c0_i32 = arith.constant 0 : i32
    %c0_i32_0 = arith.constant 0 : i32
    %c0_i32_1 = arith.constant 0 : i32
    return %c0_i32, %c0_i32_0 : i32, i32
  }
  func.func @transform_4(%arg0: i32) -> (i32, i32) {
    %c0_i32 = arith.constant 0 : i32
    %c0_i32_0 = arith.constant 0 : i32
    return %arg0, %c0_i32 : i32, i32
  }
}

</mosaic_0001>

<llo_original>
// kernel: tpu_custom_call.1
$region0: #{tpu_custom_call.1}
  #allocation0 [shape = 'u32[]', space=smem, size = 0x4, offset = 0x4, fixed_abs, tag = 'smem constant byte address 0x4 - core index']
  #allocation1 [shape = 'u32[144,128]{1,0:T(1,128)}', space=vmem, size = 0x12000, scoped, tag = 'internal scratch']
  #allocation2 [shape = 'f32[8,32]{1,0:T(8,128)}', space=vmem, size = 0x1000, scoped, tag = 'scratch operand']
  %s0 = inlined_call_operand.hbm [shape: f32[16,32], index: 0, kind: input, shape index: {}]
  %s1 = inlined_call_operand.hbm [shape: f32[32,32], index: 1, kind: input, shape index: {}]
  %s2 = inlined_call_operand.hbm [shape: f32[320,128], index: 2, kind: input, shape index: {}]
  %s3 = inlined_call_operand.hbm [shape: f32[16,128], index: 3, kind: input, shape index: {}]
  %s4 = inlined_call_operand.hbm [shape: f32[16,32], index: 4, kind: output, shape index: {}]
  %s5 = sld [smem:[#allocation0]]
  $region65: #{tpu_custom_call.1} parent=0
    _
  %s7 = ssub.s32 1, %s5
  %s8 = scalar_select 0, %s7, %s5
  $region1: #{tpu_custom_call.1} parent=0
    #allocation3 [shape = 'u8[8192]{0}', space=vmem, size = 0x2000, scoped, tag = 'input window, operand 0']
    #allocation4 [shape = 's32[2]{0}', space=sflag, size = 0x8, scoped, tag = 'scoped memory for tpu_custom_call.1']
    #allocation5 [shape = 's32[2]{0}', space=sflag, size = 0x8, scoped, tag = 'scoped memory for tpu_custom_call.1']
    #allocation6 [shape = 'u8[16384]{0}', space=vmem, size = 0x4000, scoped, tag = 'input window, operand 1']
    #allocation7 [shape = 's32[2]{0}', space=sflag, size = 0x8, scoped, tag = 'scoped memory for tpu_custom_call.1']
    #allocation8 [shape = 'u8[163840]{0}', space=vmem, size = 0x28000, scoped, tag = 'input window, operand 2, single buffered']
    #allocation9 [shape = 'u8[8192]{0}', space=vmem, size = 0x2000, scoped, tag = 'input window, operand 3, single buffered']
    #allocation10 [shape = 's32[1]{0}', space=sflag, size = 0x4, scoped, tag = 'scoped memory for tpu_custom_call.1']
    #allocation11 [shape = 'u8[8192]{0}', space=vmem, size = 0x2000, scoped, tag = 'output window, operand 0']
    %9 = vsyncpa [#allocation4], 0
    %s10 = scalar_lea.sflag [#allocation4], 1
    %11 = vsyncpa %s10, 0
    %12 = vsyncpa [#allocation7], 0
    %s13 = scalar_lea.sflag [#allocation7], 1
    %14 = vsyncpa %s13, 0
    %15 = vsyncpa [#allocation10], 0
    %16 = vsyncpa [#allocation5], 0
    %s17 = scalar_lea.sflag [#allocation5], 1
    %18 = vsyncpa %s17, 0
    loop: start=0, step=1, limit=4
    $region2: #{tpu_custom_call.1} parent=1 // loop_pre_header
      _
    $region3: #{tpu_custom_call.1} parent=1 // loop_header
      %s20 = sphi 0, %s24
      %p21 = scmp.ge.s32.totalorder %s20, 4
      %s30 = sphi 0, %s32
      %s33 = sphi 0, %s30
      %s34 = sphi 0, %s33
      %s50 = sphi 0, %s34
      %s56 = sphi 0, %s58
      %s59 = sphi 0, %s56
      %s60 = sphi 0, %s59
      %s76 = sphi 0, %s60
      %s80 = sphi 0, %s80
      %s82 = sphi 0, %s80
      %s83 = sphi 0, %s82
      %s97 = sphi 0, %s83
      %s101 = sphi 0, %s101
      %s103 = sphi 0, %s101
      %s104 = sphi 0, %s103
      %s118 = sphi 0, %s104
      %s124 = sphi 0, %s126
      %s127 = sphi 0, %s124
      %s128 = sphi 0, %s127
      %s144 = sphi 0, %s128
    $region4: #{tpu_custom_call.1} parent=1 // loop_header_branch
      %23 = sbr.rel (%p21) target = $region8
    $region5: #{tpu_custom_call.1} parent=1 // loop_body
      %s25 = ssub.s32 %s20, 1
      %s26 = ssub.s32 %s20, 2
      %s27 = sadd.s32 %s20, 1
      %s28 = ssub.s32 %s20, %s27
      %p29 = scmp.eq.s32.totalorder %s28, 0
      %s31 = sadd.s32 %s30, 1
      %s32 = scalar_select %p29, %s30, %s31
      %p35 = pneg %p29
      %p36 = scmp.eq.s32.totalorder %s20, 1
      %p37 = por %p35, %p36
      %p38 = scmp.ne.s32.totalorder %s30, %s33
      %p39 = scmp.eq.s32.totalorder %s20, 0
      %p40 = por %p38, %p39
      %p41 = scmp.ne.s32.totalorder %s30, %s33
      %p42 = scmp.eq.s32.totalorder %s25, 1
      %p43 = por %p41, %p42
      %p44 = scmp.ne.s32.totalorder %s33, %s34
      %p45 = scmp.eq.s32.totalorder %s25, 0
      %p46 = por %p44, %p45
      %p47 = scmp.ne.s32.totalorder %s33, %s34
      %p48 = scmp.eq.s32.totalorder %s26, 1
      %p49 = por %p47, %p48
      %p51 = scmp.ne.s32.totalorder %s34, %s50
      %p52 = scmp.eq.s32.totalorder %s26, 0
      %p53 = por %p51, %p52
      %s54 = ssub.s32 %s20, %s27
      %p55 = scmp.eq.s32.totalorder %s54, 0
      %s57 = sadd.s32 %s56, 1
      %s58 = scalar_select %p55, %s56, %s57
      %p61 = pneg %p55
      %p62 = scmp.eq.s32.totalorder %s20, 1
      %p63 = por %p61, %p62
      %p64 = scmp.ne.s32.totalorder %s56, %s59
      %p65 = scmp.eq.s32.totalorder %s20, 0
      %p66 = por %p64, %p65
      %p67 = scmp.ne.s32.totalorder %s56, %s59
      %p68 = scmp.eq.s32.totalorder %s25, 1
      %p69 = por %p67, %p68
      %p70 = scmp.ne.s32.totalorder %s59, %s60
      %p71 = scmp.eq.s32.totalorder %s25, 0
      %p72 = por %p70, %p71
      %p73 = scmp.ne.s32.totalorder %s59, %s60
      %p74 = scmp.eq.s32.totalorder %s26, 1
      %p75 = por %p73, %p74
      %p77 = scmp.ne.s32.totalorder %s60, %s76
      %p78 = scmp.eq.s32.totalorder %s26, 0
      %p79 = por %p77, %p78
      %s81 = sadd.s32 %s80, 1
      %p84 = scmp.eq.s32.totalorder %s20, 1
      %p85 = scmp.ne.s32.totalorder %s80, %s82
      %p86 = scmp.eq.s32.totalorder %s20, 0
      %p87 = por %p85, %p86
      %p88 = scmp.ne.s32.totalorder %s80, %s82
      %p89 = scmp.eq.s32.totalorder %s25, 1
      %p90 = por %p88, %p89
      %p91 = scmp.ne.s32.totalorder %s82, %s83
      %p92 = scmp.eq.s32.totalorder %s25, 0
      %p93 = por %p91, %p92
      %p94 = scmp.ne.s32.totalorder %s82, %s83
      %p95 = scmp.eq.s32.totalorder %s26, 1
      %p96 = por %p94, %p95
      %p98 = scmp.ne.s32.totalorder %s83, %s97
      %p99 = scmp.eq.s32.totalorder %s26, 0
      %p100 = por %p98, %p99
      %s102 = sadd.s32 %s101, 1
      %p105 = scmp.eq.s32.totalorder %s20, 1
      %p106 = scmp.ne.s32.totalorder %s101, %s103
      %p107 = scmp.eq.s32.totalorder %s20, 0
      %p108 = por %p106, %p107
      %p109 = scmp.ne.s32.totalorder %s101, %s103
      %p110 = scmp.eq.s32.totalorder %s25, 1
      %p111 = por %p109, %p110
      %p112 = scmp.ne.s32.totalorder %s103, %s104
      %p113 = scmp.eq.s32.totalorder %s25, 0
      %p114 = por %p112, %p113
      %p115 = scmp.ne.s32.totalorder %s103, %s104
      %p116 = scmp.eq.s32.totalorder %s26, 1
      %p117 = por %p115, %p116
      %p119 = scmp.ne.s32.totalorder %s104, %s118
      %p120 = scmp.eq.s32.totalorder %s26, 0
      %p121 = por %p119, %p120
      %s122 = ssub.s32 %s20, %s27
      %p123 = scmp.eq.s32.totalorder %s122, 0
      %s125 = sadd.s32 %s124, 1
      %s126 = scalar_select %p123, %s124, %s125
      %p129 = pneg %p123
      %p130 = scmp.eq.s32.totalorder %s20, 1
      %p131 = por %p129, %p130
      %p132 = scmp.ne.s32.totalorder %s124, %s127
      %p133 = scmp.eq.s32.totalorder %s20, 0
      %p134 = por %p132, %p133
      %p135 = scmp.ne.s32.totalorder %s124, %s127
      %p136 = scmp.eq.s32.totalorder %s25, 1
      %p137 = por %p135, %p136
      %p138 = scmp.ne.s32.totalorder %s127, %s128
      %p139 = scmp.eq.s32.totalorder %s25, 0
      %p140 = por %p138, %p139
      %p141 = scmp.ne.s32.totalorder %s127, %s128
      %p142 = scmp.eq.s32.totalorder %s26, 1
      %p143 = por %p141, %p142
      %p145 = scmp.ne.s32.totalorder %s128, %s144
      %p146 = scmp.eq.s32.totalorder %s26, 0
      %p147 = por %p145, %p146
      %p148 = scmp.le.s32.totalorder 1, %s20
      %p149 = scmp.lt.s32.totalorder %s20, 3
      %p150 = pnand %p148, %p149
      %p151 = pneg %p150
      // Predicated region
      $region9: #{tpu_custom_call.1} parent=5 // pred_check
        _
      $region10: #{tpu_custom_call.1} parent=5 // pred_check_branch
        %153 = sbr.rel (%p150) target = $region12
      $region11: #{tpu_custom_call.1} parent=5 // pred_region
        %s154 = ssub.s32 %s20, 1
        // Predicated region
        $region13: #{tpu_custom_call.1} parent=11 // pred_check
          %p155 = pneg %p93
        $region14: #{tpu_custom_call.1} parent=11 // pred_check_branch
          %157 = sbr.rel (%p155) target = $region16
        $region15: #{tpu_custom_call.1} parent=11 // pred_region
          %s159 = ssub.s32 5120, 5120
          %160 = vsyncadd [#allocation7], %s159
          %s161 = sshll.u32 [#allocation8], 4
          %s162 = int_to_ptr.vmem [resolvable:$true] %s161
          %167 = dma.hbm_to_vmem [thread:$0]  %s2, 5120, %s162, [#allocation7], 128, 128, 8
        $region16: #{tpu_custom_call.1} parent=11 // pred_fallthru
          _
        // Predicated region
        $region17: #{tpu_custom_call.1} parent=11 // pred_check
          %p168 = pneg %p114
        $region18: #{tpu_custom_call.1} parent=11 // pred_check_branch
          %170 = sbr.rel (%p168) target = $region20
        $region19: #{tpu_custom_call.1} parent=11 // pred_region
          %s172 = ssub.s32 256, 256
          %173 = vsyncadd [#allocation10], %s172
          %s174 = sshll.u32 [#allocation9], 4
          %s175 = int_to_ptr.vmem [resolvable:$true] %s174
          %180 = dma.hbm_to_vmem [thread:$0]  %s3, 256, %s175, [#allocation10], 128, 128, 8
        $region20: #{tpu_custom_call.1} parent=11 // pred_fallthru
          _
      $region12: #{tpu_custom_call.1} parent=5 // pred_fallthru
        _
      %p181 = scmp.lt.s32.totalorder %s20, 2
      // Predicated region
      $region21: #{tpu_custom_call.1} parent=5 // pred_check
        %p182 = pneg %p181
      $region22: #{tpu_custom_call.1} parent=5 // pred_check_branch
        %184 = sbr.rel (%p182) target = $region24
      $region23: #{tpu_custom_call.1} parent=5 // pred_region
        // Predicated region
        $region25: #{tpu_custom_call.1} parent=23 // pred_check
          %p185 = pneg %p40
        $region26: #{tpu_custom_call.1} parent=23 // pred_check_branch
          %187 = sbr.rel (%p185) target = $region28
        $region27: #{tpu_custom_call.1} parent=23 // pred_region
          %s188 = sand.u32 %s30, 1
          %s189 = scalar_lea.sflag [#allocation4], %s188
          %s190 = sand.u32 %s30, 1
          %s191 = smul.addr %s190, 8
          %s192 = scalar_lea.vmem [#allocation3], %s191
          %s194 = ssub.s32 128, 128
          %195 = vsyncadd %s189, %s194
          %s196 = smul.addr %s20, 128
          %s197 = scalar_lea.hbm %s0, %s196
          %s199 = sshll.u32 %s192, 4
          %s200 = int_to_ptr.vmem [resolvable:$true] %s199
          %202 = dma.hbm_to_vmem [thread:$0]  %s197, 128, %s200, %s189
        $region28: #{tpu_custom_call.1} parent=23 // pred_fallthru
          _
        // Predicated region
        $region29: #{tpu_custom_call.1} parent=23 // pred_check
          %p203 = pneg %p66
        $region30: #{tpu_custom_call.1} parent=23 // pred_check_branch
          %205 = sbr.rel (%p203) target = $region32
        $region31: #{tpu_custom_call.1} parent=23 // pred_region
          %s206 = sand.u32 %s20, 1
          %s207 = scalar_lea.sflag [#allocation7], %s206
          %s208 = sand.u32 %s56, 1
          %s209 = smul.addr %s208, 16
          %s210 = scalar_lea.vmem [#allocation6], %s209
          %s211 = smul.u32 2, %s20
          %s213 = ssub.s32 256, 256
          %214 = vsyncadd %s207, %s213
          %s215 = smul.addr %s211, 128
          %s216 = scalar_lea.hbm %s1, %s215
          %s217 = sshll.u32 %s210, 4
          %s218 = int_to_ptr.vmem [resolvable:$true] %s217
          %223 = dma.hbm_to_vmem [thread:$0]  %s216, 256, %s218, %s207, 128, 128, 8
        $region32: #{tpu_custom_call.1} parent=23 // pred_fallthru
          _
      $region24: #{tpu_custom_call.1} parent=5 // pred_fallthru
        _
      %p224 = scmp.le.s32.totalorder 1, %s20
      %p225 = scmp.lt.s32.totalorder %s20, 3
      %p226 = pnand %p224, %p225
      %p227 = pneg %p226
      // Predicated region
      $region33: #{tpu_custom_call.1} parent=5 // pred_check
        _
      $region34: #{tpu_custom_call.1} parent=5 // pred_check_branch
        %229 = sbr.rel (%p226) target = $region36
      $region35: #{tpu_custom_call.1} parent=5 // pred_region
        %s230 = ssub.s32 %s20, 1
        %s231 = sand.u32 %s33, 1
        %s232 = scalar_lea.sflag [#allocation4], %s231
        %s233 = sand.u32 %s33, 1
        %s234 = smul.addr %s233, 8
        %s235 = scalar_lea.vmem [#allocation3], %s234
        // Predicated region
        $region37: #{tpu_custom_call.1} parent=35 // pred_check
          %p236 = pneg %p46
        $region38: #{tpu_custom_call.1} parent=35 // pred_check_branch
          %238 = sbr.rel (%p236) target = $region40
        $region39: #{tpu_custom_call.1} parent=35 // pred_region
          %239 = dma.done %s232, 128
        $region40: #{tpu_custom_call.1} parent=35 // pred_fallthru
          _
        %s240 = sand.u32 %s25, 1
        %s241 = scalar_lea.sflag [#allocation7], %s240
        %s242 = sand.u32 %s59, 1
        %s243 = smul.addr %s242, 16
        %s244 = scalar_lea.vmem [#allocation6], %s243
        // Predicated region
        $region41: #{tpu_custom_call.1} parent=35 // pred_check
          %p245 = pneg %p72
        $region42: #{tpu_custom_call.1} parent=35 // pred_check_branch
          %247 = sbr.rel (%p245) target = $region44
        $region43: #{tpu_custom_call.1} parent=35 // pred_region
          %248 = dma.done %s241, 256
        $region44: #{tpu_custom_call.1} parent=35 // pred_fallthru
          _
        // Predicated region
        $region45: #{tpu_custom_call.1} parent=35 // pred_check
          %p249 = pneg %p93
        $region46: #{tpu_custom_call.1} parent=35 // pred_check_branch
          %251 = sbr.rel (%p249) target = $region48
        $region47: #{tpu_custom_call.1} parent=35 // pred_region
          %252 = dma.done [#allocation7], 5120
        $region48: #{tpu_custom_call.1} parent=35 // pred_fallthru
          _
        // Predicated region
        $region49: #{tpu_custom_call.1} parent=35 // pred_check
          %p253 = pneg %p114
        $region50: #{tpu_custom_call.1} parent=35 // pred_check_branch
          %255 = sbr.rel (%p253) target = $region52
        $region51: #{tpu_custom_call.1} parent=35 // pred_region
          %256 = dma.done [#allocation10], 256
        $region52: #{tpu_custom_call.1} parent=35 // pred_fallthru
          _
        %s257 = sand.u32 %s33, 1
        %s258 = scalar_lea.sflag [#allocation4], %s257
        %s259 = sand.u32 %s33, 1
        %s260 = smul.addr %s259, 8
        %s261 = scalar_lea.vmem [#allocation3], %s260
        %p262 = pneg %p46
        %p263 = pneg %p43
        %s264 = sand.u32 %s25, 1
        %s265 = scalar_lea.sflag [#allocation7], %s264
        %s266 = sand.u32 %s59, 1
        %s267 = smul.addr %s266, 16
        %s268 = scalar_lea.vmem [#allocation6], %s267
        %p269 = pneg %p72
        %p270 = pneg %p69
        %p271 = pneg %p93
        %p272 = pneg %p90
        %p273 = pneg %p114
        %p274 = pneg %p111
        %p275 = pneg %p140
        %p276 = pneg %p137
        %s277 = sand.u32 %s127, 1
        %s278 = scalar_lea.sflag [#allocation5], %s277
        %s279 = sand.u32 %s127, 1
        %s280 = smul.addr %s279, 8
        %s281 = scalar_lea.vmem [#allocation11], %s280
        %s282 = smul.u32 2, %s25
        %v283 = vld [vmem:[%s235] sm:$0xff]
        %v284 = vld [vmem:[%s244] sm:$0xff]
        %v285 = vld [vmem:[%s244 + $0x8] sm:$0xff]
        %v286 = vld [vmem:[#allocation8] sm:$0xff]
        %v287 = vld [vmem:[#allocation8 + $0x8] sm:$0xff]
        %v288 = vld [vmem:[#allocation8 + $0x10] sm:$0xff]
        %v289 = vld [vmem:[#allocation8 + $0x18] sm:$0xff]
        %v290 = vld [vmem:[#allocation8 + $0x20] sm:$0xff]
        %v291 = vld [vmem:[#allocation8 + $0x28] sm:$0xff]
        %v292 = vld [vmem:[#allocation8 + $0x30] sm:$0xff]
        %v293 = vld [vmem:[#allocation8 + $0x38] sm:$0xff]
        %v294 = vld [vmem:[#allocation8 + $0x40] sm:$0xff]
        %v295 = vld [vmem:[#allocation8 + $0x48] sm:$0xff]
        %v296 = vld [vmem:[#allocation8 + $0x50] sm:$0xff]
        %v297 = vld [vmem:[#allocation8 + $0x58] sm:$0xff]
        %v298 = vld [vmem:[#allocation8 + $0x60] sm:$0xff]
        %v299 = vld [vmem:[#allocation8 + $0x68] sm:$0xff]
        %v300 = vld [vmem:[#allocation8 + $0x70] sm:$0xff]
        %v301 = vld [vmem:[#allocation8 + $0x78] sm:$0xff]
        %v302 = vld [vmem:[#allocation8 + $0x80] sm:$0xff]
        %v303 = vld [vmem:[#allocation8 + $0x88] sm:$0xff]
        %v304 = vld [vmem:[#allocation8 + $0x90] sm:$0xff]
        %v305 = vld [vmem:[#allocation8 + $0x98] sm:$0xff]
        %v306 = vld [vmem:[#allocation8 + $0xa0] sm:$0xff]
        %v307 = vld [vmem:[#allocation8 + $0xa8] sm:$0xff]
        %v308 = vld [vmem:[#allocation8 + $0xb0] sm:$0xff]
        %v309 = vld [vmem:[#allocation8 + $0xb8] sm:$0xff]
        %v310 = vld [vmem:[#allocation8 + $0xc0] sm:$0xff]
        %v311 = vld [vmem:[#allocation8 + $0xc8] sm:$0xff]
        %v312 = vld [vmem:[#allocation8 + $0xd0] sm:$0xff]
        %v313 = vld [vmem:[#allocation8 + $0xd8] sm:$0xff]
        %v314 = vld [vmem:[#allocation8 + $0xe0] sm:$0xff]
        %v315 = vld [vmem:[#allocation8 + $0xe8] sm:$0xff]
        %v316 = vld [vmem:[#allocation8 + $0xf0] sm:$0xff]
        %v317 = vld [vmem:[#allocation8 + $0xf8] sm:$0xff]
        %v318 = vld [vmem:[#allocation8 + $0x100] sm:$0xff]
        %v319 = vld [vmem:[#allocation8 + $0x108] sm:$0xff]
        %v320 = vld [vmem:[#allocation8 + $0x110] sm:$0xff]
        %v321 = vld [vmem:[#allocation8 + $0x118] sm:$0xff]
        %v322 = vld [vmem:[#allocation8 + $0x120] sm:$0xff]
        %v323 = vld [vmem:[#allocation8 + $0x128] sm:$0xff]
        %v324 = vld [vmem:[#allocation8 + $0x130] sm:$0xff]
        %v325 = vld [vmem:[#allocation8 + $0x138] sm:$0xff]
        %v326 = vld [vmem:[#allocation9] sm:$0x1]
        %v327 = vld [vmem:[#allocation9 + $0x1] sm:$0x1]
        %v328 = vld [vmem:[#allocation9 + $0x2] sm:$0x1]
        %v329 = vld [vmem:[#allocation9 + $0x3] sm:$0x1]
        %v330 = vld [vmem:[#allocation9 + $0x4] sm:$0x1]
        %v331 = vld [vmem:[#allocation9 + $0x5] sm:$0x1]
        %v332 = vld [vmem:[#allocation9 + $0x6] sm:$0x1]
        %v333 = vld [vmem:[#allocation9 + $0x7] sm:$0x1]
        %v334 = vld [vmem:[#allocation9 + $0x8] sm:$0x1]
        %v335 = vld [vmem:[#allocation9 + $0x9] sm:$0x1]
        %v336 = vld [vmem:[#allocation9 + $0xa] sm:$0x1]
        %v337 = vld [vmem:[#allocation9 + $0xb] sm:$0x1]
        %v338 = vld [vmem:[#allocation9 + $0xc] sm:$0x1]
        %v339 = vlaneseq
        %v340 = vshrl.u32 %v339, 7
        %v341 = vsub.s32 0, %v340
        %v342 = vrot.slane %v328, %v341
        %vm343 = vcmask 261120
        %v345 = vsel %vm343, %v284, 0
        %v348 = vsel %vm343, %v285, 0
        %350 = vmatprep.subr.mxu0 0.0
        %351 = vmatpush1.msra.mxu0 0.0
        %352 = vmatprep.subr.mxu0 0.0
        %353 = vmatpush1.msra.mxu0 0.0
        %354 = vmatprep.subr.mxu0 0.0
        %355 = vmatpush1.msra.mxu0 0.0
        %356 = vmatprep.subr.mxu0 0.0
        %357 = vmatpush1.msra.mxu0 0.0
        %358 = vmatprep.subr.mxu0 0.0
        %359 = vmatpush1.msra.mxu0 0.0
        %360 = vmatprep.subr.mxu0 0.0
        %361 = vmatpush1.msra.mxu0 0.0
        %362 = vmatprep.subr.mxu0 0.0
        %363 = vmatpush1.msra.mxu0 0.0
        %364 = vmatprep.subr.mxu0 0.0
        %365 = vmatpush1.msra.mxu0 0.0
        %366 = vmatprep.subr.mxu0 0.0
        %367 = vmatpush1.msra.mxu0 0.0
        %368 = vmatprep.subr.mxu0 0.0
        %369 = vmatpush1.msra.mxu0 0.0
        %370 = vmatprep.subr.mxu0 0.0
        %371 = vmatpush1.msra.mxu0 0.0
        %372 = vmatprep.subr.mxu0 0.0
        %373 = vmatpush1.msra.mxu0 0.0
        %374 = vmatprep.subr.mxu0 0.0
        %375 = vmatpush1.msra.mxu0 %v297
        %376 = vmatprep.subr.mxu0 0.0
        %377 = vmatpush1.msra.mxu0 %v296
        %378 = vmatprep.subr.mxu0 0.0
        %379 = vmatpush1.msra.mxu0 %v295
        %380 = vmatprep.subr.mxu0 0.0
        %381 = vmatpush1.msra.mxu0 %v294
        %382 = vmatprep.subr.mxu0 0.0
        %383 = vmatpush2.msra.mxu0 0.0
        %384 = vmatprep.subr.mxu0 0.0
        %385 = vmatpush2.msra.mxu0 0.0
        %386 = vmatprep.subr.mxu0 0.0
        %387 = vmatpush2.msra.mxu0 0.0
        %388 = vmatprep.subr.mxu0 0.0
        %389 = vmatpush2.msra.mxu0 0.0
        %390 = vmatprep.subr.mxu0 0.0
        %391 = vmatpush2.msra.mxu0 0.0
        %392 = vmatprep.subr.mxu0 0.0
        %393 = vmatpush2.msra.mxu0 0.0
        %394 = vmatprep.subr.mxu0 0.0
        %395 = vmatpush2.msra.mxu0 0.0
        %396 = vmatprep.subr.mxu0 0.0
        %397 = vmatpush2.msra.mxu0 0.0
        %398 = vmatprep.subr.mxu0 0.0
        %399 = vmatpush2.msra.mxu0 0.0
        %400 = vmatprep.subr.mxu0 0.0
        %401 = vmatpush2.msra.mxu0 0.0
        %402 = vmatprep.subr.mxu0 0.0
        %403 = vmatpush2.msra.mxu0 0.0
        %404 = vmatprep.subr.mxu0 0.0
        %405 = vmatpush2.msra.mxu0 0.0
        %406 = vmatprep.subr.mxu0 0.0
        %407 = vmatpush2.msra.mxu0 0.0
        %408 = vmatprep.subr.mxu0 0.0
        %409 = vmatpush2.msra.mxu0 0.0
        %410 = vmatprep.subr.mxu0 0.0
        %411 = vmatpush2.msra.mxu0 0.0
        %412 = vmatprep.subr.mxu0 0.0
        %413 = vmatpush2.msra.mxu0 0.0
        %414 = vmatprep.mubr.f32.mxu0 0.0
        %415 = vmatmul.mubr.f32.gmra.mxu0 %v345
        %v416 = vpop.f32.mrf.mxu0
        %v417 = vadd.f32 %v342, %v416
        %v418 = vpop.f32.mrf.mxu0
        %419 = vmatprep.mubr.f32.mxu0 0.0
        %420 = vmatmul.mubr.f32.gmra.mxu0 %v348
        %v421 = vpop.f32.mrf.mxu0
        %v422 = vadd.f32 %v342, %v421
        %v423 = vpop.f32.mrf.mxu0
        %424 = vdwg.mxu0
        %v425 = vlaneseq
        %v426 = vshrl.u32 %v425, 7
        %v427 = vsub.s32 0, %v426
        %v428 = vrot.slane %v326, %v427
        %v430 = vsel %vm343, %v283, 0
        %432 = vmatprep.subr.mxu0 0.0
        %433 = vmatpush1.msra.mxu0 0.0
        %434 = vmatprep.subr.mxu0 0.0
        %435 = vmatpush1.msra.mxu0 0.0
        %436 = vmatprep.subr.mxu0 0.0
        %437 = vmatpush1.msra.mxu0 0.0
        %438 = vmatprep.subr.mxu0 0.0
        %439 = vmatpush1.msra.mxu0 0.0
        %440 = vmatprep.subr.mxu0 0.0
        %441 = vmatpush1.msra.mxu0 0.0
        %442 = vmatprep.subr.mxu0 0.0
        %443 = vmatpush1.msra.mxu0 0.0
        %444 = vmatprep.subr.mxu0 0.0
        %445 = vmatpush1.msra.mxu0 0.0
        %446 = vmatprep.subr.mxu0 0.0
        %447 = vmatpush1.msra.mxu0 0.0
        %448 = vmatprep.subr.mxu0 0.0
        %449 = vmatpush1.msra.mxu0 0.0
        %450 = vmatprep.subr.mxu0 0.0
        %451 = vmatpush1.msra.mxu0 0.0
        %452 = vmatprep.subr.mxu0 0.0
        %453 = vmatpush1.msra.mxu0 0.0
        %454 = vmatprep.subr.mxu0 0.0
        %455 = vmatpush1.msra.mxu0 0.0
        %456 = vmatprep.subr.mxu0 0.0
        %457 = vmatpush1.msra.mxu0 %v289
        %458 = vmatprep.subr.mxu0 0.0
        %459 = vmatpush1.msra.mxu0 %v288
        %460 = vmatprep.subr.mxu0 0.0
        %461 = vmatpush1.msra.mxu0 %v287
        %462 = vmatprep.subr.mxu0 0.0
        %463 = vmatpush1.msra.mxu0 %v286
        %464 = vmatprep.subr.mxu0 0.0
        %465 = vmatpush2.msra.mxu0 0.0
        %466 = vmatprep.subr.mxu0 0.0
        %467 = vmatpush2.msra.mxu0 0.0
        %468 = vmatprep.subr.mxu0 0.0
        %469 = vmatpush2.msra.mxu0 0.0
        %470 = vmatprep.subr.mxu0 0.0
        %471 = vmatpush2.msra.mxu0 0.0
        %472 = vmatprep.subr.mxu0 0.0
        %473 = vmatpush2.msra.mxu0 0.0
        %474 = vmatprep.subr.mxu0 0.0
        %475 = vmatpush2.msra.mxu0 0.0
        %476 = vmatprep.subr.mxu0 0.0
        %477 = vmatpush2.msra.mxu0 0.0
        %478 = vmatprep.subr.mxu0 0.0
        %479 = vmatpush2.msra.mxu0 0.0
        %480 = vmatprep.subr.mxu0 0.0
        %481 = vmatpush2.msra.mxu0 0.0
        %482 = vmatprep.subr.mxu0 0.0
        %483 = vmatpush2.msra.mxu0 0.0
        %484 = vmatprep.subr.mxu0 0.0
        %485 = vmatpush2.msra.mxu0 0.0
        %486 = vmatprep.subr.mxu0 0.0
        %487 = vmatpush2.msra.mxu0 0.0
        %488 = vmatprep.subr.mxu0 0.0
        %489 = vmatpush2.msra.mxu0 0.0
        %490 = vmatprep.subr.mxu0 0.0
        %491 = vmatpush2.msra.mxu0 0.0
        %492 = vmatprep.subr.mxu0 0.0
        %493 = vmatpush2.msra.mxu0 0.0
        %494 = vmatprep.subr.mxu0 0.0
        %495 = vmatpush2.msra.mxu0 0.0
        %496 = vmatprep.mubr.f32.mxu0 0.0
        %497 = vmatmul.mubr.f32.gmra.mxu0 %v430
        %v498 = vpop.f32.mrf.mxu0
        %v499 = vadd.f32 %v428, %v498
        %v500 = vpop.f32.mrf.mxu0
        %501 = vdwg.mxu0
        %503 = vrot.lane.b32.xlu0 %v499, 96
        %v504 = vpop.permute.xlu0 %503
        %vm505 = vcmask 64512
        %v506 = vsel %vm505, %v499, 0
        %v508 = vsel %vm505, %v504, 0
        %510 = vmatprep.subr.mxu0 0.0
        %511 = vmatpush1.xpose.msra.mxu0 0.0
        %512 = vmatprep.subr.mxu0 0.0
        %513 = vmatpush1.xpose.msra.mxu0 0.0
        %514 = vmatprep.subr.mxu0 0.0
        %515 = vmatpush1.xpose.msra.mxu0 0.0
        %516 = vmatprep.subr.mxu0 0.0
        %517 = vmatpush1.xpose.msra.mxu0 0.0
        %518 = vmatprep.subr.mxu0 0.0
        %519 = vmatpush1.xpose.msra.mxu0 0.0
        %520 = vmatprep.subr.mxu0 0.0
        %521 = vmatpush1.xpose.msra.mxu0 0.0
        %522 = vmatprep.subr.mxu0 0.0
        %523 = vmatpush1.xpose.msra.mxu0 0.0
        %524 = vmatprep.subr.mxu0 0.0
        %525 = vmatpush1.xpose.msra.mxu0 0.0
        %526 = vmatprep.subr.mxu0 0.0
        %527 = vmatpush1.xpose.msra.mxu0 0.0
        %528 = vmatprep.subr.mxu0 0.0
        %529 = vmatpush1.xpose.msra.mxu0 0.0
        %530 = vmatprep.subr.mxu0 0.0
        %531 = vmatpush1.xpose.msra.mxu0 0.0
        %532 = vmatprep.subr.mxu0 0.0
        %533 = vmatpush1.xpose.msra.mxu0 0.0
        %534 = vmatprep.subr.mxu0 0.0
        %535 = vmatpush1.xpose.msra.mxu0 0.0
        %536 = vmatprep.subr.mxu0 0.0
        %537 = vmatpush1.xpose.msra.mxu0 0.0
        %538 = vmatprep.subr.mxu0 0.0
        %539 = vmatpush1.xpose.msra.mxu0 0.0
        %540 = vmatprep.subr.mxu0 0.0
        %541 = vmatpush1.xpose.msra.mxu0 %v508
        %542 = vmatprep.subr.mxu0 0.0
        %543 = vmatpush2.xpose.msra.mxu0 0.0
        %544 = vmatprep.subr.mxu0 0.0
        %545 = vmatpush2.xpose.msra.mxu0 0.0
        %546 = vmatprep.subr.mxu0 0.0
        %547 = vmatpush2.xpose.msra.mxu0 0.0
        %548 = vmatprep.subr.mxu0 0.0
        %549 = vmatpush2.xpose.msra.mxu0 0.0
        %550 = vmatprep.subr.mxu0 0.0
        %551 = vmatpush2.xpose.msra.mxu0 0.0
        %552 = vmatprep.subr.mxu0 0.0
        %553 = vmatpush2.xpose.msra.mxu0 0.0
        %554 = vmatprep.subr.mxu0 0.0
        %555 = vmatpush2.xpose.msra.mxu0 0.0
        %556 = vmatprep.subr.mxu0 0.0
        %557 = vmatpush2.xpose.msra.mxu0 0.0
        %558 = vmatprep.subr.mxu0 0.0
        %559 = vmatpush2.xpose.msra.mxu0 0.0
        %560 = vmatprep.subr.mxu0 0.0
        %561 = vmatpush2.xpose.msra.mxu0 0.0
        %562 = vmatprep.subr.mxu0 0.0
        %563 = vmatpush2.xpose.msra.mxu0 0.0
        %564 = vmatprep.subr.mxu0 0.0
        %565 = vmatpush2.xpose.msra.mxu0 0.0
        %566 = vmatprep.subr.mxu0 0.0
        %567 = vmatpush2.xpose.msra.mxu0 0.0
        %568 = vmatprep.subr.mxu0 0.0
        %569 = vmatpush2.xpose.msra.mxu0 0.0
        %570 = vmatprep.subr.mxu0 0.0
        %571 = vmatpush2.xpose.msra.mxu0 0.0
        %572 = vmatprep.subr.mxu0 0.0
        %573 = vmatpush2.xpose.msra.mxu0 0.0
        %574 = vmatprep.mubr.f32.mxu0 0.0
        %575 = vmatmul.mubr.f32.gmra.mxu0 %v506
        %v576 = vpop.f32.mrf.mxu0
        %v577 = vadd.f32 0.0, %v576
        %v578 = vpop.f32.mrf.mxu0
        %579 = vdwg.mxu0
        %v580 = vmul.f32 %v577, 0.35355338
        %v581 = vsel %vm505, %v580, -inf
        %582 = vmax.xlane.f32.xlu0 %v581
        %v583 = vpop.xlane.xlu0 %582
        %v584 = vsub.f32 %v580, %v583
        %v585 = vmul.f32 %v584, 1.442695
        %v586 = vpow.pop %v585
        %587 = vrot.lane.b32.xlu0 %v499, 64
        %v588 = vpop.permute.xlu0 %587
        %v591 = vsel %vm505, %v586, 0
        %593 = vmatprep.subr.mxu0 0.0
        %594 = vmatpush1.msra.mxu0 0.0
        %595 = vmatprep.subr.mxu0 0.0
        %596 = vmatpush1.msra.mxu0 0.0
        %597 = vmatprep.subr.mxu0 0.0
        %598 = vmatpush1.msra.mxu0 0.0
        %599 = vmatprep.subr.mxu0 0.0
        %600 = vmatpush1.msra.mxu0 0.0
        %601 = vmatprep.subr.mxu0 0.0
        %602 = vmatpush1.msra.mxu0 0.0
        %603 = vmatprep.subr.mxu0 0.0
        %604 = vmatpush1.msra.mxu0 0.0
        %605 = vmatprep.subr.mxu0 0.0
        %606 = vmatpush1.msra.mxu0 0.0
        %607 = vmatprep.subr.mxu0 0.0
        %608 = vmatpush1.msra.mxu0 0.0
        %609 = vmatprep.subr.mxu0 0.0
        %610 = vmatpush1.msra.mxu0 0.0
        %611 = vmatprep.subr.mxu0 0.0
        %612 = vmatpush1.msra.mxu0 0.0
        %613 = vmatprep.subr.mxu0 0.0
        %614 = vmatpush1.msra.mxu0 0.0
        %615 = vmatprep.subr.mxu0 0.0
        %616 = vmatpush1.msra.mxu0 0.0
        %617 = vmatprep.subr.mxu0 0.0
        %618 = vmatpush1.msra.mxu0 0.0
        %619 = vmatprep.subr.mxu0 0.0
        %620 = vmatpush1.msra.mxu0 0.0
        %621 = vmatprep.subr.mxu0 0.0
        %622 = vmatpush1.msra.mxu0 0.0
        %623 = vmatprep.subr.mxu0 0.0
        %624 = vmatpush1.msra.mxu0 %v588
        %625 = vmatprep.subr.mxu0 0.0
        %626 = vmatpush2.msra.mxu0 0.0
        %627 = vmatprep.subr.mxu0 0.0
        %628 = vmatpush2.msra.mxu0 0.0
        %629 = vmatprep.subr.mxu0 0.0
        %630 = vmatpush2.msra.mxu0 0.0
        %631 = vmatprep.subr.mxu0 0.0
        %632 = vmatpush2.msra.mxu0 0.0
        %633 = vmatprep.subr.mxu0 0.0
        %634 = vmatpush2.msra.mxu0 0.0
        %635 = vmatprep.subr.mxu0 0.0
        %636 = vmatpush2.msra.mxu0 0.0
        %637 = vmatprep.subr.mxu0 0.0
        %638 = vmatpush2.msra.mxu0 0.0
        %639 = vmatprep.subr.mxu0 0.0
        %640 = vmatpush2.msra.mxu0 0.0
        %641 = vmatprep.subr.mxu0 0.0
        %642 = vmatpush2.msra.mxu0 0.0
        %643 = vmatprep.subr.mxu0 0.0
        %644 = vmatpush2.msra.mxu0 0.0
        %645 = vmatprep.subr.mxu0 0.0
        %646 = vmatpush2.msra.mxu0 0.0
        %647 = vmatprep.subr.mxu0 0.0
        %648 = vmatpush2.msra.mxu0 0.0
        %649 = vmatprep.subr.mxu0 0.0
        %650 = vmatpush2.msra.mxu0 0.0
        %651 = vmatprep.subr.mxu0 0.0
        %652 = vmatpush2.msra.mxu0 0.0
        %653 = vmatprep.subr.mxu0 0.0
        %654 = vmatpush2.msra.mxu0 0.0
        %655 = vmatprep.subr.mxu0 0.0
        %656 = vmatpush2.msra.mxu0 0.0
        %657 = vmatprep.mubr.f32.mxu0 0.0
        %658 = vmatmul.mubr.f32.gmra.mxu0 %v591
        %v659 = vpop.f32.mrf.mxu0
        %v660 = vadd.f32 0.0, %v659
        %v661 = vpop.f32.mrf.mxu0
        %662 = vdwg.mxu0
        %v663 = vsel %vm505, %v586, 0.0
        %664 = vadd.xlane.f32.xlu0 %v663
        %v665 = vpop.xlane.xlu0 %664
        %v666 = vrcp.pop %v665
        %v667 = vmul.f32 1.0, %v666
        %v668 = vmul.f32 %v660, %v667
        %669 = vst.msk [vmem:[#allocation2] sm:$0xff] %vm505, %v668
        %670 = vrot.lane.b32.xlu0 %v499, 120
        %v671 = vpop.permute.xlu0 %670
        %672 = vrot.lane.b32.xlu0 %v499, 88
        %v673 = vpop.permute.xlu0 %672
        %v674 = vsel %vm505, %v671, 0
        %v676 = vsel %vm505, %v673, 0
        %678 = vmatprep.subr.mxu0 0.0
        %679 = vmatpush1.xpose.msra.mxu0 0.0
        %680 = vmatprep.subr.mxu0 0.0
        %681 = vmatpush1.xpose.msra.mxu0 0.0
        %682 = vmatprep.subr.mxu0 0.0
        %683 = vmatpush1.xpose.msra.mxu0 0.0
        %684 = vmatprep.subr.mxu0 0.0
        %685 = vmatpush1.xpose.msra.mxu0 0.0
        %686 = vmatprep.subr.mxu0 0.0
        %687 = vmatpush1.xpose.msra.mxu0 0.0
        %688 = vmatprep.subr.mxu0 0.0
        %689 = vmatpush1.xpose.msra.mxu0 0.0
        %690 = vmatprep.subr.mxu0 0.0
        %691 = vmatpush1.xpose.msra.mxu0 0.0
        %692 = vmatprep.subr.mxu0 0.0
        %693 = vmatpush1.xpose.msra.mxu0 0.0
        %694 = vmatprep.subr.mxu0 0.0
        %695 = vmatpush1.xpose.msra.mxu0 0.0
        %696 = vmatprep.subr.mxu0 0.0
        %697 = vmatpush1.xpose.msra.mxu0 0.0
        %698 = vmatprep.subr.mxu0 0.0
        %699 = vmatpush1.xpose.msra.mxu0 0.0
        %700 = vmatprep.subr.mxu0 0.0
        %701 = vmatpush1.xpose.msra.mxu0 0.0
        %702 = vmatprep.subr.mxu0 0.0
        %703 = vmatpush1.xpose.msra.mxu0 0.0
        %704 = vmatprep.subr.mxu0 0.0
        %705 = vmatpush1.xpose.msra.mxu0 0.0
        %706 = vmatprep.subr.mxu0 0.0
        %707 = vmatpush1.xpose.msra.mxu0 0.0
        %708 = vmatprep.subr.mxu0 0.0
        %709 = vmatpush1.xpose.msra.mxu0 %v676
        %710 = vmatprep.subr.mxu0 0.0
        %711 = vmatpush2.xpose.msra.mxu0 0.0
        %712 = vmatprep.subr.mxu0 0.0
        %713 = vmatpush2.xpose.msra.mxu0 0.0
        %714 = vmatprep.subr.mxu0 0.0
        %715 = vmatpush2.xpose.msra.mxu0 0.0
        %716 = vmatprep.subr.mxu0 0.0
        %717 = vmatpush2.xpose.msra.mxu0 0.0
        %718 = vmatprep.subr.mxu0 0.0
        %719 = vmatpush2.xpose.msra.mxu0 0.0
        %720 = vmatprep.subr.mxu0 0.0
        %721 = vmatpush2.xpose.msra.mxu0 0.0
        %722 = vmatprep.subr.mxu0 0.0
        %723 = vmatpush2.xpose.msra.mxu0 0.0
        %724 = vmatprep.subr.mxu0 0.0
        %725 = vmatpush2.xpose.msra.mxu0 0.0
        %726 = vmatprep.subr.mxu0 0.0
        %727 = vmatpush2.xpose.msra.mxu0 0.0
        %728 = vmatprep.subr.mxu0 0.0
        %729 = vmatpush2.xpose.msra.mxu0 0.0
        %730 = vmatprep.subr.mxu0 0.0
        %731 = vmatpush2.xpose.msra.mxu0 0.0
        %732 = vmatprep.subr.mxu0 0.0
        %733 = vmatpush2.xpose.msra.mxu0 0.0
        %734 = vmatprep.subr.mxu0 0.0
        %735 = vmatpush2.xpose.msra.mxu0 0.0
        %736 = vmatprep.subr.mxu0 0.0
        %737 = vmatpush2.xpose.msra.mxu0 0.0
        %738 = vmatprep.subr.mxu0 0.0
        %739 = vmatpush2.xpose.msra.mxu0 0.0
        %740 = vmatprep.subr.mxu0 0.0
        %741 = vmatpush2.xpose.msra.mxu0 0.0
        %742 = vmatprep.mubr.f32.mxu0 0.0
        %743 = vmatmul.mubr.f32.gmra.mxu0 %v674
        %v744 = vpop.f32.mrf.mxu0
        %v745 = vadd.f32 0.0, %v744
        %v746 = vpop.f32.mrf.mxu0
        %747 = vdwg.mxu0
        %v748 = vmul.f32 %v745, 0.35355338
        %v749 = vsel %vm505, %v748, -inf
        %750 = vmax.xlane.f32.xlu0 %v749
        %v751 = vpop.xlane.xlu0 %750
        %v752 = vsub.f32 %v748, %v751
        %v753 = vmul.f32 %v752, 1.442695
        %v754 = vpow.pop %v753
        %755 = vrot.lane.b32.xlu0 %v499, 56
        %v756 = vpop.permute.xlu0 %755
        %v759 = vsel %vm505, %v754, 0
        %761 = vmatprep.subr.mxu0 0.0
        %762 = vmatpush1.msra.mxu0 0.0
        %763 = vmatprep.subr.mxu0 0.0
        %764 = vmatpush1.msra.mxu0 0.0
        %765 = vmatprep.subr.mxu0 0.0
        %766 = vmatpush1.msra.mxu0 0.0
        %767 = vmatprep.subr.mxu0 0.0
        %768 = vmatpush1.msra.mxu0 0.0
        %769 = vmatprep.subr.mxu0 0.0
        %770 = vmatpush1.msra.mxu0 0.0
        %771 = vmatprep.subr.mxu0 0.0
        %772 = vmatpush1.msra.mxu0 0.0
        %773 = vmatprep.subr.mxu0 0.0
        %774 = vmatpush1.msra.mxu0 0.0
        %775 = vmatprep.subr.mxu0 0.0
        %776 = vmatpush1.msra.mxu0 0.0
        %777 = vmatprep.subr.mxu0 0.0
        %778 = vmatpush1.msra.mxu0 0.0
        %779 = vmatprep.subr.mxu0 0.0
        %780 = vmatpush1.msra.mxu0 0.0
        %781 = vmatprep.subr.mxu0 0.0
        %782 = vmatpush1.msra.mxu0 0.0
        %783 = vmatprep.subr.mxu0 0.0
        %784 = vmatpush1.msra.mxu0 0.0
        %785 = vmatprep.subr.mxu0 0.0
        %786 = vmatpush1.msra.mxu0 0.0
        %787 = vmatprep.subr.mxu0 0.0
        %788 = vmatpush1.msra.mxu0 0.0
        %789 = vmatprep.subr.mxu0 0.0
        %790 = vmatpush1.msra.mxu0 0.0
        %791 = vmatprep.subr.mxu0 0.0
        %792 = vmatpush1.msra.mxu0 %v756
        %793 = vmatprep.subr.mxu0 0.0
        %794 = vmatpush2.msra.mxu0 0.0
        %795 = vmatprep.subr.mxu0 0.0
        %796 = vmatpush2.msra.mxu0 0.0
        %797 = vmatprep.subr.mxu0 0.0
        %798 = vmatpush2.msra.mxu0 0.0
        %799 = vmatprep.subr.mxu0 0.0
        %800 = vmatpush2.msra.mxu0 0.0
        %801 = vmatprep.subr.mxu0 0.0
        %802 = vmatpush2.msra.mxu0 0.0
        %803 = vmatprep.subr.mxu0 0.0
        %804 = vmatpush2.msra.mxu0 0.0
        %805 = vmatprep.subr.mxu0 0.0
        %806 = vmatpush2.msra.mxu0 0.0
        %807 = vmatprep.subr.mxu0 0.0
        %808 = vmatpush2.msra.mxu0 0.0
        %809 = vmatprep.subr.mxu0 0.0
        %810 = vmatpush2.msra.mxu0 0.0
        %811 = vmatprep.subr.mxu0 0.0
        %812 = vmatpush2.msra.mxu0 0.0
        %813 = vmatprep.subr.mxu0 0.0
        %814 = vmatpush2.msra.mxu0 0.0
        %815 = vmatprep.subr.mxu0 0.0
        %816 = vmatpush2.msra.mxu0 0.0
        %817 = vmatprep.subr.mxu0 0.0
        %818 = vmatpush2.msra.mxu0 0.0
        %819 = vmatprep.subr.mxu0 0.0
        %820 = vmatpush2.msra.mxu0 0.0
        %821 = vmatprep.subr.mxu0 0.0
        %822 = vmatpush2.msra.mxu0 0.0
        %823 = vmatprep.subr.mxu0 0.0
        %824 = vmatpush2.msra.mxu0 0.0
        %825 = vmatprep.mubr.f32.mxu0 0.0
        %826 = vmatmul.mubr.f32.gmra.mxu0 %v759
        %v827 = vpop.f32.mrf.mxu0
        %v828 = vadd.f32 0.0, %v827
        %v829 = vpop.f32.mrf.mxu0
        %830 = vdwg.mxu0
        %v831 = vsel %vm505, %v754, 0.0
        %832 = vadd.xlane.f32.xlu0 %v831
        %v833 = vpop.xlane.xlu0 %832
        %v834 = vrcp.pop %v833
        %v835 = vmul.f32 1.0, %v834
        %v836 = vmul.f32 %v828, %v835
        %838 = vrot.lane.b32.xlu0 %v836, 8
        %v839 = vpop.permute.xlu0 %838
        %vm841 = vcmask 130112
        %842 = vst.msk [vmem:[#allocation2] sm:$0xff] %vm841, %v839
        %843 = vrot.lane.b32.xlu0 %v499, 112
        %v844 = vpop.permute.xlu0 %843
        %845 = vrot.lane.b32.xlu0 %v499, 80
        %v846 = vpop.permute.xlu0 %845
        %v847 = vsel %vm505, %v844, 0
        %v849 = vsel %vm505, %v846, 0
        %851 = vmatprep.subr.mxu0 0.0
        %852 = vmatpush1.xpose.msra.mxu0 0.0
        %853 = vmatprep.subr.mxu0 0.0
        %854 = vmatpush1.xpose.msra.mxu0 0.0
        %855 = vmatprep.subr.mxu0 0.0
        %856 = vmatpush1.xpose.msra.mxu0 0.0
        %857 = vmatprep.subr.mxu0 0.0
        %858 = vmatpush1.xpose.msra.mxu0 0.0
        %859 = vmatprep.subr.mxu0 0.0
        %860 = vmatpush1.xpose.msra.mxu0 0.0
        %861 = vmatprep.subr.mxu0 0.0
        %862 = vmatpush1.xpose.msra.mxu0 0.0
        %863 = vmatprep.subr.mxu0 0.0
        %864 = vmatpush1.xpose.msra.mxu0 0.0
        %865 = vmatprep.subr.mxu0 0.0
        %866 = vmatpush1.xpose.msra.mxu0 0.0
        %867 = vmatprep.subr.mxu0 0.0
        %868 = vmatpush1.xpose.msra.mxu0 0.0
        %869 = vmatprep.subr.mxu0 0.0
        %870 = vmatpush1.xpose.msra.mxu0 0.0
        %871 = vmatprep.subr.mxu0 0.0
        %872 = vmatpush1.xpose.msra.mxu0 0.0
        %873 = vmatprep.subr.mxu0 0.0
        %874 = vmatpush1.xpose.msra.mxu0 0.0
        %875 = vmatprep.subr.mxu0 0.0
        %876 = vmatpush1.xpose.msra.mxu0 0.0
        %877 = vmatprep.subr.mxu0 0.0
        %878 = vmatpush1.xpose.msra.mxu0 0.0
        %879 = vmatprep.subr.mxu0 0.0
        %880 = vmatpush1.xpose.msra.mxu0 0.0
        %881 = vmatprep.subr.mxu0 0.0
        %882 = vmatpush1.xpose.msra.mxu0 %v849
        %883 = vmatprep.subr.mxu0 0.0
        %884 = vmatpush2.xpose.msra.mxu0 0.0
        %885 = vmatprep.subr.mxu0 0.0
        %886 = vmatpush2.xpose.msra.mxu0 0.0
        %887 = vmatprep.subr.mxu0 0.0
        %888 = vmatpush2.xpose.msra.mxu0 0.0
        %889 = vmatprep.subr.mxu0 0.0
        %890 = vmatpush2.xpose.msra.mxu0 0.0
        %891 = vmatprep.subr.mxu0 0.0
        %892 = vmatpush2.xpose.msra.mxu0 0.0
        %893 = vmatprep.subr.mxu0 0.0
        %894 = vmatpush2.xpose.msra.mxu0 0.0
        %895 = vmatprep.subr.mxu0 0.0
        %896 = vmatpush2.xpose.msra.mxu0 0.0
        %897 = vmatprep.subr.mxu0 0.0
        %898 = vmatpush2.xpose.msra.mxu0 0.0
        %899 = vmatprep.subr.mxu0 0.0
        %900 = vmatpush2.xpose.msra.mxu0 0.0
        %901 = vmatprep.subr.mxu0 0.0
        %902 = vmatpush2.xpose.msra.mxu0 0.0
        %903 = vmatprep.subr.mxu0 0.0
        %904 = vmatpush2.xpose.msra.mxu0 0.0
        %905 = vmatprep.subr.mxu0 0.0
        %906 = vmatpush2.xpose.msra.mxu0 0.0
        %907 = vmatprep.subr.mxu0 0.0
        %908 = vmatpush2.xpose.msra.mxu0 0.0
        %909 = vmatprep.subr.mxu0 0.0
        %910 = vmatpush2.xpose.msra.mxu0 0.0
        %911 = vmatprep.subr.mxu0 0.0
        %912 = vmatpush2.xpose.msra.mxu0 0.0
        %913 = vmatprep.subr.mxu0 0.0
        %914 = vmatpush2.xpose.msra.mxu0 0.0
        %915 = vmatprep.mubr.f32.mxu0 0.0
        %916 = vmatmul.mubr.f32.gmra.mxu0 %v847
        %v917 = vpop.f32.mrf.mxu0
        %v918 = vadd.f32 0.0, %v917
        %v919 = vpop.f32.mrf.mxu0
        %920 = vdwg.mxu0
        %v921 = vmul.f32 %v918, 0.35355338
        %v922 = vsel %vm505, %v921, -inf
        %923 = vmax.xlane.f32.xlu0 %v922
        %v924 = vpop.xlane.xlu0 %923
        %v925 = vsub.f32 %v921, %v924
        %v926 = vmul.f32 %v925, 1.442695
        %v927 = vpow.pop %v926
        %928 = vrot.lane.b32.xlu0 %v499, 48
        %v929 = vpop.permute.xlu0 %928
        %v932 = vsel %vm505, %v927, 0
        %934 = vmatprep.subr.mxu0 0.0
        %935 = vmatpush1.msra.mxu0 0.0
        %936 = vmatprep.subr.mxu0 0.0
        %937 = vmatpush1.msra.mxu0 0.0
        %938 = vmatprep.subr.mxu0 0.0
        %939 = vmatpush1.msra.mxu0 0.0
        %940 = vmatprep.subr.mxu0 0.0
        %941 = vmatpush1.msra.mxu0 0.0
        %942 = vmatprep.subr.mxu0 0.0
        %943 = vmatpush1.msra.mxu0 0.0
        %944 = vmatprep.subr.mxu0 0.0
        %945 = vmatpush1.msra.mxu0 0.0
        %946 = vmatprep.subr.mxu0 0.0
        %947 = vmatpush1.msra.mxu0 0.0
        %948 = vmatprep.subr.mxu0 0.0
        %949 = vmatpush1.msra.mxu0 0.0
        %950 = vmatprep.subr.mxu0 0.0
        %951 = vmatpush1.msra.mxu0 0.0
        %952 = vmatprep.subr.mxu0 0.0
        %953 = vmatpush1.msra.mxu0 0.0
        %954 = vmatprep.subr.mxu0 0.0
        %955 = vmatpush1.msra.mxu0 0.0
        %956 = vmatprep.subr.mxu0 0.0
        %957 = vmatpush1.msra.mxu0 0.0
        %958 = vmatprep.subr.mxu0 0.0
        %959 = vmatpush1.msra.mxu0 0.0
        %960 = vmatprep.subr.mxu0 0.0
        %961 = vmatpush1.msra.mxu0 0.0
        %962 = vmatprep.subr.mxu0 0.0
        %963 = vmatpush1.msra.mxu0 0.0
        %964 = vmatprep.subr.mxu0 0.0
        %965 = vmatpush1.msra.mxu0 %v929
        %966 = vmatprep.subr.mxu0 0.0
        %967 = vmatpush2.msra.mxu0 0.0
        %968 = vmatprep.subr.mxu0 0.0
        %969 = vmatpush2.msra.mxu0 0.0
        %970 = vmatprep.subr.mxu0 0.0
        %971 = vmatpush2.msra.mxu0 0.0
        %972 = vmatprep.subr.mxu0 0.0
        %973 = vmatpush2.msra.mxu0 0.0
        %974 = vmatprep.subr.mxu0 0.0
        %975 = vmatpush2.msra.mxu0 0.0
        %976 = vmatprep.subr.mxu0 0.0
        %977 = vmatpush2.msra.mxu0 0.0
        %978 = vmatprep.subr.mxu0 0.0
        %979 = vmatpush2.msra.mxu0 0.0
        %980 = vmatprep.subr.mxu0 0.0
        %981 = vmatpush2.msra.mxu0 0.0
        %982 = vmatprep.subr.mxu0 0.0
        %983 = vmatpush2.msra.mxu0 0.0
        %984 = vmatprep.subr.mxu0 0.0
        %985 = vmatpush2.msra.mxu0 0.0
        %986 = vmatprep.subr.mxu0 0.0
        %987 = vmatpush2.msra.mxu0 0.0
        %988 = vmatprep.subr.mxu0 0.0
        %989 = vmatpush2.msra.mxu0 0.0
        %990 = vmatprep.subr.mxu0 0.0
        %991 = vmatpush2.msra.mxu0 0.0
        %992 = vmatprep.subr.mxu0 0.0
        %993 = vmatpush2.msra.mxu0 0.0
        %994 = vmatprep.subr.mxu0 0.0
        %995 = vmatpush2.msra.mxu0 0.0
        %996 = vmatprep.subr.mxu0 0.0
        %997 = vmatpush2.msra.mxu0 0.0
        %998 = vmatprep.mubr.f32.mxu0 0.0
        %999 = vmatmul.mubr.f32.gmra.mxu0 %v932
        %v1000 = vpop.f32.mrf.mxu0
        %v1001 = vadd.f32 0.0, %v1000
        %v1002 = vpop.f32.mrf.mxu0
        %1003 = vdwg.mxu0
        %v1004 = vsel %vm505, %v927, 0.0
        %1005 = vadd.xlane.f32.xlu0 %v1004
        %v1006 = vpop.xlane.xlu0 %1005
        %v1007 = vrcp.pop %v1006
        %v1008 = vmul.f32 1.0, %v1007
        %v1009 = vmul.f32 %v1001, %v1008
        %1011 = vrot.lane.b32.xlu0 %v1009, 16
        %v1012 = vpop.permute.xlu0 %1011
        %vm1014 = vcmask 195712
        %1015 = vst.msk [vmem:[#allocation2] sm:$0xff] %vm1014, %v1012
        %1016 = vrot.lane.b32.xlu0 %v499, 104
        %v1017 = vpop.permute.xlu0 %1016
        %1018 = vrot.lane.b32.xlu0 %v499, 72
        %v1019 = vpop.permute.xlu0 %1018
        %v1020 = vsel %vm505, %v1017, 0
        %v1022 = vsel %vm505, %v1019, 0
        %1024 = vmatprep.subr.mxu0 0.0
        %1025 = vmatpush1.xpose.msra.mxu0 0.0
        %1026 = vmatprep.subr.mxu0 0.0
        %1027 = vmatpush1.xpose.msra.mxu0 0.0
        %1028 = vmatprep.subr.mxu0 0.0
        %1029 = vmatpush1.xpose.msra.mxu0 0.0
        %1030 = vmatprep.subr.mxu0 0.0
        %1031 = vmatpush1.xpose.msra.mxu0 0.0
        %1032 = vmatprep.subr.mxu0 0.0
        %1033 = vmatpush1.xpose.msra.mxu0 0.0
        %1034 = vmatprep.subr.mxu0 0.0
        %1035 = vmatpush1.xpose.msra.mxu0 0.0
        %1036 = vmatprep.subr.mxu0 0.0
        %1037 = vmatpush1.xpose.msra.mxu0 0.0
        %1038 = vmatprep.subr.mxu0 0.0
        %1039 = vmatpush1.xpose.msra.mxu0 0.0
        %1040 = vmatprep.subr.mxu0 0.0
        %1041 = vmatpush1.xpose.msra.mxu0 0.0
        %1042 = vmatprep.subr.mxu0 0.0
        %1043 = vmatpush1.xpose.msra.mxu0 0.0
        %1044 = vmatprep.subr.mxu0 0.0
        %1045 = vmatpush1.xpose.msra.mxu0 0.0
        %1046 = vmatprep.subr.mxu0 0.0
        %1047 = vmatpush1.xpose.msra.mxu0 0.0
        %1048 = vmatprep.subr.mxu0 0.0
        %1049 = vmatpush1.xpose.msra.mxu0 0.0
        %1050 = vmatprep.subr.mxu0 0.0
        %1051 = vmatpush1.xpose.msra.mxu0 0.0
        %1052 = vmatprep.subr.mxu0 0.0
        %1053 = vmatpush1.xpose.msra.mxu0 0.0
        %1054 = vmatprep.subr.mxu0 0.0
        %1055 = vmatpush1.xpose.msra.mxu0 %v1022
        %1056 = vmatprep.subr.mxu0 0.0
        %1057 = vmatpush2.xpose.msra.mxu0 0.0
        %1058 = vmatprep.subr.mxu0 0.0
        %1059 = vmatpush2.xpose.msra.mxu0 0.0
        %1060 = vmatprep.subr.mxu0 0.0
        %1061 = vmatpush2.xpose.msra.mxu0 0.0
        %1062 = vmatprep.subr.mxu0 0.0
        %1063 = vmatpush2.xpose.msra.mxu0 0.0
        %1064 = vmatprep.subr.mxu0 0.0
        %1065 = vmatpush2.xpose.msra.mxu0 0.0
        %1066 = vmatprep.subr.mxu0 0.0
        %1067 = vmatpush2.xpose.msra.mxu0 0.0
        %1068 = vmatprep.subr.mxu0 0.0
        %1069 = vmatpush2.xpose.msra.mxu0 0.0
        %1070 = vmatprep.subr.mxu0 0.0
        %1071 = vmatpush2.xpose.msra.mxu0 0.0
        %1072 = vmatprep.subr.mxu0 0.0
        %1073 = vmatpush2.xpose.msra.mxu0 0.0
        %1074 = vmatprep.subr.mxu0 0.0
        %1075 = vmatpush2.xpose.msra.mxu0 0.0
        %1076 = vmatprep.subr.mxu0 0.0
        %1077 = vmatpush2.xpose.msra.mxu0 0.0
        %1078 = vmatprep.subr.mxu0 0.0
        %1079 = vmatpush2.xpose.msra.mxu0 0.0
        %1080 = vmatprep.subr.mxu0 0.0
        %1081 = vmatpush2.xpose.msra.mxu0 0.0
        %1082 = vmatprep.subr.mxu0 0.0
        %1083 = vmatpush2.xpose.msra.mxu0 0.0
        %1084 = vmatprep.subr.mxu0 0.0
        %1085 = vmatpush2.xpose.msra.mxu0 0.0
        %1086 = vmatprep.subr.mxu0 0.0
        %1087 = vmatpush2.xpose.msra.mxu0 0.0
        %1088 = vmatprep.mubr.f32.mxu0 0.0
        %1089 = vmatmul.mubr.f32.gmra.mxu0 %v1020
        %v1090 = vpop.f32.mrf.mxu0
        %v1091 = vadd.f32 0.0, %v1090
        %v1092 = vpop.f32.mrf.mxu0
        %1093 = vdwg.mxu0
        %v1094 = vmul.f32 %v1091, 0.35355338
        %v1095 = vsel %vm505, %v1094, -inf
        %1096 = vmax.xlane.f32.xlu0 %v1095
        %v1097 = vpop.xlane.xlu0 %1096
        %v1098 = vsub.f32 %v1094, %v1097
        %v1099 = vmul.f32 %v1098, 1.442695
        %v1100 = vpow.pop %v1099
        %1101 = vrot.lane.b32.xlu0 %v499, 40
        %v1102 = vpop.permute.xlu0 %1101
        %v1105 = vsel %vm505, %v1100, 0
        %1107 = vmatprep.subr.mxu0 0.0
        %1108 = vmatpush1.msra.mxu0 0.0
        %1109 = vmatprep.subr.mxu0 0.0
        %1110 = vmatpush1.msra.mxu0 0.0
        %1111 = vmatprep.subr.mxu0 0.0
        %1112 = vmatpush1.msra.mxu0 0.0
        %1113 = vmatprep.subr.mxu0 0.0
        %1114 = vmatpush1.msra.mxu0 0.0
        %1115 = vmatprep.subr.mxu0 0.0
        %1116 = vmatpush1.msra.mxu0 0.0
        %1117 = vmatprep.subr.mxu0 0.0
        %1118 = vmatpush1.msra.mxu0 0.0
        %1119 = vmatprep.subr.mxu0 0.0
        %1120 = vmatpush1.msra.mxu0 0.0
        %1121 = vmatprep.subr.mxu0 0.0
        %1122 = vmatpush1.msra.mxu0 0.0
        %1123 = vmatprep.subr.mxu0 0.0
        %1124 = vmatpush1.msra.mxu0 0.0
        %1125 = vmatprep.subr.mxu0 0.0
        %1126 = vmatpush1.msra.mxu0 0.0
        %1127 = vmatprep.subr.mxu0 0.0
        %1128 = vmatpush1.msra.mxu0 0.0
        %1129 = vmatprep.subr.mxu0 0.0
        %1130 = vmatpush1.msra.mxu0 0.0
        %1131 = vmatprep.subr.mxu0 0.0
        %1132 = vmatpush1.msra.mxu0 0.0
        %1133 = vmatprep.subr.mxu0 0.0
        %1134 = vmatpush1.msra.mxu0 0.0
        %1135 = vmatprep.subr.mxu0 0.0
        %1136 = vmatpush1.msra.mxu0 0.0
        %1137 = vmatprep.subr.mxu0 0.0
        %1138 = vmatpush1.msra.mxu0 %v1102
        %1139 = vmatprep.subr.mxu0 0.0
        %1140 = vmatpush2.msra.mxu0 0.0
        %1141 = vmatprep.subr.mxu0 0.0
        %1142 = vmatpush2.msra.mxu0 0.0
        %1143 = vmatprep.subr.mxu0 0.0
        %1144 = vmatpush2.msra.mxu0 0.0
        %1145 = vmatprep.subr.mxu0 0.0
        %1146 = vmatpush2.msra.mxu0 0.0
        %1147 = vmatprep.subr.mxu0 0.0
        %1148 = vmatpush2.msra.mxu0 0.0
        %1149 = vmatprep.subr.mxu0 0.0
        %1150 = vmatpush2.msra.mxu0 0.0
        %1151 = vmatprep.subr.mxu0 0.0
        %1152 = vmatpush2.msra.mxu0 0.0
        %1153 = vmatprep.subr.mxu0 0.0
        %1154 = vmatpush2.msra.mxu0 0.0
        %1155 = vmatprep.subr.mxu0 0.0
        %1156 = vmatpush2.msra.mxu0 0.0
        %1157 = vmatprep.subr.mxu0 0.0
        %1158 = vmatpush2.msra.mxu0 0.0
        %1159 = vmatprep.subr.mxu0 0.0
        %1160 = vmatpush2.msra.mxu0 0.0
        %1161 = vmatprep.subr.mxu0 0.0
        %1162 = vmatpush2.msra.mxu0 0.0
        %1163 = vmatprep.subr.mxu0 0.0
        %1164 = vmatpush2.msra.mxu0 0.0
        %1165 = vmatprep.subr.mxu0 0.0
        %1166 = vmatpush2.msra.mxu0 0.0
        %1167 = vmatprep.subr.mxu0 0.0
        %1168 = vmatpush2.msra.mxu0 0.0
        %1169 = vmatprep.subr.mxu0 0.0
        %1170 = vmatpush2.msra.mxu0 0.0
        %1171 = vmatprep.mubr.f32.mxu0 0.0
        %1172 = vmatmul.mubr.f32.gmra.mxu0 %v1105
        %v1173 = vpop.f32.mrf.mxu0
        %v1174 = vadd.f32 0.0, %v1173
        %v1175 = vpop.f32.mrf.mxu0
        %1176 = vdwg.mxu0
        %v1177 = vsel %vm505, %v1100, 0.0
        %1178 = vadd.xlane.f32.xlu0 %v1177
        %v1179 = vpop.xlane.xlu0 %1178
        %v1180 = vrcp.pop %v1179
        %v1181 = vmul.f32 1.0, %v1180
        %v1182 = vmul.f32 %v1174, %v1181
        %1184 = vrot.lane.b32.xlu0 %v1182, 24
        %v1185 = vpop.permute.xlu0 %1184
        %vm1187 = vcmask 261312
        %1188 = vst.msk [vmem:[#allocation2] sm:$0xff] %vm1187, %v1185
        %v1189 = vld [vmem:[#allocation2] sm:$0xff]
        %v1190 = vlaneseq
        %v1191 = vshrl.u32 %v1190, 7
        %v1192 = vsub.s32 0, %v1191
        %v1193 = vrot.slane %v329, %v1192
        %v1195 = vsel %vm343, %v1189, 0
        %1197 = vmatprep.subr.mxu0 0.0
        %1198 = vmatpush1.msra.mxu0 0.0
        %1199 = vmatprep.subr.mxu0 0.0
        %1200 = vmatpush1.msra.mxu0 0.0
        %1201 = vmatprep.subr.mxu0 0.0
        %1202 = vmatpush1.msra.mxu0 0.0
        %1203 = vmatprep.subr.mxu0 0.0
        %1204 = vmatpush1.msra.mxu0 0.0
        %1205 = vmatprep.subr.mxu0 0.0
        %1206 = vmatpush1.msra.mxu0 0.0
        %1207 = vmatprep.subr.mxu0 0.0
        %1208 = vmatpush1.msra.mxu0 0.0
        %1209 = vmatprep.subr.mxu0 0.0
        %1210 = vmatpush1.msra.mxu0 0.0
        %1211 = vmatprep.subr.mxu0 0.0
        %1212 = vmatpush1.msra.mxu0 0.0
        %1213 = vmatprep.subr.mxu0 0.0
        %1214 = vmatpush1.msra.mxu0 0.0
        %1215 = vmatprep.subr.mxu0 0.0
        %1216 = vmatpush1.msra.mxu0 0.0
        %1217 = vmatprep.subr.mxu0 0.0
        %1218 = vmatpush1.msra.mxu0 0.0
        %1219 = vmatprep.subr.mxu0 0.0
        %1220 = vmatpush1.msra.mxu0 0.0
        %1221 = vmatprep.subr.mxu0 0.0
        %1222 = vmatpush1.msra.mxu0 %v301
        %1223 = vmatprep.subr.mxu0 0.0
        %1224 = vmatpush1.msra.mxu0 %v300
        %1225 = vmatprep.subr.mxu0 0.0
        %1226 = vmatpush1.msra.mxu0 %v299
        %1227 = vmatprep.subr.mxu0 0.0
        %1228 = vmatpush1.msra.mxu0 %v298
        %1229 = vmatprep.subr.mxu0 0.0
        %1230 = vmatpush2.msra.mxu0 0.0
        %1231 = vmatprep.subr.mxu0 0.0
        %1232 = vmatpush2.msra.mxu0 0.0
        %1233 = vmatprep.subr.mxu0 0.0
        %1234 = vmatpush2.msra.mxu0 0.0
        %1235 = vmatprep.subr.mxu0 0.0
        %1236 = vmatpush2.msra.mxu0 0.0
        %1237 = vmatprep.subr.mxu0 0.0
        %1238 = vmatpush2.msra.mxu0 0.0
        %1239 = vmatprep.subr.mxu0 0.0
        %1240 = vmatpush2.msra.mxu0 0.0
        %1241 = vmatprep.subr.mxu0 0.0
        %1242 = vmatpush2.msra.mxu0 0.0
        %1243 = vmatprep.subr.mxu0 0.0
        %1244 = vmatpush2.msra.mxu0 0.0
        %1245 = vmatprep.subr.mxu0 0.0
        %1246 = vmatpush2.msra.mxu0 0.0
        %1247 = vmatprep.subr.mxu0 0.0
        %1248 = vmatpush2.msra.mxu0 0.0
        %1249 = vmatprep.subr.mxu0 0.0
        %1250 = vmatpush2.msra.mxu0 0.0
        %1251 = vmatprep.subr.mxu0 0.0
        %1252 = vmatpush2.msra.mxu0 0.0
        %1253 = vmatprep.subr.mxu0 0.0
        %1254 = vmatpush2.msra.mxu0 0.0
        %1255 = vmatprep.subr.mxu0 0.0
        %1256 = vmatpush2.msra.mxu0 0.0
        %1257 = vmatprep.subr.mxu0 0.0
        %1258 = vmatpush2.msra.mxu0 0.0
        %1259 = vmatprep.subr.mxu0 0.0
        %1260 = vmatpush2.msra.mxu0 0.0
        %1261 = vmatprep.mubr.f32.mxu0 0.0
        %1262 = vmatmul.mubr.f32.gmra.mxu0 %v1195
        %v1263 = vpop.f32.mrf.mxu0
        %v1264 = vadd.f32 %v1193, %v1263
        %v1265 = vpop.f32.mrf.mxu0
        %1266 = vdwg.mxu0
        %v1267 = vadd.f32 %v283, %v1264
        %v1268 = vsel %vm343, %v1267, 0.0
        %1269 = vadd.xlane.f32.xlu0 %v1268
        %v1270 = vpop.xlane.xlu0 %1269
        %v1271 = vrcp.pop 32.0
        %v1272 = vmul.f32 %v1270, %v1271
        %v1273 = vsub.f32 %v1267, %v1272
        %v1274 = vmul.f32 %v1273, %v1273
        %v1275 = vsel %vm343, %v1274, 0.0
        %1276 = vadd.xlane.f32.xlu0 %v1275
        %v1277 = vpop.xlane.xlu0 %1276
        %v1278 = vmul.f32 %v1277, %v1271
        %v1279 = vadd.f32 %v1278, 1e-05
        %v1280 = vrsqrt.pop %v1279
        %v1281 = vmul.f32 %v1273, %v1280
        %v1282 = vlaneseq
        %v1283 = vshrl.u32 %v1282, 7
        %v1284 = vsub.s32 0, %v1283
        %v1285 = vrot.slane %v333, %v1284
        %v1286 = vmul.f32 %v1281, %v1285
        %v1287 = vlaneseq
        %v1288 = vshrl.u32 %v1287, 7
        %v1289 = vsub.s32 0, %v1288
        %v1290 = vrot.slane %v334, %v1289
        %v1291 = vadd.f32 %v1286, %v1290
        %v1292 = vlaneseq
        %v1293 = vshrl.u32 %v1292, 7
        %v1294 = vsub.s32 0, %v1293
        %v1295 = vrot.slane %v327, %v1294
        %v1297 = vsel %vm343, %v1291, 0
        %1299 = vmatprep.subr.mxu0 0.0
        %1300 = vmatpush1.msra.mxu0 0.0
        %1301 = vmatprep.subr.mxu0 0.0
        %1302 = vmatpush1.msra.mxu0 0.0
        %1303 = vmatprep.subr.mxu0 0.0
        %1304 = vmatpush1.msra.mxu0 0.0
        %1305 = vmatprep.subr.mxu0 0.0
        %1306 = vmatpush1.msra.mxu0 0.0
        %1307 = vmatprep.subr.mxu0 0.0
        %1308 = vmatpush1.msra.mxu0 0.0
        %1309 = vmatprep.subr.mxu0 0.0
        %1310 = vmatpush1.msra.mxu0 0.0
        %1311 = vmatprep.subr.mxu0 0.0
        %1312 = vmatpush1.msra.mxu0 0.0
        %1313 = vmatprep.subr.mxu0 0.0
        %1314 = vmatpush1.msra.mxu0 0.0
        %1315 = vmatprep.subr.mxu0 0.0
        %1316 = vmatpush1.msra.mxu0 0.0
        %1317 = vmatprep.subr.mxu0 0.0
        %1318 = vmatpush1.msra.mxu0 0.0
        %1319 = vmatprep.subr.mxu0 0.0
        %1320 = vmatpush1.msra.mxu0 0.0
        %1321 = vmatprep.subr.mxu0 0.0
        %1322 = vmatpush1.msra.mxu0 0.0
        %1323 = vmatprep.subr.mxu0 0.0
        %1324 = vmatpush1.msra.mxu0 %v293
        %1325 = vmatprep.subr.mxu0 0.0
        %1326 = vmatpush1.msra.mxu0 %v292
        %1327 = vmatprep.subr.mxu0 0.0
        %1328 = vmatpush1.msra.mxu0 %v291
        %1329 = vmatprep.subr.mxu0 0.0
        %1330 = vmatpush1.msra.mxu0 %v290
        %1331 = vmatprep.subr.mxu0 0.0
        %1332 = vmatpush2.msra.mxu0 0.0
        %1333 = vmatprep.subr.mxu0 0.0
        %1334 = vmatpush2.msra.mxu0 0.0
        %1335 = vmatprep.subr.mxu0 0.0
        %1336 = vmatpush2.msra.mxu0 0.0
        %1337 = vmatprep.subr.mxu0 0.0
        %1338 = vmatpush2.msra.mxu0 0.0
        %1339 = vmatprep.subr.mxu0 0.0
        %1340 = vmatpush2.msra.mxu0 0.0
        %1341 = vmatprep.subr.mxu0 0.0
        %1342 = vmatpush2.msra.mxu0 0.0
        %1343 = vmatprep.subr.mxu0 0.0
        %1344 = vmatpush2.msra.mxu0 0.0
        %1345 = vmatprep.subr.mxu0 0.0
        %1346 = vmatpush2.msra.mxu0 0.0
        %1347 = vmatprep.subr.mxu0 0.0
        %1348 = vmatpush2.msra.mxu0 0.0
        %1349 = vmatprep.subr.mxu0 0.0
        %1350 = vmatpush2.msra.mxu0 0.0
        %1351 = vmatprep.subr.mxu0 0.0
        %1352 = vmatpush2.msra.mxu0 0.0
        %1353 = vmatprep.subr.mxu0 0.0
        %1354 = vmatpush2.msra.mxu0 0.0
        %1355 = vmatprep.subr.mxu0 0.0
        %1356 = vmatpush2.msra.mxu0 0.0
        %1357 = vmatprep.subr.mxu0 0.0
        %1358 = vmatpush2.msra.mxu0 0.0
        %1359 = vmatprep.subr.mxu0 0.0
        %1360 = vmatpush2.msra.mxu0 0.0
        %1361 = vmatprep.subr.mxu0 0.0
        %1362 = vmatpush2.msra.mxu0 0.0
        %1363 = vmatprep.mubr.f32.mxu0 0.0
        %1364 = vmatmul.mubr.f32.gmra.mxu0 %v1297
        %v1365 = vpop.f32.mrf.mxu0
        %v1366 = vadd.f32 %v1295, %v1365
        %v1367 = vpop.f32.mrf.mxu0
        %1368 = vdwg.mxu0
        %v1370 = vsel %vm505, %v1366, 0
        %v1373 = vsel %vm505, %v417, 0
        %v1376 = vsel %vm505, %v422, 0
        %1378 = vmatprep.subr.mxu0 0.0
        %1379 = vmatpush1.xpose.msra.mxu0 0.0
        %1380 = vmatprep.subr.mxu0 0.0
        %1381 = vmatpush1.xpose.msra.mxu0 0.0
        %1382 = vmatprep.subr.mxu0 0.0
        %1383 = vmatpush1.xpose.msra.mxu0 0.0
        %1384 = vmatprep.subr.mxu0 0.0
        %1385 = vmatpush1.xpose.msra.mxu0 0.0
        %1386 = vmatprep.subr.mxu0 0.0
        %1387 = vmatpush1.xpose.msra.mxu0 0.0
        %1388 = vmatprep.subr.mxu0 0.0
        %1389 = vmatpush1.xpose.msra.mxu0 0.0
        %1390 = vmatprep.subr.mxu0 0.0
        %1391 = vmatpush1.xpose.msra.mxu0 0.0
        %1392 = vmatprep.subr.mxu0 0.0
        %1393 = vmatpush1.xpose.msra.mxu0 0.0
        %1394 = vmatprep.subr.mxu0 0.0
        %1395 = vmatpush1.xpose.msra.mxu0 0.0
        %1396 = vmatprep.subr.mxu0 0.0
        %1397 = vmatpush1.xpose.msra.mxu0 0.0
        %1398 = vmatprep.subr.mxu0 0.0
        %1399 = vmatpush1.xpose.msra.mxu0 0.0
        %1400 = vmatprep.subr.mxu0 0.0
        %1401 = vmatpush1.xpose.msra.mxu0 0.0
        %1402 = vmatprep.subr.mxu0 0.0
        %1403 = vmatpush1.xpose.msra.mxu0 0.0
        %1404 = vmatprep.subr.mxu0 0.0
        %1405 = vmatpush1.xpose.msra.mxu0 0.0
        %1406 = vmatprep.subr.mxu0 0.0
        %1407 = vmatpush1.xpose.msra.mxu0 %v1376
        %1408 = vmatprep.subr.mxu0 0.0
        %1409 = vmatpush1.xpose.msra.mxu0 %v1373
        %1410 = vmatprep.subr.mxu0 0.0
        %1411 = vmatpush2.xpose.msra.mxu0 0.0
        %1412 = vmatprep.subr.mxu0 0.0
        %1413 = vmatpush2.xpose.msra.mxu0 0.0
        %1414 = vmatprep.subr.mxu0 0.0
        %1415 = vmatpush2.xpose.msra.mxu0 0.0
        %1416 = vmatprep.subr.mxu0 0.0
        %1417 = vmatpush2.xpose.msra.mxu0 0.0
        %1418 = vmatprep.subr.mxu0 0.0
        %1419 = vmatpush2.xpose.msra.mxu0 0.0
        %1420 = vmatprep.subr.mxu0 0.0
        %1421 = vmatpush2.xpose.msra.mxu0 0.0
        %1422 = vmatprep.subr.mxu0 0.0
        %1423 = vmatpush2.xpose.msra.mxu0 0.0
        %1424 = vmatprep.subr.mxu0 0.0
        %1425 = vmatpush2.xpose.msra.mxu0 0.0
        %1426 = vmatprep.subr.mxu0 0.0
        %1427 = vmatpush2.xpose.msra.mxu0 0.0
        %1428 = vmatprep.subr.mxu0 0.0
        %1429 = vmatpush2.xpose.msra.mxu0 0.0
        %1430 = vmatprep.subr.mxu0 0.0
        %1431 = vmatpush2.xpose.msra.mxu0 0.0
        %1432 = vmatprep.subr.mxu0 0.0
        %1433 = vmatpush2.xpose.msra.mxu0 0.0
        %1434 = vmatprep.subr.mxu0 0.0
        %1435 = vmatpush2.xpose.msra.mxu0 0.0
        %1436 = vmatprep.subr.mxu0 0.0
        %1437 = vmatpush2.xpose.msra.mxu0 0.0
        %1438 = vmatprep.subr.mxu0 0.0
        %1439 = vmatpush2.xpose.msra.mxu0 0.0
        %1440 = vmatprep.subr.mxu0 0.0
        %1441 = vmatpush2.xpose.msra.mxu0 0.0
        %1442 = vmatprep.mubr.f32.mxu0 0.0
        %1443 = vmatmul.mubr.f32.gmra.mxu0 %v1370
        %v1444 = vpop.f32.mrf.mxu0
        %v1445 = vadd.f32 0.0, %v1444
        %v1446 = vpop.f32.mrf.mxu0
        %1447 = vdwg.mxu0
        %v1448 = vmul.f32 %v1445, 0.35355338
        %vm1449 = vcmask 130048
        %v1450 = vsel %vm1449, %v1448, -inf
        %1451 = vmax.xlane.f32.xlu0 %v1450
        %v1452 = vpop.xlane.xlu0 %1451
        %v1453 = vsub.f32 %v1448, %v1452
        %v1454 = vmul.f32 %v1453, 1.442695
        %v1455 = vpow.pop %v1454
        %1456 = vrot.lane.b32.xlu0 %v417, 96
        %v1457 = vpop.permute.xlu0 %1456
        %1458 = vrot.lane.b32.xlu0 %v422, 96
        %v1459 = vpop.permute.xlu0 %1458
        %v1463 = vsel %vm1449, %v1455, 0
        %1465 = vmatprep.subr.mxu0 0.0
        %1466 = vmatpush1.msra.mxu0 0.0
        %1467 = vmatprep.subr.mxu0 0.0
        %1468 = vmatpush1.msra.mxu0 0.0
        %1469 = vmatprep.subr.mxu0 0.0
        %1470 = vmatpush1.msra.mxu0 0.0
        %1471 = vmatprep.subr.mxu0 0.0
        %1472 = vmatpush1.msra.mxu0 0.0
        %1473 = vmatprep.subr.mxu0 0.0
        %1474 = vmatpush1.msra.mxu0 0.0
        %1475 = vmatprep.subr.mxu0 0.0
        %1476 = vmatpush1.msra.mxu0 0.0
        %1477 = vmatprep.subr.mxu0 0.0
        %1478 = vmatpush1.msra.mxu0 0.0
        %1479 = vmatprep.subr.mxu0 0.0
        %1480 = vmatpush1.msra.mxu0 0.0
        %1481 = vmatprep.subr.mxu0 0.0
        %1482 = vmatpush1.msra.mxu0 0.0
        %1483 = vmatprep.subr.mxu0 0.0
        %1484 = vmatpush1.msra.mxu0 0.0
        %1485 = vmatprep.subr.mxu0 0.0
        %1486 = vmatpush1.msra.mxu0 0.0
        %1487 = vmatprep.subr.mxu0 0.0
        %1488 = vmatpush1.msra.mxu0 0.0
        %1489 = vmatprep.subr.mxu0 0.0
        %1490 = vmatpush1.msra.mxu0 0.0
        %1491 = vmatprep.subr.mxu0 0.0
        %1492 = vmatpush1.msra.mxu0 0.0
        %1493 = vmatprep.subr.mxu0 0.0
        %1494 = vmatpush1.msra.mxu0 %v1459
        %1495 = vmatprep.subr.mxu0 0.0
        %1496 = vmatpush1.msra.mxu0 %v1457
        %1497 = vmatprep.subr.mxu0 0.0
        %1498 = vmatpush2.msra.mxu0 0.0
        %1499 = vmatprep.subr.mxu0 0.0
        %1500 = vmatpush2.msra.mxu0 0.0
        %1501 = vmatprep.subr.mxu0 0.0
        %1502 = vmatpush2.msra.mxu0 0.0
        %1503 = vmatprep.subr.mxu0 0.0
        %1504 = vmatpush2.msra.mxu0 0.0
        %1505 = vmatprep.subr.mxu0 0.0
        %1506 = vmatpush2.msra.mxu0 0.0
        %1507 = vmatprep.subr.mxu0 0.0
        %1508 = vmatpush2.msra.mxu0 0.0
        %1509 = vmatprep.subr.mxu0 0.0
        %1510 = vmatpush2.msra.mxu0 0.0
        %1511 = vmatprep.subr.mxu0 0.0
        %1512 = vmatpush2.msra.mxu0 0.0
        %1513 = vmatprep.subr.mxu0 0.0
        %1514 = vmatpush2.msra.mxu0 0.0
        %1515 = vmatprep.subr.mxu0 0.0
        %1516 = vmatpush2.msra.mxu0 0.0
        %1517 = vmatprep.subr.mxu0 0.0
        %1518 = vmatpush2.msra.mxu0 0.0
        %1519 = vmatprep.subr.mxu0 0.0
        %1520 = vmatpush2.msra.mxu0 0.0
        %1521 = vmatprep.subr.mxu0 0.0
        %1522 = vmatpush2.msra.mxu0 0.0
        %1523 = vmatprep.subr.mxu0 0.0
        %1524 = vmatpush2.msra.mxu0 0.0
        %1525 = vmatprep.subr.mxu0 0.0
        %1526 = vmatpush2.msra.mxu0 0.0
        %1527 = vmatprep.subr.mxu0 0.0
        %1528 = vmatpush2.msra.mxu0 0.0
        %1529 = vmatprep.mubr.f32.mxu0 0.0
        %1530 = vmatmul.mubr.f32.gmra.mxu0 %v1463
        %v1531 = vpop.f32.mrf.mxu0
        %v1532 = vadd.f32 0.0, %v1531
        %v1533 = vpop.f32.mrf.mxu0
        %1534 = vdwg.mxu0
        %v1535 = vsel %vm1449, %v1455, 0.0
        %1536 = vadd.xlane.f32.xlu0 %v1535
        %v1537 = vpop.xlane.xlu0 %1536
        %v1538 = vrcp.pop %v1537
        %v1539 = vmul.f32 1.0, %v1538
        %v1540 = vmul.f32 %v1532, %v1539
        %1541 = vst.msk [vmem:[#allocation2] sm:$0xff] %vm505, %v1540
        %1542 = vrot.lane.b32.xlu0 %v1366, 120
        %v1543 = vpop.permute.xlu0 %1542
        %1544 = vrot.lane.b32.xlu0 %v417, 120
        %v1545 = vpop.permute.xlu0 %1544
        %1546 = vrot.lane.b32.xlu0 %v422, 120
        %v1547 = vpop.permute.xlu0 %1546
        %v1548 = vsel %vm505, %v1543, 0
        %v1550 = vsel %vm505, %v1545, 0
        %v1552 = vsel %vm505, %v1547, 0
        %1554 = vmatprep.subr.mxu0 0.0
        %1555 = vmatpush1.xpose.msra.mxu0 0.0
        %1556 = vmatprep.subr.mxu0 0.0
        %1557 = vmatpush1.xpose.msra.mxu0 0.0
        %1558 = vmatprep.subr.mxu0 0.0
        %1559 = vmatpush1.xpose.msra.mxu0 0.0
        %1560 = vmatprep.subr.mxu0 0.0
        %1561 = vmatpush1.xpose.msra.mxu0 0.0
        %1562 = vmatprep.subr.mxu0 0.0
        %1563 = vmatpush1.xpose.msra.mxu0 0.0
        %1564 = vmatprep.subr.mxu0 0.0
        %1565 = vmatpush1.xpose.msra.mxu0 0.0
        %1566 = vmatprep.subr.mxu0 0.0
        %1567 = vmatpush1.xpose.msra.mxu0 0.0
        %1568 = vmatprep.subr.mxu0 0.0
        %1569 = vmatpush1.xpose.msra.mxu0 0.0
        %1570 = vmatprep.subr.mxu0 0.0
        %1571 = vmatpush1.xpose.msra.mxu0 0.0
        %1572 = vmatprep.subr.mxu0 0.0
        %1573 = vmatpush1.xpose.msra.mxu0 0.0
        %1574 = vmatprep.subr.mxu0 0.0
        %1575 = vmatpush1.xpose.msra.mxu0 0.0
        %1576 = vmatprep.subr.mxu0 0.0
        %1577 = vmatpush1.xpose.msra.mxu0 0.0
        %1578 = vmatprep.subr.mxu0 0.0
        %1579 = vmatpush1.xpose.msra.mxu0 0.0
        %1580 = vmatprep.subr.mxu0 0.0
        %1581 = vmatpush1.xpose.msra.mxu0 0.0
        %1582 = vmatprep.subr.mxu0 0.0
        %1583 = vmatpush1.xpose.msra.mxu0 %v1552
        %1584 = vmatprep.subr.mxu0 0.0
        %1585 = vmatpush1.xpose.msra.mxu0 %v1550
        %1586 = vmatprep.subr.mxu0 0.0
        %1587 = vmatpush2.xpose.msra.mxu0 0.0
        %1588 = vmatprep.subr.mxu0 0.0
        %1589 = vmatpush2.xpose.msra.mxu0 0.0
        %1590 = vmatprep.subr.mxu0 0.0
        %1591 = vmatpush2.xpose.msra.mxu0 0.0
        %1592 = vmatprep.subr.mxu0 0.0
        %1593 = vmatpush2.xpose.msra.mxu0 0.0
        %1594 = vmatprep.subr.mxu0 0.0
        %1595 = vmatpush2.xpose.msra.mxu0 0.0
        %1596 = vmatprep.subr.mxu0 0.0
        %1597 = vmatpush2.xpose.msra.mxu0 0.0
        %1598 = vmatprep.subr.mxu0 0.0
        %1599 = vmatpush2.xpose.msra.mxu0 0.0
        %1600 = vmatprep.subr.mxu0 0.0
        %1601 = vmatpush2.xpose.msra.mxu0 0.0
        %1602 = vmatprep.subr.mxu0 0.0
        %1603 = vmatpush2.xpose.msra.mxu0 0.0
        %1604 = vmatprep.subr.mxu0 0.0
        %1605 = vmatpush2.xpose.msra.mxu0 0.0
        %1606 = vmatprep.subr.mxu0 0.0
        %1607 = vmatpush2.xpose.msra.mxu0 0.0
        %1608 = vmatprep.subr.mxu0 0.0
        %1609 = vmatpush2.xpose.msra.mxu0 0.0
        %1610 = vmatprep.subr.mxu0 0.0
        %1611 = vmatpush2.xpose.msra.mxu0 0.0
        %1612 = vmatprep.subr.mxu0 0.0
        %1613 = vmatpush2.xpose.msra.mxu0 0.0
        %1614 = vmatprep.subr.mxu0 0.0
        %1615 = vmatpush2.xpose.msra.mxu0 0.0
        %1616 = vmatprep.subr.mxu0 0.0
        %1617 = vmatpush2.xpose.msra.mxu0 0.0
        %1618 = vmatprep.mubr.f32.mxu0 0.0
        %1619 = vmatmul.mubr.f32.gmra.mxu0 %v1548
        %v1620 = vpop.f32.mrf.mxu0
        %v1621 = vadd.f32 0.0, %v1620
        %v1622 = vpop.f32.mrf.mxu0
        %1623 = vdwg.mxu0
        %v1624 = vmul.f32 %v1621, 0.35355338
        %v1625 = vsel %vm1449, %v1624, -inf
        %1626 = vmax.xlane.f32.xlu0 %v1625
        %v1627 = vpop.xlane.xlu0 %1626
        %v1628 = vsub.f32 %v1624, %v1627
        %v1629 = vmul.f32 %v1628, 1.442695
        %v1630 = vpow.pop %v1629
        %1631 = vrot.lane.b32.xlu0 %v417, 88
        %v1632 = vpop.permute.xlu0 %1631
        %1633 = vrot.lane.b32.xlu0 %v422, 88
        %v1634 = vpop.permute.xlu0 %1633
        %v1638 = vsel %vm1449, %v1630, 0
        %1640 = vmatprep.subr.mxu0 0.0
        %1641 = vmatpush1.msra.mxu0 0.0
        %1642 = vmatprep.subr.mxu0 0.0
        %1643 = vmatpush1.msra.mxu0 0.0
        %1644 = vmatprep.subr.mxu0 0.0
        %1645 = vmatpush1.msra.mxu0 0.0
        %1646 = vmatprep.subr.mxu0 0.0
        %1647 = vmatpush1.msra.mxu0 0.0
        %1648 = vmatprep.subr.mxu0 0.0
        %1649 = vmatpush1.msra.mxu0 0.0
        %1650 = vmatprep.subr.mxu0 0.0
        %1651 = vmatpush1.msra.mxu0 0.0
        %1652 = vmatprep.subr.mxu0 0.0
        %1653 = vmatpush1.msra.mxu0 0.0
        %1654 = vmatprep.subr.mxu0 0.0
        %1655 = vmatpush1.msra.mxu0 0.0
        %1656 = vmatprep.subr.mxu0 0.0
        %1657 = vmatpush1.msra.mxu0 0.0
        %1658 = vmatprep.subr.mxu0 0.0
        %1659 = vmatpush1.msra.mxu0 0.0
        %1660 = vmatprep.subr.mxu0 0.0
        %1661 = vmatpush1.msra.mxu0 0.0
        %1662 = vmatprep.subr.mxu0 0.0
        %1663 = vmatpush1.msra.mxu0 0.0
        %1664 = vmatprep.subr.mxu0 0.0
        %1665 = vmatpush1.msra.mxu0 0.0
        %1666 = vmatprep.subr.mxu0 0.0
        %1667 = vmatpush1.msra.mxu0 0.0
        %1668 = vmatprep.subr.mxu0 0.0
        %1669 = vmatpush1.msra.mxu0 %v1634
        %1670 = vmatprep.subr.mxu0 0.0
        %1671 = vmatpush1.msra.mxu0 %v1632
        %1672 = vmatprep.subr.mxu0 0.0
        %1673 = vmatpush2.msra.mxu0 0.0
        %1674 = vmatprep.subr.mxu0 0.0
        %1675 = vmatpush2.msra.mxu0 0.0
        %1676 = vmatprep.subr.mxu0 0.0
        %1677 = vmatpush2.msra.mxu0 0.0
        %1678 = vmatprep.subr.mxu0 0.0
        %1679 = vmatpush2.msra.mxu0 0.0
        %1680 = vmatprep.subr.mxu0 0.0
        %1681 = vmatpush2.msra.mxu0 0.0
        %1682 = vmatprep.subr.mxu0 0.0
        %1683 = vmatpush2.msra.mxu0 0.0
        %1684 = vmatprep.subr.mxu0 0.0
        %1685 = vmatpush2.msra.mxu0 0.0
        %1686 = vmatprep.subr.mxu0 0.0
        %1687 = vmatpush2.msra.mxu0 0.0
        %1688 = vmatprep.subr.mxu0 0.0
        %1689 = vmatpush2.msra.mxu0 0.0
        %1690 = vmatprep.subr.mxu0 0.0
        %1691 = vmatpush2.msra.mxu0 0.0
        %1692 = vmatprep.subr.mxu0 0.0
        %1693 = vmatpush2.msra.mxu0 0.0
        %1694 = vmatprep.subr.mxu0 0.0
        %1695 = vmatpush2.msra.mxu0 0.0
        %1696 = vmatprep.subr.mxu0 0.0
        %1697 = vmatpush2.msra.mxu0 0.0
        %1698 = vmatprep.subr.mxu0 0.0
        %1699 = vmatpush2.msra.mxu0 0.0
        %1700 = vmatprep.subr.mxu0 0.0
        %1701 = vmatpush2.msra.mxu0 0.0
        %1702 = vmatprep.subr.mxu0 0.0
        %1703 = vmatpush2.msra.mxu0 0.0
        %1704 = vmatprep.mubr.f32.mxu0 0.0
        %1705 = vmatmul.mubr.f32.gmra.mxu0 %v1638
        %v1706 = vpop.f32.mrf.mxu0
        %v1707 = vadd.f32 0.0, %v1706
        %v1708 = vpop.f32.mrf.mxu0
        %1709 = vdwg.mxu0
        %v1710 = vsel %vm1449, %v1630, 0.0
        %1711 = vadd.xlane.f32.xlu0 %v1710
        %v1712 = vpop.xlane.xlu0 %1711
        %v1713 = vrcp.pop %v1712
        %v1714 = vmul.f32 1.0, %v1713
        %v1715 = vmul.f32 %v1707, %v1714
        %1717 = vrot.lane.b32.xlu0 %v1715, 8
        %v1718 = vpop.permute.xlu0 %1717
        %1720 = vst.msk [vmem:[#allocation2] sm:$0xff] %vm841, %v1718
        %1721 = vrot.lane.b32.xlu0 %v1366, 112
        %v1722 = vpop.permute.xlu0 %1721
        %1723 = vrot.lane.b32.xlu0 %v417, 112
        %v1724 = vpop.permute.xlu0 %1723
        %1725 = vrot.lane.b32.xlu0 %v422, 112
        %v1726 = vpop.permute.xlu0 %1725
        %v1727 = vsel %vm505, %v1722, 0
        %v1729 = vsel %vm505, %v1724, 0
        %v1731 = vsel %vm505, %v1726, 0
        %1733 = vmatprep.subr.mxu0 0.0
        %1734 = vmatpush1.xpose.msra.mxu0 0.0
        %1735 = vmatprep.subr.mxu0 0.0
        %1736 = vmatpush1.xpose.msra.mxu0 0.0
        %1737 = vmatprep.subr.mxu0 0.0
        %1738 = vmatpush1.xpose.msra.mxu0 0.0
        %1739 = vmatprep.subr.mxu0 0.0
        %1740 = vmatpush1.xpose.msra.mxu0 0.0
        %1741 = vmatprep.subr.mxu0 0.0
        %1742 = vmatpush1.xpose.msra.mxu0 0.0
        %1743 = vmatprep.subr.mxu0 0.0
        %1744 = vmatpush1.xpose.msra.mxu0 0.0
        %1745 = vmatprep.subr.mxu0 0.0
        %1746 = vmatpush1.xpose.msra.mxu0 0.0
        %1747 = vmatprep.subr.mxu0 0.0
        %1748 = vmatpush1.xpose.msra.mxu0 0.0
        %1749 = vmatprep.subr.mxu0 0.0
        %1750 = vmatpush1.xpose.msra.mxu0 0.0
        %1751 = vmatprep.subr.mxu0 0.0
        %1752 = vmatpush1.xpose.msra.mxu0 0.0
        %1753 = vmatprep.subr.mxu0 0.0
        %1754 = vmatpush1.xpose.msra.mxu0 0.0
        %1755 = vmatprep.subr.mxu0 0.0
        %1756 = vmatpush1.xpose.msra.mxu0 0.0
        %1757 = vmatprep.subr.mxu0 0.0
        %1758 = vmatpush1.xpose.msra.mxu0 0.0
        %1759 = vmatprep.subr.mxu0 0.0
        %1760 = vmatpush1.xpose.msra.mxu0 0.0
        %1761 = vmatprep.subr.mxu0 0.0
        %1762 = vmatpush1.xpose.msra.mxu0 %v1731
        %1763 = vmatprep.subr.mxu0 0.0
        %1764 = vmatpush1.xpose.msra.mxu0 %v1729
        %1765 = vmatprep.subr.mxu0 0.0
        %1766 = vmatpush2.xpose.msra.mxu0 0.0
        %1767 = vmatprep.subr.mxu0 0.0
        %1768 = vmatpush2.xpose.msra.mxu0 0.0
        %1769 = vmatprep.subr.mxu0 0.0
        %1770 = vmatpush2.xpose.msra.mxu0 0.0
        %1771 = vmatprep.subr.mxu0 0.0
        %1772 = vmatpush2.xpose.msra.mxu0 0.0
        %1773 = vmatprep.subr.mxu0 0.0
        %1774 = vmatpush2.xpose.msra.mxu0 0.0
        %1775 = vmatprep.subr.mxu0 0.0
        %1776 = vmatpush2.xpose.msra.mxu0 0.0
        %1777 = vmatprep.subr.mxu0 0.0
        %1778 = vmatpush2.xpose.msra.mxu0 0.0
        %1779 = vmatprep.subr.mxu0 0.0
        %1780 = vmatpush2.xpose.msra.mxu0 0.0
        %1781 = vmatprep.subr.mxu0 0.0
        %1782 = vmatpush2.xpose.msra.mxu0 0.0
        %1783 = vmatprep.subr.mxu0 0.0
        %1784 = vmatpush2.xpose.msra.mxu0 0.0
        %1785 = vmatprep.subr.mxu0 0.0
        %1786 = vmatpush2.xpose.msra.mxu0 0.0
        %1787 = vmatprep.subr.mxu0 0.0
        %1788 = vmatpush2.xpose.msra.mxu0 0.0
        %1789 = vmatprep.subr.mxu0 0.0
        %1790 = vmatpush2.xpose.msra.mxu0 0.0
        %1791 = vmatprep.subr.mxu0 0.0
        %1792 = vmatpush2.xpose.msra.mxu0 0.0
        %1793 = vmatprep.subr.mxu0 0.0
        %1794 = vmatpush2.xpose.msra.mxu0 0.0
        %1795 = vmatprep.subr.mxu0 0.0
        %1796 = vmatpush2.xpose.msra.mxu0 0.0
        %1797 = vmatprep.mubr.f32.mxu0 0.0
        %1798 = vmatmul.mubr.f32.gmra.mxu0 %v1727
        %v1799 = vpop.f32.mrf.mxu0
        %v1800 = vadd.f32 0.0, %v1799
        %v1801 = vpop.f32.mrf.mxu0
        %1802 = vdwg.mxu0
        %v1803 = vmul.f32 %v1800, 0.35355338
        %v1804 = vsel %vm1449, %v1803, -inf
        %1805 = vmax.xlane.f32.xlu0 %v1804
        %v1806 = vpop.xlane.xlu0 %1805
        %v1807 = vsub.f32 %v1803, %v1806
        %v1808 = vmul.f32 %v1807, 1.442695
        %v1809 = vpow.pop %v1808
        %1810 = vrot.lane.b32.xlu0 %v417, 80
        %v1811 = vpop.permute.xlu0 %1810
        %1812 = vrot.lane.b32.xlu0 %v422, 80
        %v1813 = vpop.permute.xlu0 %1812
        %v1817 = vsel %vm1449, %v1809, 0
        %1819 = vmatprep.subr.mxu0 0.0
        %1820 = vmatpush1.msra.mxu0 0.0
        %1821 = vmatprep.subr.mxu0 0.0
        %1822 = vmatpush1.msra.mxu0 0.0
        %1823 = vmatprep.subr.mxu0 0.0
        %1824 = vmatpush1.msra.mxu0 0.0
        %1825 = vmatprep.subr.mxu0 0.0
        %1826 = vmatpush1.msra.mxu0 0.0
        %1827 = vmatprep.subr.mxu0 0.0
        %1828 = vmatpush1.msra.mxu0 0.0
        %1829 = vmatprep.subr.mxu0 0.0
        %1830 = vmatpush1.msra.mxu0 0.0
        %1831 = vmatprep.subr.mxu0 0.0
        %1832 = vmatpush1.msra.mxu0 0.0
        %1833 = vmatprep.subr.mxu0 0.0
        %1834 = vmatpush1.msra.mxu0 0.0
        %1835 = vmatprep.subr.mxu0 0.0
        %1836 = vmatpush1.msra.mxu0 0.0
        %1837 = vmatprep.subr.mxu0 0.0
        %1838 = vmatpush1.msra.mxu0 0.0
        %1839 = vmatprep.subr.mxu0 0.0
        %1840 = vmatpush1.msra.mxu0 0.0
        %1841 = vmatprep.subr.mxu0 0.0
        %1842 = vmatpush1.msra.mxu0 0.0
        %1843 = vmatprep.subr.mxu0 0.0
        %1844 = vmatpush1.msra.mxu0 0.0
        %1845 = vmatprep.subr.mxu0 0.0
        %1846 = vmatpush1.msra.mxu0 0.0
        %1847 = vmatprep.subr.mxu0 0.0
        %1848 = vmatpush1.msra.mxu0 %v1813
        %1849 = vmatprep.subr.mxu0 0.0
        %1850 = vmatpush1.msra.mxu0 %v1811
        %1851 = vmatprep.subr.mxu0 0.0
        %1852 = vmatpush2.msra.mxu0 0.0
        %1853 = vmatprep.subr.mxu0 0.0
        %1854 = vmatpush2.msra.mxu0 0.0
        %1855 = vmatprep.subr.mxu0 0.0
        %1856 = vmatpush2.msra.mxu0 0.0
        %1857 = vmatprep.subr.mxu0 0.0
        %1858 = vmatpush2.msra.mxu0 0.0
        %1859 = vmatprep.subr.mxu0 0.0
        %1860 = vmatpush2.msra.mxu0 0.0
        %1861 = vmatprep.subr.mxu0 0.0
        %1862 = vmatpush2.msra.mxu0 0.0
        %1863 = vmatprep.subr.mxu0 0.0
        %1864 = vmatpush2.msra.mxu0 0.0
        %1865 = vmatprep.subr.mxu0 0.0
        %1866 = vmatpush2.msra.mxu0 0.0
        %1867 = vmatprep.subr.mxu0 0.0
        %1868 = vmatpush2.msra.mxu0 0.0
        %1869 = vmatprep.subr.mxu0 0.0
        %1870 = vmatpush2.msra.mxu0 0.0
        %1871 = vmatprep.subr.mxu0 0.0
        %1872 = vmatpush2.msra.mxu0 0.0
        %1873 = vmatprep.subr.mxu0 0.0
        %1874 = vmatpush2.msra.mxu0 0.0
        %1875 = vmatprep.subr.mxu0 0.0
        %1876 = vmatpush2.msra.mxu0 0.0
        %1877 = vmatprep.subr.mxu0 0.0
        %1878 = vmatpush2.msra.mxu0 0.0
        %1879 = vmatprep.subr.mxu0 0.0
        %1880 = vmatpush2.msra.mxu0 0.0
        %1881 = vmatprep.subr.mxu0 0.0
        %1882 = vmatpush2.msra.mxu0 0.0
        %1883 = vmatprep.mubr.f32.mxu0 0.0
        %1884 = vmatmul.mubr.f32.gmra.mxu0 %v1817
        %v1885 = vpop.f32.mrf.mxu0
        %v1886 = vadd.f32 0.0, %v1885
        %v1887 = vpop.f32.mrf.mxu0
        %1888 = vdwg.mxu0
        %v1889 = vsel %vm1449, %v1809, 0.0
        %1890 = vadd.xlane.f32.xlu0 %v1889
        %v1891 = vpop.xlane.xlu0 %1890
        %v1892 = vrcp.pop %v1891
        %v1893 = vmul.f32 1.0, %v1892
        %v1894 = vmul.f32 %v1886, %v1893
        %1896 = vrot.lane.b32.xlu0 %v1894, 16
        %v1897 = vpop.permute.xlu0 %1896
        %1899 = vst.msk [vmem:[#allocation2] sm:$0xff] %vm1014, %v1897
        %1900 = vrot.lane.b32.xlu0 %v1366, 104
        %v1901 = vpop.permute.xlu0 %1900
        %1902 = vrot.lane.b32.xlu0 %v417, 104
        %v1903 = vpop.permute.xlu0 %1902
        %1904 = vrot.lane.b32.xlu0 %v422, 104
        %v1905 = vpop.permute.xlu0 %1904
        %v1906 = vsel %vm505, %v1901, 0
        %v1908 = vsel %vm505, %v1903, 0
        %v1910 = vsel %vm505, %v1905, 0
        %1912 = vmatprep.subr.mxu0 0.0
        %1913 = vmatpush1.xpose.msra.mxu0 0.0
        %1914 = vmatprep.subr.mxu0 0.0
        %1915 = vmatpush1.xpose.msra.mxu0 0.0
        %1916 = vmatprep.subr.mxu0 0.0
        %1917 = vmatpush1.xpose.msra.mxu0 0.0
        %1918 = vmatprep.subr.mxu0 0.0
        %1919 = vmatpush1.xpose.msra.mxu0 0.0
        %1920 = vmatprep.subr.mxu0 0.0
        %1921 = vmatpush1.xpose.msra.mxu0 0.0
        %1922 = vmatprep.subr.mxu0 0.0
        %1923 = vmatpush1.xpose.msra.mxu0 0.0
        %1924 = vmatprep.subr.mxu0 0.0
        %1925 = vmatpush1.xpose.msra.mxu0 0.0
        %1926 = vmatprep.subr.mxu0 0.0
        %1927 = vmatpush1.xpose.msra.mxu0 0.0
        %1928 = vmatprep.subr.mxu0 0.0
        %1929 = vmatpush1.xpose.msra.mxu0 0.0
        %1930 = vmatprep.subr.mxu0 0.0
        %1931 = vmatpush1.xpose.msra.mxu0 0.0
        %1932 = vmatprep.subr.mxu0 0.0
        %1933 = vmatpush1.xpose.msra.mxu0 0.0
        %1934 = vmatprep.subr.mxu0 0.0
        %1935 = vmatpush1.xpose.msra.mxu0 0.0
        %1936 = vmatprep.subr.mxu0 0.0
        %1937 = vmatpush1.xpose.msra.mxu0 0.0
        %1938 = vmatprep.subr.mxu0 0.0
        %1939 = vmatpush1.xpose.msra.mxu0 0.0
        %1940 = vmatprep.subr.mxu0 0.0
        %1941 = vmatpush1.xpose.msra.mxu0 %v1910
        %1942 = vmatprep.subr.mxu0 0.0
        %1943 = vmatpush1.xpose.msra.mxu0 %v1908
        %1944 = vmatprep.subr.mxu0 0.0
        %1945 = vmatpush2.xpose.msra.mxu0 0.0
        %1946 = vmatprep.subr.mxu0 0.0
        %1947 = vmatpush2.xpose.msra.mxu0 0.0
        %1948 = vmatprep.subr.mxu0 0.0
        %1949 = vmatpush2.xpose.msra.mxu0 0.0
        %1950 = vmatprep.subr.mxu0 0.0
        %1951 = vmatpush2.xpose.msra.mxu0 0.0
        %1952 = vmatprep.subr.mxu0 0.0
        %1953 = vmatpush2.xpose.msra.mxu0 0.0
        %1954 = vmatprep.subr.mxu0 0.0
        %1955 = vmatpush2.xpose.msra.mxu0 0.0
        %1956 = vmatprep.subr.mxu0 0.0
        %1957 = vmatpush2.xpose.msra.mxu0 0.0
        %1958 = vmatprep.subr.mxu0 0.0
        %1959 = vmatpush2.xpose.msra.mxu0 0.0
        %1960 = vmatprep.subr.mxu0 0.0
        %1961 = vmatpush2.xpose.msra.mxu0 0.0
        %1962 = vmatprep.subr.mxu0 0.0
        %1963 = vmatpush2.xpose.msra.mxu0 0.0
        %1964 = vmatprep.subr.mxu0 0.0
        %1965 = vmatpush2.xpose.msra.mxu0 0.0
        %1966 = vmatprep.subr.mxu0 0.0
        %1967 = vmatpush2.xpose.msra.mxu0 0.0
        %1968 = vmatprep.subr.mxu0 0.0
        %1969 = vmatpush2.xpose.msra.mxu0 0.0
        %1970 = vmatprep.subr.mxu0 0.0
        %1971 = vmatpush2.xpose.msra.mxu0 0.0
        %1972 = vmatprep.subr.mxu0 0.0
        %1973 = vmatpush2.xpose.msra.mxu0 0.0
        %1974 = vmatprep.subr.mxu0 0.0
        %1975 = vmatpush2.xpose.msra.mxu0 0.0
        %1976 = vmatprep.mubr.f32.mxu0 0.0
        %1977 = vmatmul.mubr.f32.gmra.mxu0 %v1906
        %v1978 = vpop.f32.mrf.mxu0
        %v1979 = vadd.f32 0.0, %v1978
        %v1980 = vpop.f32.mrf.mxu0
        %1981 = vdwg.mxu0
        %v1982 = vmul.f32 %v1979, 0.35355338
        %v1983 = vsel %vm1449, %v1982, -inf
        %1984 = vmax.xlane.f32.xlu0 %v1983
        %v1985 = vpop.xlane.xlu0 %1984
        %v1986 = vsub.f32 %v1982, %v1985
        %v1987 = vmul.f32 %v1986, 1.442695
        %v1988 = vpow.pop %v1987
        %1989 = vrot.lane.b32.xlu0 %v417, 72
        %v1990 = vpop.permute.xlu0 %1989
        %1991 = vrot.lane.b32.xlu0 %v422, 72
        %v1992 = vpop.permute.xlu0 %1991
        %v1996 = vsel %vm1449, %v1988, 0
        %1998 = vmatprep.subr.mxu0 0.0
        %1999 = vmatpush1.msra.mxu0 0.0
        %2000 = vmatprep.subr.mxu0 0.0
        %2001 = vmatpush1.msra.mxu0 0.0
        %2002 = vmatprep.subr.mxu0 0.0
        %2003 = vmatpush1.msra.mxu0 0.0
        %2004 = vmatprep.subr.mxu0 0.0
        %2005 = vmatpush1.msra.mxu0 0.0
        %2006 = vmatprep.subr.mxu0 0.0
        %2007 = vmatpush1.msra.mxu0 0.0
        %2008 = vmatprep.subr.mxu0 0.0
        %2009 = vmatpush1.msra.mxu0 0.0
        %2010 = vmatprep.subr.mxu0 0.0
        %2011 = vmatpush1.msra.mxu0 0.0
        %2012 = vmatprep.subr.mxu0 0.0
        %2013 = vmatpush1.msra.mxu0 0.0
        %2014 = vmatprep.subr.mxu0 0.0
        %2015 = vmatpush1.msra.mxu0 0.0
        %2016 = vmatprep.subr.mxu0 0.0
        %2017 = vmatpush1.msra.mxu0 0.0
        %2018 = vmatprep.subr.mxu0 0.0
        %2019 = vmatpush1.msra.mxu0 0.0
        %2020 = vmatprep.subr.mxu0 0.0
        %2021 = vmatpush1.msra.mxu0 0.0
        %2022 = vmatprep.subr.mxu0 0.0
        %2023 = vmatpush1.msra.mxu0 0.0
        %2024 = vmatprep.subr.mxu0 0.0
        %2025 = vmatpush1.msra.mxu0 0.0
        %2026 = vmatprep.subr.mxu0 0.0
        %2027 = vmatpush1.msra.mxu0 %v1992
        %2028 = vmatprep.subr.mxu0 0.0
        %2029 = vmatpush1.msra.mxu0 %v1990
        %2030 = vmatprep.subr.mxu0 0.0
        %2031 = vmatpush2.msra.mxu0 0.0
        %2032 = vmatprep.subr.mxu0 0.0
        %2033 = vmatpush2.msra.mxu0 0.0
        %2034 = vmatprep.subr.mxu0 0.0
        %2035 = vmatpush2.msra.mxu0 0.0
        %2036 = vmatprep.subr.mxu0 0.0
        %2037 = vmatpush2.msra.mxu0 0.0
        %2038 = vmatprep.subr.mxu0 0.0
        %2039 = vmatpush2.msra.mxu0 0.0
        %2040 = vmatprep.subr.mxu0 0.0
        %2041 = vmatpush2.msra.mxu0 0.0
        %2042 = vmatprep.subr.mxu0 0.0
        %2043 = vmatpush2.msra.mxu0 0.0
        %2044 = vmatprep.subr.mxu0 0.0
        %2045 = vmatpush2.msra.mxu0 0.0
        %2046 = vmatprep.subr.mxu0 0.0
        %2047 = vmatpush2.msra.mxu0 0.0
        %2048 = vmatprep.subr.mxu0 0.0
        %2049 = vmatpush2.msra.mxu0 0.0
        %2050 = vmatprep.subr.mxu0 0.0
        %2051 = vmatpush2.msra.mxu0 0.0
        %2052 = vmatprep.subr.mxu0 0.0
        %2053 = vmatpush2.msra.mxu0 0.0
        %2054 = vmatprep.subr.mxu0 0.0
        %2055 = vmatpush2.msra.mxu0 0.0
        %2056 = vmatprep.subr.mxu0 0.0
        %2057 = vmatpush2.msra.mxu0 0.0
        %2058 = vmatprep.subr.mxu0 0.0
        %2059 = vmatpush2.msra.mxu0 0.0
        %2060 = vmatprep.subr.mxu0 0.0
        %2061 = vmatpush2.msra.mxu0 0.0
        %2062 = vmatprep.mubr.f32.mxu0 0.0
        %2063 = vmatmul.mubr.f32.gmra.mxu0 %v1996
        %v2064 = vpop.f32.mrf.mxu0
        %v2065 = vadd.f32 0.0, %v2064
        %v2066 = vpop.f32.mrf.mxu0
        %2067 = vdwg.mxu0
        %v2068 = vsel %vm1449, %v1988, 0.0
        %2069 = vadd.xlane.f32.xlu0 %v2068
        %v2070 = vpop.xlane.xlu0 %2069
        %v2071 = vrcp.pop %v2070
        %v2072 = vmul.f32 1.0, %v2071
        %v2073 = vmul.f32 %v2065, %v2072
        %2075 = vrot.lane.b32.xlu0 %v2073, 24
        %v2076 = vpop.permute.xlu0 %2075
        %2078 = vst.msk [vmem:[#allocation2] sm:$0xff] %vm1187, %v2076
        %v2079 = vld [vmem:[#allocation2] sm:$0xff]
        %v2080 = vlaneseq
        %v2081 = vshrl.u32 %v2080, 7
        %v2082 = vsub.s32 0, %v2081
        %v2083 = vrot.slane %v330, %v2082
        %v2085 = vsel %vm343, %v2079, 0
        %2087 = vmatprep.subr.mxu0 0.0
        %2088 = vmatpush1.msra.mxu0 0.0
        %2089 = vmatprep.subr.mxu0 0.0
        %2090 = vmatpush1.msra.mxu0 0.0
        %2091 = vmatprep.subr.mxu0 0.0
        %2092 = vmatpush1.msra.mxu0 0.0
        %2093 = vmatprep.subr.mxu0 0.0
        %2094 = vmatpush1.msra.mxu0 0.0
        %2095 = vmatprep.subr.mxu0 0.0
        %2096 = vmatpush1.msra.mxu0 0.0
        %2097 = vmatprep.subr.mxu0 0.0
        %2098 = vmatpush1.msra.mxu0 0.0
        %2099 = vmatprep.subr.mxu0 0.0
        %2100 = vmatpush1.msra.mxu0 0.0
        %2101 = vmatprep.subr.mxu0 0.0
        %2102 = vmatpush1.msra.mxu0 0.0
        %2103 = vmatprep.subr.mxu0 0.0
        %2104 = vmatpush1.msra.mxu0 0.0
        %2105 = vmatprep.subr.mxu0 0.0
        %2106 = vmatpush1.msra.mxu0 0.0
        %2107 = vmatprep.subr.mxu0 0.0
        %2108 = vmatpush1.msra.mxu0 0.0
        %2109 = vmatprep.subr.mxu0 0.0
        %2110 = vmatpush1.msra.mxu0 0.0
        %2111 = vmatprep.subr.mxu0 0.0
        %2112 = vmatpush1.msra.mxu0 %v305
        %2113 = vmatprep.subr.mxu0 0.0
        %2114 = vmatpush1.msra.mxu0 %v304
        %2115 = vmatprep.subr.mxu0 0.0
        %2116 = vmatpush1.msra.mxu0 %v303
        %2117 = vmatprep.subr.mxu0 0.0
        %2118 = vmatpush1.msra.mxu0 %v302
        %2119 = vmatprep.subr.mxu0 0.0
        %2120 = vmatpush2.msra.mxu0 0.0
        %2121 = vmatprep.subr.mxu0 0.0
        %2122 = vmatpush2.msra.mxu0 0.0
        %2123 = vmatprep.subr.mxu0 0.0
        %2124 = vmatpush2.msra.mxu0 0.0
        %2125 = vmatprep.subr.mxu0 0.0
        %2126 = vmatpush2.msra.mxu0 0.0
        %2127 = vmatprep.subr.mxu0 0.0
        %2128 = vmatpush2.msra.mxu0 0.0
        %2129 = vmatprep.subr.mxu0 0.0
        %2130 = vmatpush2.msra.mxu0 0.0
        %2131 = vmatprep.subr.mxu0 0.0
        %2132 = vmatpush2.msra.mxu0 0.0
        %2133 = vmatprep.subr.mxu0 0.0
        %2134 = vmatpush2.msra.mxu0 0.0
        %2135 = vmatprep.subr.mxu0 0.0
        %2136 = vmatpush2.msra.mxu0 0.0
        %2137 = vmatprep.subr.mxu0 0.0
        %2138 = vmatpush2.msra.mxu0 0.0
        %2139 = vmatprep.subr.mxu0 0.0
        %2140 = vmatpush2.msra.mxu0 0.0
        %2141 = vmatprep.subr.mxu0 0.0
        %2142 = vmatpush2.msra.mxu0 0.0
        %2143 = vmatprep.subr.mxu0 0.0
        %2144 = vmatpush2.msra.mxu0 0.0
        %2145 = vmatprep.subr.mxu0 0.0
        %2146 = vmatpush2.msra.mxu0 0.0
        %2147 = vmatprep.subr.mxu0 0.0
        %2148 = vmatpush2.msra.mxu0 0.0
        %2149 = vmatprep.subr.mxu0 0.0
        %2150 = vmatpush2.msra.mxu0 0.0
        %2151 = vmatprep.mubr.f32.mxu0 0.0
        %2152 = vmatmul.mubr.f32.gmra.mxu0 %v2085
        %v2153 = vpop.f32.mrf.mxu0
        %v2154 = vadd.f32 %v2083, %v2153
        %v2155 = vpop.f32.mrf.mxu0
        %2156 = vdwg.mxu0
        %v2157 = vadd.f32 %v1291, %v2154
        %v2158 = vsel %vm343, %v2157, 0.0
        %2159 = vadd.xlane.f32.xlu0 %v2158
        %v2160 = vpop.xlane.xlu0 %2159
        %v2161 = vmul.f32 %v2160, %v1271
        %v2162 = vsub.f32 %v2157, %v2161
        %v2163 = vmul.f32 %v2162, %v2162
        %v2164 = vsel %vm343, %v2163, 0.0
        %2165 = vadd.xlane.f32.xlu0 %v2164
        %v2166 = vpop.xlane.xlu0 %2165
        %v2167 = vmul.f32 %v2166, %v1271
        %v2168 = vadd.f32 %v2167, 1e-05
        %v2169 = vrsqrt.pop %v2168
        %v2170 = vmul.f32 %v2162, %v2169
        %v2171 = vlaneseq
        %v2172 = vshrl.u32 %v2171, 7
        %v2173 = vsub.s32 0, %v2172
        %v2174 = vrot.slane %v335, %v2173
        %v2175 = vmul.f32 %v2170, %v2174
        %v2176 = vlaneseq
        %v2177 = vshrl.u32 %v2176, 7
        %v2178 = vsub.s32 0, %v2177
        %v2179 = vrot.slane %v336, %v2178
        %v2180 = vadd.f32 %v2175, %v2179
        %v2181 = vlaneseq
        %v2182 = vshrl.u32 %v2181, 7
        %v2183 = vsub.s32 0, %v2182
        %v2184 = vrot.slane %v331, %v2183
        %v2186 = vsel %vm343, %v2180, 0
        %2188 = vmatprep.subr.mxu0 0.0
        %2189 = vmatpush1.msra.mxu0 0.0
        %2190 = vmatprep.subr.mxu0 0.0
        %2191 = vmatpush1.msra.mxu0 0.0
        %2192 = vmatprep.subr.mxu0 0.0
        %2193 = vmatpush1.msra.mxu0 0.0
        %2194 = vmatprep.subr.mxu0 0.0
        %2195 = vmatpush1.msra.mxu0 0.0
        %2196 = vmatprep.subr.mxu0 0.0
        %2197 = vmatpush1.msra.mxu0 0.0
        %2198 = vmatprep.subr.mxu0 0.0
        %2199 = vmatpush1.msra.mxu0 0.0
        %2200 = vmatprep.subr.mxu0 0.0
        %2201 = vmatpush1.msra.mxu0 0.0
        %2202 = vmatprep.subr.mxu0 0.0
        %2203 = vmatpush1.msra.mxu0 0.0
        %2204 = vmatprep.subr.mxu0 0.0
        %2205 = vmatpush1.msra.mxu0 0.0
        %2206 = vmatprep.subr.mxu0 0.0
        %2207 = vmatpush1.msra.mxu0 0.0
        %2208 = vmatprep.subr.mxu0 0.0
        %2209 = vmatpush1.msra.mxu0 0.0
        %2210 = vmatprep.subr.mxu0 0.0
        %2211 = vmatpush1.msra.mxu0 0.0
        %2212 = vmatprep.subr.mxu0 0.0
        %2213 = vmatpush1.msra.mxu0 %v309
        %2214 = vmatprep.subr.mxu0 0.0
        %2215 = vmatpush1.msra.mxu0 %v308
        %2216 = vmatprep.subr.mxu0 0.0
        %2217 = vmatpush1.msra.mxu0 %v307
        %2218 = vmatprep.subr.mxu0 0.0
        %2219 = vmatpush1.msra.mxu0 %v306
        %2220 = vmatprep.subr.mxu0 0.0
        %2221 = vmatpush2.msra.mxu0 0.0
        %2222 = vmatprep.subr.mxu0 0.0
        %2223 = vmatpush2.msra.mxu0 0.0
        %2224 = vmatprep.subr.mxu0 0.0
        %2225 = vmatpush2.msra.mxu0 0.0
        %2226 = vmatprep.subr.mxu0 0.0
        %2227 = vmatpush2.msra.mxu0 0.0
        %2228 = vmatprep.subr.mxu0 0.0
        %2229 = vmatpush2.msra.mxu0 0.0
        %2230 = vmatprep.subr.mxu0 0.0
        %2231 = vmatpush2.msra.mxu0 0.0
        %2232 = vmatprep.subr.mxu0 0.0
        %2233 = vmatpush2.msra.mxu0 0.0
        %2234 = vmatprep.subr.mxu0 0.0
        %2235 = vmatpush2.msra.mxu0 0.0
        %2236 = vmatprep.subr.mxu0 0.0
        %2237 = vmatpush2.msra.mxu0 0.0
        %2238 = vmatprep.subr.mxu0 0.0
        %2239 = vmatpush2.msra.mxu0 0.0
        %2240 = vmatprep.subr.mxu0 0.0
        %2241 = vmatpush2.msra.mxu0 0.0
        %2242 = vmatprep.subr.mxu0 0.0
        %2243 = vmatpush2.msra.mxu0 0.0
        %2244 = vmatprep.subr.mxu0 0.0
        %2245 = vmatpush2.msra.mxu0 0.0
        %2246 = vmatprep.subr.mxu0 0.0
        %2247 = vmatpush2.msra.mxu0 0.0
        %2248 = vmatprep.subr.mxu0 0.0
        %2249 = vmatpush2.msra.mxu0 0.0
        %2250 = vmatprep.subr.mxu0 0.0
        %2251 = vmatpush2.msra.mxu0 0.0
        %2252 = vmatprep.mubr.f32.mxu0 0.0
        %2253 = vmatmul.mubr.f32.gmra.mxu0 %v2186
        %v2254 = vpop.f32.mrf.mxu0
        %v2255 = vadd.f32 %v2184, %v2254
        %v2256 = vpop.f32.mrf.mxu0
        %2257 = vdwg.mxu0
        %v2258 = vmul.f32 %v2255, 0.5
        %v2259 = vmul.f32 %v2255, 0.70710677
        %v2260 = vmax.f32 %v2259, -4.0
        %v2261 = vmin.f32 %v2260, 4.0
        %v2262 = vmul.f32 %v2261, %v2261
        %v2263 = vmul.f32 %v2262, -2.7261424e-10
        %v2264 = vadd.f32 %v2263, 2.7706815e-08
        %v2265 = vmul.f32 %v2264, %v2262
        %v2266 = vadd.f32 %v2265, -2.101024e-06
        %v2267 = vmul.f32 %v2266, %v2262
        %v2268 = vadd.f32 %v2267, -5.6925062e-05
        %v2269 = vmul.f32 %v2268, %v2262
        %v2270 = vadd.f32 %v2269, -0.00073499064
        %v2271 = vmul.f32 %v2270, %v2262
        %v2272 = vadd.f32 %v2271, -0.0029546
        %v2273 = vmul.f32 %v2272, %v2262
        %v2274 = vadd.f32 %v2273, -0.016096033
        %v2275 = vmul.f32 %v2261, %v2274
        %v2276 = vmul.f32 %v2262, -1.45660715e-05
        %v2277 = vadd.f32 %v2276, -0.00021337405
        %v2278 = vmul.f32 %v2277, %v2262
        %v2279 = vadd.f32 %v2278, -0.001682827
        %v2280 = vmul.f32 %v2279, %v2262
        %v2281 = vadd.f32 %v2280, -0.0073733293
        %v2282 = vmul.f32 %v2281, %v2262
        %v2283 = vadd.f32 %v2282, -0.014264739
        %v2284 = vrcp.pop %v2283
        %v2285 = vmul.f32 %v2275, %v2284
        %v2286 = vadd.f32 %v2285, 1.0
        %v2287 = vmul.f32 %v2258, %v2286
        %v2288 = vlaneseq
        %v2289 = vshrl.u32 %v2288, 7
        %v2290 = vsub.s32 0, %v2289
        %v2291 = vrot.slane %v332, %v2290
        %2292 = vmatprep.subr.mxu0 0.0
        %2293 = vmatpush1.msra.mxu0 %v325
        %2294 = vmatprep.subr.mxu0 0.0
        %2295 = vmatpush1.msra.mxu0 %v324
        %2296 = vmatprep.subr.mxu0 0.0
        %2297 = vmatpush1.msra.mxu0 %v323
        %2298 = vmatprep.subr.mxu0 0.0
        %2299 = vmatpush1.msra.mxu0 %v322
        %2300 = vmatprep.subr.mxu0 0.0
        %2301 = vmatpush1.msra.mxu0 %v321
        %2302 = vmatprep.subr.mxu0 0.0
        %2303 = vmatpush1.msra.mxu0 %v320
        %2304 = vmatprep.subr.mxu0 0.0
        %2305 = vmatpush1.msra.mxu0 %v319
        %2306 = vmatprep.subr.mxu0 0.0
        %2307 = vmatpush1.msra.mxu0 %v318
        %2308 = vmatprep.subr.mxu0 0.0
        %2309 = vmatpush1.msra.mxu0 %v317
        %2310 = vmatprep.subr.mxu0 0.0
        %2311 = vmatpush1.msra.mxu0 %v316
        %2312 = vmatprep.subr.mxu0 0.0
        %2313 = vmatpush1.msra.mxu0 %v315
        %2314 = vmatprep.subr.mxu0 0.0
        %2315 = vmatpush1.msra.mxu0 %v314
        %2316 = vmatprep.subr.mxu0 0.0
        %2317 = vmatpush1.msra.mxu0 %v313
        %2318 = vmatprep.subr.mxu0 0.0
        %2319 = vmatpush1.msra.mxu0 %v312
        %2320 = vmatprep.subr.mxu0 0.0
        %2321 = vmatpush1.msra.mxu0 %v311
        %2322 = vmatprep.subr.mxu0 0.0
        %2323 = vmatpush1.msra.mxu0 %v310
        %2324 = vmatprep.subr.mxu0 0.0
        %2325 = vmatpush2.msra.mxu0 0.0
        %2326 = vmatprep.subr.mxu0 0.0
        %2327 = vmatpush2.msra.mxu0 0.0
        %2328 = vmatprep.subr.mxu0 0.0
        %2329 = vmatpush2.msra.mxu0 0.0
        %2330 = vmatprep.subr.mxu0 0.0
        %2331 = vmatpush2.msra.mxu0 0.0
        %2332 = vmatprep.subr.mxu0 0.0
        %2333 = vmatpush2.msra.mxu0 0.0
        %2334 = vmatprep.subr.mxu0 0.0
        %2335 = vmatpush2.msra.mxu0 0.0
        %2336 = vmatprep.subr.mxu0 0.0
        %2337 = vmatpush2.msra.mxu0 0.0
        %2338 = vmatprep.subr.mxu0 0.0
        %2339 = vmatpush2.msra.mxu0 0.0
        %2340 = vmatprep.subr.mxu0 0.0
        %2341 = vmatpush2.msra.mxu0 0.0
        %2342 = vmatprep.subr.mxu0 0.0
        %2343 = vmatpush2.msra.mxu0 0.0
        %2344 = vmatprep.subr.mxu0 0.0
        %2345 = vmatpush2.msra.mxu0 0.0
        %2346 = vmatprep.subr.mxu0 0.0
        %2347 = vmatpush2.msra.mxu0 0.0
        %2348 = vmatprep.subr.mxu0 0.0
        %2349 = vmatpush2.msra.mxu0 0.0
        %2350 = vmatprep.subr.mxu0 0.0
        %2351 = vmatpush2.msra.mxu0 0.0
        %2352 = vmatprep.subr.mxu0 0.0
        %2353 = vmatpush2.msra.mxu0 0.0
        %2354 = vmatprep.subr.mxu0 0.0
        %2355 = vmatpush2.msra.mxu0 0.0
        %2356 = vmatprep.mubr.f32.mxu0 0.0
        %2357 = vmatmul.mubr.f32.gmra.mxu0 %v2287
        %v2358 = vpop.f32.mrf.mxu0
        %v2359 = vadd.f32 %v2291, %v2358
        %v2360 = vpop.f32.mrf.mxu0
        %2361 = vdwg.mxu0
        %v2362 = vadd.f32 %v2180, %v2359
        %v2363 = vsel %vm343, %v2362, 0.0
        %2364 = vadd.xlane.f32.xlu0 %v2363
        %v2365 = vpop.xlane.xlu0 %2364
        %v2366 = vmul.f32 %v2365, %v1271
        %v2367 = vsub.f32 %v2362, %v2366
        %v2368 = vmul.f32 %v2367, %v2367
        %v2369 = vsel %vm343, %v2368, 0.0
        %2370 = vadd.xlane.f32.xlu0 %v2369
        %v2371 = vpop.xlane.xlu0 %2370
        %v2372 = vmul.f32 %v2371, %v1271
        %v2373 = vadd.f32 %v2372, 1e-05
        %v2374 = vrsqrt.pop %v2373
        %v2375 = vmul.f32 %v2367, %v2374
        %v2376 = vlaneseq
        %v2377 = vshrl.u32 %v2376, 7
        %v2378 = vsub.s32 0, %v2377
        %v2379 = vrot.slane %v337, %v2378
        %v2380 = vmul.f32 %v2375, %v2379
        %v2381 = vlaneseq
        %v2382 = vshrl.u32 %v2381, 7
        %v2383 = vsub.s32 0, %v2382
        %v2384 = vrot.slane %v338, %v2383
        %v2385 = vadd.f32 %v2380, %v2384
        %2386 = vst.msk [vmem:[%s281] sm:$0xff] %vm343, %v2385
        %s2387 = sand.u32 %s127, 1
        %s2388 = scalar_lea.sflag [#allocation5], %s2387
        %s2389 = sand.u32 %s127, 1
        %s2390 = smul.addr %s2389, 8
        %s2391 = scalar_lea.vmem [#allocation11], %s2390
        // Predicated region
        $region53: #{tpu_custom_call.1} parent=35 // pred_check
          %p2392 = pneg %p137
        $region54: #{tpu_custom_call.1} parent=35 // pred_check_branch
          %2394 = sbr.rel (%p2392) target = $region56
        $region55: #{tpu_custom_call.1} parent=35 // pred_region
          %s2396 = ssub.s32 128, 128
          %2397 = vsyncadd %s2388, %s2396
          %s2398 = smul.addr %s25, 128
          %s2399 = scalar_lea.hbm %s4, %s2398
          %s2401 = sshll.u32 %s2391, 4
          %s2402 = int_to_ptr.vmem [resolvable:$true] %s2401
          %2404 = dma.vmem_to_hbm [thread:$0]  %s2402, 128, %s2399, %s2388
        $region56: #{tpu_custom_call.1} parent=35 // pred_fallthru
          _
      $region36: #{tpu_custom_call.1} parent=5 // pred_fallthru
        _
      %p2405 = scmp.le.s32.totalorder 2, %s20
      // Predicated region
      $region57: #{tpu_custom_call.1} parent=5 // pred_check
        %p2406 = pneg %p2405
      $region58: #{tpu_custom_call.1} parent=5 // pred_check_branch
        %2408 = sbr.rel (%p2406) target = $region60
      $region59: #{tpu_custom_call.1} parent=5 // pred_region
        %s2409 = ssub.s32 %s20, 2
        // Predicated region
        $region61: #{tpu_custom_call.1} parent=59 // pred_check
          %p2410 = pneg %p143
        $region62: #{tpu_custom_call.1} parent=59 // pred_check_branch
          %2412 = sbr.rel (%p2410) target = $region64
        $region63: #{tpu_custom_call.1} parent=59 // pred_region
          %s2413 = sand.u32 %s128, 1
          %s2414 = scalar_lea.sflag [#allocation5], %s2413
          %s2415 = sand.u32 %s128, 1
          %s2416 = smul.addr %s2415, 8
          %s2417 = scalar_lea.vmem [#allocation11], %s2416
          %2418 = dma.done %s2414, 128
        $region64: #{tpu_custom_call.1} parent=59 // pred_fallthru
          _
      $region60: #{tpu_custom_call.1} parent=5 // pred_fallthru
        _
    $region6: #{tpu_custom_call.1} parent=1 // loop_footer
      %s24 = sadd.s32 1, %s20
    $region7: #{tpu_custom_call.1} parent=1 // loop_footer_branch
      %19 = sbr.rel target = $region3
    $region8: #{tpu_custom_call.1} parent=1 // loop_exit
      _
    %2419 = vsyncpa [#allocation4], 1
    %s2420 = scalar_lea.sflag [#allocation4], 1
    %2421 = vsyncpa %s2420, 1
    %2422 = vsyncpa [#allocation7], 1
    %s2423 = scalar_lea.sflag [#allocation7], 1
    %2424 = vsyncpa %s2423, 1
    %2425 = vsyncpa [#allocation10], 1
    %2426 = vsyncpa [#allocation5], 1
    %s2427 = scalar_lea.sflag [#allocation5], 1
    %2428 = vsyncpa %s2427, 1

</llo_original>
